<compile_context>
chip_gen: v5e
topology: v5e:2x2
jax: 0.10.0
libtpu: 0.0.40
codegen_flags: <defaults>
</compile_context>

<pallas_src>
import functools

import jax
import jax.numpy as jnp
import numpy as np
from jax import lax
from jax.experimental import pallas as pl
from jax.experimental.pallas import tpu as pltpu


def _deconv_unit_kernel(w_ref, p_ref, x_ref, o_ref, rs_ref, rp_ref, *,
                        kt, kf, cin, c, f_out, t_tile, eps):
    # w_ref : SMEM (kt*kf*c*cin,) f32  flipped ConvTranspose2d weights
    #         w[((a*kf+b)*c + o)*cin + i] = W[i, o, kt-1-a, kf-1-b]
    # p_ref : SMEM (4*c,) f32          [conv bias | cLN gain | cLN bias | PReLU a]
    # x_ref : VMEM (1, 1, cin, t_tile+kt-1, f_pad) dilated/padded input window
    # o_ref : VMEM (1, c, t_tile, f_out)           one tile of output frames
    # rs/rp : VMEM (1, 1) f32          cLN running sum / sum-of-squares carry
    tile = pl.program_id(1)

    @pl.when(tile == 0)
    def _():
        rs_ref[...] = jnp.zeros_like(rs_ref)
        rp_ref[...] = jnp.zeros_like(rp_ref)

    # ---- transposed conv for the whole tile: VPU broadcast-FMA over taps ----
    # accumulators start from the conv bias; F_out on lanes, T_TILE on sublanes.
    accs = [jnp.full((t_tile, f_out), p_ref[o], jnp.float32) for o in range(c)]
    for a in range(kt):
        for b in range(kf):
            # (cin, t_tile, f_out) window for this (time, freq) tap, loaded once
            xab = x_ref[0, 0, :, a:a + t_tile, b:b + f_out]
            base = (a * kf + b) * c * cin
            for o in range(c):
                acc = accs[o]
                for i in range(cin):
                    acc = acc + w_ref[base + o * cin + i] * xab[i]
                accs[o] = acc

    # ---- cumulative layer norm, vectorized over the tile ----
    s = jnp.zeros((t_tile, 1), jnp.float32)
    q = jnp.zeros((t_tile, 1), jnp.float32)
    for y in accs:
        s = s + jnp.sum(y, axis=1, keepdims=True)
        q = q + jnp.sum(y * y, axis=1, keepdims=True)

    # in-tile cumulative sums via a lower-triangular matmul (MXU), plus the
    # running totals carried from earlier tiles of this batch element.
    row = lax.broadcasted_iota(jnp.int32, (t_tile, t_tile), 0)
    col = lax.broadcasted_iota(jnp.int32, (t_tile, t_tile), 1)
    tri = (col <= row).astype(jnp.float32)
    cs = jnp.dot(tri, s, preferred_element_type=jnp.float32) + rs_ref[...]
    cq = jnp.dot(tri, q, preferred_element_type=jnp.float32) + rp_ref[...]
    rs_ref[...] = cs[t_tile - 1:t_tile, :]
    rp_ref[...] = cq[t_tile - 1:t_tile, :]

    frame = (lax.broadcasted_iota(jnp.int32, (t_tile, 1), 0)
             + tile * t_tile).astype(jnp.float32)
    entry = (frame + 1.0) * float(c * f_out)
    mean = cs / entry
    var = (cq - 2.0 * mean * cs) / entry + mean * mean
    var = jnp.maximum(var, 0.0)                       # guard tiny cancellation
    inv_std = lax.rsqrt(var + eps)                    # EUP slot, (t_tile, 1)

    # ---- affine + PReLU, one dense (t_tile, f_out) store per channel ----
    for o in range(c):
        z = (accs[o] - mean) * inv_std * p_ref[c + o] + p_ref[2 * c + o]
        z = jnp.where(z >= 0.0, z, p_ref[3 * c + o] * z)
        o_ref[0, o] = z.astype(o_ref.dtype)


def _round_up(n, m):
    return ((n + m - 1) // m) * m


def deconv2d_unit_forward(x, params, k, c, t_tile=64):
    """x: (B, Cin, T, F) float32 (NCHW).  Returns (B, C, T, F_out)."""
    W, bconv, gain, beta, alpha = params
    kt, kf = k
    B, Cin, T, F = x.shape
    F_out = (F - 1) * 2 + kf
    F_pad = F_out + kf - 1

    t_tile = min(_round_up(max(8, t_tile), 8), _round_up(T, 8))
    num_tiles = (T + t_tile - 1) // t_tile
    T_grid = num_tiles * t_tile
    T_halo = t_tile + kt - 1

    # glue: frequency dilation (stride 2) + padding.  Chomp_T(kt-1) is handled
    # by left-padding kt-1 time frames; time is right-padded to a multiple of
    # the tile and the extra frames are sliced off after the kernel.
    x = x.astype(jnp.float32)
    x_dil = jnp.zeros((B, Cin, T, (F - 1) * 2 + 1),
                      jnp.float32).at[..., ::2].set(x)
    x_p = jnp.pad(x_dil,
                  ((0, 0), (0, 0), (kt - 1, T_grid - T), (kf - 1, kf - 1)))
    # overlapping time windows (halo = kt-1 frames), one per grid step:
    # (B, num_tiles, Cin, T_halo, F_pad) keeps the per-step VMEM footprint small.
    x_win = jnp.stack(
        [x_p[:, :, w * t_tile: w * t_tile + T_halo, :]
         for w in range(num_tiles)], axis=1)

    # flipped weight flattened for SMEM scalar reads, and packed channel params
    w_flat = jnp.transpose(W[:, :, ::-1, ::-1],
                           (2, 3, 1, 0)).reshape(-1).astype(jnp.float32)
    p_flat = jnp.concatenate([bconv, gain, beta, alpha]).astype(jnp.float32)

    kernel = functools.partial(_deconv_unit_kernel, kt=kt, kf=kf, cin=Cin, c=c,
                               f_out=F_out, t_tile=t_tile, eps=1e-5)
    out = pl.pallas_call(
        kernel,
        out_shape=jax.ShapeDtypeStruct((B, c, T_grid, F_out), jnp.float32),
        grid_spec=pltpu.PrefetchScalarGridSpec(
            num_scalar_prefetch=0,
            grid=(B, num_tiles),
            in_specs=[
                pl.BlockSpec(memory_space=pltpu.MemorySpace.SMEM),
                pl.BlockSpec(memory_space=pltpu.MemorySpace.SMEM),
                pl.BlockSpec((1, 1, Cin, T_halo, F_pad),
                             lambda b, t: (b, t, 0, 0, 0)),
            ],
            out_specs=pl.BlockSpec((1, c, t_tile, F_out),
                                   lambda b, t: (b, 0, t, 0)),
            scratch_shapes=[pltpu.VMEM((1, 1), jnp.float32),
                            pltpu.VMEM((1, 1), jnp.float32)],
        ),
        compiler_params=pltpu.CompilerParams(
            dimension_semantics=("parallel", "arbitrary"),
            vmem_limit_bytes=32 * 1024 * 1024),
    )(w_flat, p_flat, x_win)

    return out[:, :, :T, :]


def _numpy_reference(x, params, k, c):
    """Direct transcription of the PyTorch forward (ConvTranspose2d, stride
    (1,2), padding 0 -> Chomp_T(kt-1) -> CumulativeLayerNorm2d -> PReLU)."""
    W, bconv, gain, beta, alpha = [np.asarray(p, np.float64) for p in params]
    x = np.asarray(x, np.float64)
    kt, kf = k
    B, Cin, T, F = x.shape
    T_full = T + kt - 1
    F_out = (F - 1) * 2 + kf
    y = np.zeros((B, c, T_full, F_out), np.float64)
    for a in range(kt):
        for b in range(kf):
            for ti in range(T):
                for fi in range(F):
                    y[:, :, ti + a, 2 * fi + b] += np.einsum(
                        'bi,io->bo', x[:, :, ti, fi], W[:, :, a, b])
    y += bconv.reshape(1, c, 1, 1)
    if kt > 1:
        y = y[:, :, :-(kt - 1), :]                # Chomp_T
    # CumulativeLayerNorm2d
    step_sum = y.sum(axis=(1, 3), keepdims=True)
    step_pow = (y ** 2).sum(axis=(1, 3), keepdims=True)
    cum_sum = np.cumsum(step_sum, axis=2)
    cum_pow = np.cumsum(step_pow, axis=2)
    entry = (np.arange(1, T + 1) * c * F_out).reshape(1, 1, T, 1)
    cum_mean = cum_sum / entry
    cum_var = (cum_pow - 2 * cum_mean * cum_sum) / entry + cum_mean ** 2
    cum_std = np.sqrt(cum_var + 1e-5)
    out = (y - cum_mean) / cum_std
    out = out * gain.reshape(1, c, 1, 1) + beta.reshape(1, c, 1, 1)
    out = np.where(out >= 0, out, alpha.reshape(1, c, 1, 1) * out)   # PReLU
    return out.astype(np.float32)


if __name__ == "__main__":
    # Deconv2dunit(k=(2,3), c=4, intra_connect='cat') -> in_channels = 2*c = 8
    B, c, T, F = 2, 4, 21, 16
    k = (2, 3)
    cin = 2 * c                                    # 'cat' intra_connect

    key = jax.random.PRNGKey(0)
    kx, kw, kb, kg, kbe, ka = jax.random.split(key, 6)
    x = jax.random.normal(kx, (B, cin, T, F), jnp.float32)
    W = 0.3 * jax.random.normal(kw, (cin, c, k[0], k[1]), jnp.float32)
    bconv = 0.1 * jax.random.normal(kb, (c,), jnp.float32)
    gain = 1.0 + 0.1 * jax.random.normal(kg, (c,), jnp.float32)
    beta = 0.1 * jax.random.normal(kbe, (c,), jnp.float32)
    alpha = 0.25 + 0.05 * jax.random.normal(ka, (c,), jnp.float32)
    params = (W, bconv, gain, beta, alpha)

    # t_tile=8 with T=21 -> 3 time tiles: exercises the cross-tile cLN carry,
    # the overlapping-window halo and the discarded trailing padded frames.
    out = deconv2d_unit_forward(x, params, k, c, t_tile=8)
    out = jax.block_until_ready(out)

    ref = _numpy_reference(x, params, k, c)
    np.testing.assert_allclose(np.asarray(out), ref, rtol=2e-4, atol=2e-4)
    print("KERNEL_OK")
</pallas_src>

<mosaic_0001>
module attributes {stable_mosaic.version = 11 : i64} {
  func.func @_deconv_unit_kernel(%arg0: i32, %arg1: i32, %arg2: memref<192xf32, #tpu.memory_space<smem>>, %arg3: memref<16xf32, #tpu.memory_space<smem>>, %arg4: memref<1x1x8x9x35xf32, #tpu.memory_space<vmem>>, %arg5: memref<1x4x8x33xf32, #tpu.memory_space<vmem>>, %arg6: memref<1x1xf32, #tpu.memory_space<vmem>>, %arg7: memref<1x1xf32, #tpu.memory_space<vmem>>) attributes {dimension_semantics = [#tpu.dimension_semantics<parallel>, #tpu.dimension_semantics<arbitrary>], iteration_bounds = array<i64: 2, 3>, scalar_prefetch = 0 : i64, scratch_operands = 2 : i64, tpu.core_type = #tpu.core_type<tc>, window_params = [{transform_indices = @transform_0, window_bounds = array<i64: 192>}, {transform_indices = @transform_1, window_bounds = array<i64: 16>}, {transform_indices = @transform_2, window_bounds = array<i64: 1, 1, 8, 9, 35>}, {transform_indices = @transform_3, window_bounds = array<i64: 1, 4, 8, 33>}]} {
    %c0_i32 = arith.constant 0 : i32
    %0 = arith.cmpi eq, %arg1, %c0_i32 : i32
    %1 = arith.extui %0 : i1 to i32
    %c0_i32_0 = arith.constant 0 : i32
    %2 = arith.cmpi ne, %1, %c0_i32_0 : i32
    scf.if %2 {
      %cst_91 = arith.constant 0.000000e+00 : f32
      %1320 = vector.broadcast %cst_91 : f32 to vector<1x1xf32>
      %c0_92 = arith.constant 0 : index
      %c0_93 = arith.constant 0 : index
      %1321 = vector.load %arg6[%c0_92, %c0_93] : memref<1x1xf32, #tpu.memory_space<vmem>>, vector<1x1xf32>
      tpu.vector_store %arg6[%c0_92, %c0_93], %1320 {strides = array<i32>} : memref<1x1xf32, #tpu.memory_space<vmem>>, vector<1x1xf32>,
      %cst_94 = arith.constant 0.000000e+00 : f32
      %1322 = vector.broadcast %cst_94 : f32 to vector<1x1xf32>
      %c0_95 = arith.constant 0 : index
      %c0_96 = arith.constant 0 : index
      %1323 = vector.load %arg7[%c0_95, %c0_96] : memref<1x1xf32, #tpu.memory_space<vmem>>, vector<1x1xf32>
      tpu.vector_store %arg7[%c0_95, %c0_96], %1322 {strides = array<i32>} : memref<1x1xf32, #tpu.memory_space<vmem>>, vector<1x1xf32>,
    } else {
    }
    %c0 = arith.constant 0 : index
    %3 = memref.load %arg3[%c0] : memref<16xf32, #tpu.memory_space<smem>>
    %4 = vector.broadcast %3 : f32 to vector<8x33xf32>
    %c1 = arith.constant 1 : index
    %5 = memref.load %arg3[%c1] : memref<16xf32, #tpu.memory_space<smem>>
    %6 = vector.broadcast %5 : f32 to vector<8x33xf32>
    %c2 = arith.constant 2 : index
    %7 = memref.load %arg3[%c2] : memref<16xf32, #tpu.memory_space<smem>>
    %8 = vector.broadcast %7 : f32 to vector<8x33xf32>
    %c3 = arith.constant 3 : index
    %9 = memref.load %arg3[%c3] : memref<16xf32, #tpu.memory_space<smem>>
    %10 = vector.broadcast %9 : f32 to vector<8x33xf32>
    %c0_1 = arith.constant 0 : index
    %c0_2 = arith.constant 0 : index
    %c0_3 = arith.constant 0 : index
    %c0_4 = arith.constant 0 : index
    %c0_5 = arith.constant 0 : index
    %11 = vector.load %arg4[%c0_1, %c0_2, %c0_3, %c0_4, %c0_5] : memref<1x1x8x9x35xf32, #tpu.memory_space<vmem>>, vector<1x1x8x8x33xf32>
    %12 = vector.shape_cast %11 : vector<1x1x8x8x33xf32> to vector<8x8x33xf32>
    %c0_6 = arith.constant 0 : index
    %13 = memref.load %arg2[%c0_6] : memref<192xf32, #tpu.memory_space<smem>>
    %14 = vector.extract_strided_slice %12 {offsets = [0, 0, 0], sizes = [1, 8, 33], strides = [1, 1, 1]} : vector<8x8x33xf32> to vector<1x8x33xf32>
    %15 = vector.shape_cast %14 : vector<1x8x33xf32> to vector<8x33xf32>
    %16 = vector.broadcast %13 : f32 to vector<8x33xf32>
    %17 = arith.mulf %16, %15 : vector<8x33xf32>
    %18 = arith.addf %4, %17 : vector<8x33xf32>
    %c1_7 = arith.constant 1 : index
    %19 = memref.load %arg2[%c1_7] : memref<192xf32, #tpu.memory_space<smem>>
    %20 = vector.extract_strided_slice %12 {offsets = [1, 0, 0], sizes = [1, 8, 33], strides = [1, 1, 1]} : vector<8x8x33xf32> to vector<1x8x33xf32>
    %21 = vector.shape_cast %20 : vector<1x8x33xf32> to vector<8x33xf32>
    %22 = vector.broadcast %19 : f32 to vector<8x33xf32>
    %23 = arith.mulf %22, %21 : vector<8x33xf32>
    %24 = arith.addf %18, %23 : vector<8x33xf32>
    %c2_8 = arith.constant 2 : index
    %25 = memref.load %arg2[%c2_8] : memref<192xf32, #tpu.memory_space<smem>>
    %26 = vector.extract_strided_slice %12 {offsets = [2, 0, 0], sizes = [1, 8, 33], strides = [1, 1, 1]} : vector<8x8x33xf32> to vector<1x8x33xf32>
    %27 = vector.shape_cast %26 : vector<1x8x33xf32> to vector<8x33xf32>
    %28 = vector.broadcast %25 : f32 to vector<8x33xf32>
    %29 = arith.mulf %28, %27 : vector<8x33xf32>
    %30 = arith.addf %24, %29 : vector<8x33xf32>
    %c3_9 = arith.constant 3 : index
    %31 = memref.load %arg2[%c3_9] : memref<192xf32, #tpu.memory_space<smem>>
    %32 = vector.extract_strided_slice %12 {offsets = [3, 0, 0], sizes = [1, 8, 33], strides = [1, 1, 1]} : vector<8x8x33xf32> to vector<1x8x33xf32>
    %33 = vector.shape_cast %32 : vector<1x8x33xf32> to vector<8x33xf32>
    %34 = vector.broadcast %31 : f32 to vector<8x33xf32>
    %35 = arith.mulf %34, %33 : vector<8x33xf32>
    %36 = arith.addf %30, %35 : vector<8x33xf32>
    %c4 = arith.constant 4 : index
    %37 = memref.load %arg2[%c4] : memref<192xf32, #tpu.memory_space<smem>>
    %38 = vector.extract_strided_slice %12 {offsets = [4, 0, 0], sizes = [1, 8, 33], strides = [1, 1, 1]} : vector<8x8x33xf32> to vector<1x8x33xf32>
    %39 = vector.shape_cast %38 : vector<1x8x33xf32> to vector<8x33xf32>
    %40 = vector.broadcast %37 : f32 to vector<8x33xf32>
    %41 = arith.mulf %40, %39 : vector<8x33xf32>
    %42 = arith.addf %36, %41 : vector<8x33xf32>
    %c5 = arith.constant 5 : index
    %43 = memref.load %arg2[%c5] : memref<192xf32, #tpu.memory_space<smem>>
    %44 = vector.extract_strided_slice %12 {offsets = [5, 0, 0], sizes = [1, 8, 33], strides = [1, 1, 1]} : vector<8x8x33xf32> to vector<1x8x33xf32>
    %45 = vector.shape_cast %44 : vector<1x8x33xf32> to vector<8x33xf32>
    %46 = vector.broadcast %43 : f32 to vector<8x33xf32>
    %47 = arith.mulf %46, %45 : vector<8x33xf32>
    %48 = arith.addf %42, %47 : vector<8x33xf32>
    %c6 = arith.constant 6 : index
    %49 = memref.load %arg2[%c6] : memref<192xf32, #tpu.memory_space<smem>>
    %50 = vector.extract_strided_slice %12 {offsets = [6, 0, 0], sizes = [1, 8, 33], strides = [1, 1, 1]} : vector<8x8x33xf32> to vector<1x8x33xf32>
    %51 = vector.shape_cast %50 : vector<1x8x33xf32> to vector<8x33xf32>
    %52 = vector.broadcast %49 : f32 to vector<8x33xf32>
    %53 = arith.mulf %52, %51 : vector<8x33xf32>
    %54 = arith.addf %48, %53 : vector<8x33xf32>
    %c7 = arith.constant 7 : index
    %55 = memref.load %arg2[%c7] : memref<192xf32, #tpu.memory_space<smem>>
    %56 = vector.extract_strided_slice %12 {offsets = [7, 0, 0], sizes = [1, 8, 33], strides = [1, 1, 1]} : vector<8x8x33xf32> to vector<1x8x33xf32>
    %57 = vector.shape_cast %56 : vector<1x8x33xf32> to vector<8x33xf32>
    %58 = vector.broadcast %55 : f32 to vector<8x33xf32>
    %59 = arith.mulf %58, %57 : vector<8x33xf32>
    %60 = arith.addf %54, %59 : vector<8x33xf32>
    %c8 = arith.constant 8 : index
    %61 = memref.load %arg2[%c8] : memref<192xf32, #tpu.memory_space<smem>>
    %62 = vector.extract_strided_slice %12 {offsets = [0, 0, 0], sizes = [1, 8, 33], strides = [1, 1, 1]} : vector<8x8x33xf32> to vector<1x8x33xf32>
    %63 = vector.shape_cast %62 : vector<1x8x33xf32> to vector<8x33xf32>
    %64 = vector.broadcast %61 : f32 to vector<8x33xf32>
    %65 = arith.mulf %64, %63 : vector<8x33xf32>
    %66 = arith.addf %6, %65 : vector<8x33xf32>
    %c9 = arith.constant 9 : index
    %67 = memref.load %arg2[%c9] : memref<192xf32, #tpu.memory_space<smem>>
    %68 = vector.extract_strided_slice %12 {offsets = [1, 0, 0], sizes = [1, 8, 33], strides = [1, 1, 1]} : vector<8x8x33xf32> to vector<1x8x33xf32>
    %69 = vector.shape_cast %68 : vector<1x8x33xf32> to vector<8x33xf32>
    %70 = vector.broadcast %67 : f32 to vector<8x33xf32>
    %71 = arith.mulf %70, %69 : vector<8x33xf32>
    %72 = arith.addf %66, %71 : vector<8x33xf32>
    %c10 = arith.constant 10 : index
    %73 = memref.load %arg2[%c10] : memref<192xf32, #tpu.memory_space<smem>>
    %74 = vector.extract_strided_slice %12 {offsets = [2, 0, 0], sizes = [1, 8, 33], strides = [1, 1, 1]} : vector<8x8x33xf32> to vector<1x8x33xf32>
    %75 = vector.shape_cast %74 : vector<1x8x33xf32> to vector<8x33xf32>
    %76 = vector.broadcast %73 : f32 to vector<8x33xf32>
    %77 = arith.mulf %76, %75 : vector<8x33xf32>
    %78 = arith.addf %72, %77 : vector<8x33xf32>
    %c11 = arith.constant 11 : index
    %79 = memref.load %arg2[%c11] : memref<192xf32, #tpu.memory_space<smem>>
    %80 = vector.extract_strided_slice %12 {offsets = [3, 0, 0], sizes = [1, 8, 33], strides = [1, 1, 1]} : vector<8x8x33xf32> to vector<1x8x33xf32>
    %81 = vector.shape_cast %80 : vector<1x8x33xf32> to vector<8x33xf32>
    %82 = vector.broadcast %79 : f32 to vector<8x33xf32>
    %83 = arith.mulf %82, %81 : vector<8x33xf32>
    %84 = arith.addf %78, %83 : vector<8x33xf32>
    %c12 = arith.constant 12 : index
    %85 = memref.load %arg2[%c12] : memref<192xf32, #tpu.memory_space<smem>>
    %86 = vector.extract_strided_slice %12 {offsets = [4, 0, 0], sizes = [1, 8, 33], strides = [1, 1, 1]} : vector<8x8x33xf32> to vector<1x8x33xf32>
    %87 = vector.shape_cast %86 : vector<1x8x33xf32> to vector<8x33xf32>
    %88 = vector.broadcast %85 : f32 to vector<8x33xf32>
    %89 = arith.mulf %88, %87 : vector<8x33xf32>
    %90 = arith.addf %84, %89 : vector<8x33xf32>
    %c13 = arith.constant 13 : index
    %91 = memref.load %arg2[%c13] : memref<192xf32, #tpu.memory_space<smem>>
    %92 = vector.extract_strided_slice %12 {offsets = [5, 0, 0], sizes = [1, 8, 33], strides = [1, 1, 1]} : vector<8x8x33xf32> to vector<1x8x33xf32>
    %93 = vector.shape_cast %92 : vector<1x8x33xf32> to vector<8x33xf32>
    %94 = vector.broadcast %91 : f32 to vector<8x33xf32>
    %95 = arith.mulf %94, %93 : vector<8x33xf32>
    %96 = arith.addf %90, %95 : vector<8x33xf32>
    %c14 = arith.constant 14 : index
    %97 = memref.load %arg2[%c14] : memref<192xf32, #tpu.memory_space<smem>>
    %98 = vector.extract_strided_slice %12 {offsets = [6, 0, 0], sizes = [1, 8, 33], strides = [1, 1, 1]} : vector<8x8x33xf32> to vector<1x8x33xf32>
    %99 = vector.shape_cast %98 : vector<1x8x33xf32> to vector<8x33xf32>
    %100 = vector.broadcast %97 : f32 to vector<8x33xf32>
    %101 = arith.mulf %100, %99 : vector<8x33xf32>
    %102 = arith.addf %96, %101 : vector<8x33xf32>
    %c15 = arith.constant 15 : index
    %103 = memref.load %arg2[%c15] : memref<192xf32, #tpu.memory_space<smem>>
    %104 = vector.extract_strided_slice %12 {offsets = [7, 0, 0], sizes = [1, 8, 33], strides = [1, 1, 1]} : vector<8x8x33xf32> to vector<1x8x33xf32>
    %105 = vector.shape_cast %104 : vector<1x8x33xf32> to vector<8x33xf32>
    %106 = vector.broadcast %103 : f32 to vector<8x33xf32>
    %107 = arith.mulf %106, %105 : vector<8x33xf32>
    %108 = arith.addf %102, %107 : vector<8x33xf32>
    %c16 = arith.constant 16 : index
    %109 = memref.load %arg2[%c16] : memref<192xf32, #tpu.memory_space<smem>>
    %110 = vector.extract_strided_slice %12 {offsets = [0, 0, 0], sizes = [1, 8, 33], strides = [1, 1, 1]} : vector<8x8x33xf32> to vector<1x8x33xf32>
    %111 = vector.shape_cast %110 : vector<1x8x33xf32> to vector<8x33xf32>
    %112 = vector.broadcast %109 : f32 to vector<8x33xf32>
    %113 = arith.mulf %112, %111 : vector<8x33xf32>
    %114 = arith.addf %8, %113 : vector<8x33xf32>
    %c17 = arith.constant 17 : index
    %115 = memref.load %arg2[%c17] : memref<192xf32, #tpu.memory_space<smem>>
    %116 = vector.extract_strided_slice %12 {offsets = [1, 0, 0], sizes = [1, 8, 33], strides = [1, 1, 1]} : vector<8x8x33xf32> to vector<1x8x33xf32>
    %117 = vector.shape_cast %116 : vector<1x8x33xf32> to vector<8x33xf32>
    %118 = vector.broadcast %115 : f32 to vector<8x33xf32>
    %119 = arith.mulf %118, %117 : vector<8x33xf32>
    %120 = arith.addf %114, %119 : vector<8x33xf32>
    %c18 = arith.constant 18 : index
    %121 = memref.load %arg2[%c18] : memref<192xf32, #tpu.memory_space<smem>>
    %122 = vector.extract_strided_slice %12 {offsets = [2, 0, 0], sizes = [1, 8, 33], strides = [1, 1, 1]} : vector<8x8x33xf32> to vector<1x8x33xf32>
    %123 = vector.shape_cast %122 : vector<1x8x33xf32> to vector<8x33xf32>
    %124 = vector.broadcast %121 : f32 to vector<8x33xf32>
    %125 = arith.mulf %124, %123 : vector<8x33xf32>
    %126 = arith.addf %120, %125 : vector<8x33xf32>
    %c19 = arith.constant 19 : index
    %127 = memref.load %arg2[%c19] : memref<192xf32, #tpu.memory_space<smem>>
    %128 = vector.extract_strided_slice %12 {offsets = [3, 0, 0], sizes = [1, 8, 33], strides = [1, 1, 1]} : vector<8x8x33xf32> to vector<1x8x33xf32>
    %129 = vector.shape_cast %128 : vector<1x8x33xf32> to vector<8x33xf32>
    %130 = vector.broadcast %127 : f32 to vector<8x33xf32>
    %131 = arith.mulf %130, %129 : vector<8x33xf32>
    %132 = arith.addf %126, %131 : vector<8x33xf32>
    %c20 = arith.constant 20 : index
    %133 = memref.load %arg2[%c20] : memref<192xf32, #tpu.memory_space<smem>>
    %134 = vector.extract_strided_slice %12 {offsets = [4, 0, 0], sizes = [1, 8, 33], strides = [1, 1, 1]} : vector<8x8x33xf32> to vector<1x8x33xf32>
    %135 = vector.shape_cast %134 : vector<1x8x33xf32> to vector<8x33xf32>
    %136 = vector.broadcast %133 : f32 to vector<8x33xf32>
    %137 = arith.mulf %136, %135 : vector<8x33xf32>
    %138 = arith.addf %132, %137 : vector<8x33xf32>
    %c21 = arith.constant 21 : index
    %139 = memref.load %arg2[%c21] : memref<192xf32, #tpu.memory_space<smem>>
    %140 = vector.extract_strided_slice %12 {offsets = [5, 0, 0], sizes = [1, 8, 33], strides = [1, 1, 1]} : vector<8x8x33xf32> to vector<1x8x33xf32>
    %141 = vector.shape_cast %140 : vector<1x8x33xf32> to vector<8x33xf32>
    %142 = vector.broadcast %139 : f32 to vector<8x33xf32>
    %143 = arith.mulf %142, %141 : vector<8x33xf32>
    %144 = arith.addf %138, %143 : vector<8x33xf32>
    %c22 = arith.constant 22 : index
    %145 = memref.load %arg2[%c22] : memref<192xf32, #tpu.memory_space<smem>>
    %146 = vector.extract_strided_slice %12 {offsets = [6, 0, 0], sizes = [1, 8, 33], strides = [1, 1, 1]} : vector<8x8x33xf32> to vector<1x8x33xf32>
    %147 = vector.shape_cast %146 : vector<1x8x33xf32> to vector<8x33xf32>
    %148 = vector.broadcast %145 : f32 to vector<8x33xf32>
    %149 = arith.mulf %148, %147 : vector<8x33xf32>
    %150 = arith.addf %144, %149 : vector<8x33xf32>
    %c23 = arith.constant 23 : index
    %151 = memref.load %arg2[%c23] : memref<192xf32, #tpu.memory_space<smem>>
    %152 = vector.extract_strided_slice %12 {offsets = [7, 0, 0], sizes = [1, 8, 33], strides = [1, 1, 1]} : vector<8x8x33xf32> to vector<1x8x33xf32>
    %153 = vector.shape_cast %152 : vector<1x8x33xf32> to vector<8x33xf32>
    %154 = vector.broadcast %151 : f32 to vector<8x33xf32>
    %155 = arith.mulf %154, %153 : vector<8x33xf32>
    %156 = arith.addf %150, %155 : vector<8x33xf32>
    %c24 = arith.constant 24 : index
    %157 = memref.load %arg2[%c24] : memref<192xf32, #tpu.memory_space<smem>>
    %158 = vector.extract_strided_slice %12 {offsets = [0, 0, 0], sizes = [1, 8, 33], strides = [1, 1, 1]} : vector<8x8x33xf32> to vector<1x8x33xf32>
    %159 = vector.shape_cast %158 : vector<1x8x33xf32> to vector<8x33xf32>
    %160 = vector.broadcast %157 : f32 to vector<8x33xf32>
    %161 = arith.mulf %160, %159 : vector<8x33xf32>
    %162 = arith.addf %10, %161 : vector<8x33xf32>
    %c25 = arith.constant 25 : index
    %163 = memref.load %arg2[%c25] : memref<192xf32, #tpu.memory_space<smem>>
    %164 = vector.extract_strided_slice %12 {offsets = [1, 0, 0], sizes = [1, 8, 33], strides = [1, 1, 1]} : vector<8x8x33xf32> to vector<1x8x33xf32>
    %165 = vector.shape_cast %164 : vector<1x8x33xf32> to vector<8x33xf32>
    %166 = vector.broadcast %163 : f32 to vector<8x33xf32>
    %167 = arith.mulf %166, %165 : vector<8x33xf32>
    %168 = arith.addf %162, %167 : vector<8x33xf32>
    %c26 = arith.constant 26 : index
    %169 = memref.load %arg2[%c26] : memref<192xf32, #tpu.memory_space<smem>>
    %170 = vector.extract_strided_slice %12 {offsets = [2, 0, 0], sizes = [1, 8, 33], strides = [1, 1, 1]} : vector<8x8x33xf32> to vector<1x8x33xf32>
    %171 = vector.shape_cast %170 : vector<1x8x33xf32> to vector<8x33xf32>
    %172 = vector.broadcast %169 : f32 to vector<8x33xf32>
    %173 = arith.mulf %172, %171 : vector<8x33xf32>
    %174 = arith.addf %168, %173 : vector<8x33xf32>
    %c27 = arith.constant 27 : index
    %175 = memref.load %arg2[%c27] : memref<192xf32, #tpu.memory_space<smem>>
    %176 = vector.extract_strided_slice %12 {offsets = [3, 0, 0], sizes = [1, 8, 33], strides = [1, 1, 1]} : vector<8x8x33xf32> to vector<1x8x33xf32>
    %177 = vector.shape_cast %176 : vector<1x8x33xf32> to vector<8x33xf32>
    %178 = vector.broadcast %175 : f32 to vector<8x33xf32>
    %179 = arith.mulf %178, %177 : vector<8x33xf32>
    %180 = arith.addf %174, %179 : vector<8x33xf32>
    %c28 = arith.constant 28 : index
    %181 = memref.load %arg2[%c28] : memref<192xf32, #tpu.memory_space<smem>>
    %182 = vector.extract_strided_slice %12 {offsets = [4, 0, 0], sizes = [1, 8, 33], strides = [1, 1, 1]} : vector<8x8x33xf32> to vector<1x8x33xf32>
    %183 = vector.shape_cast %182 : vector<1x8x33xf32> to vector<8x33xf32>
    %184 = vector.broadcast %181 : f32 to vector<8x33xf32>
    %185 = arith.mulf %184, %183 : vector<8x33xf32>
    %186 = arith.addf %180, %185 : vector<8x33xf32>
    %c29 = arith.constant 29 : index
    %187 = memref.load %arg2[%c29] : memref<192xf32, #tpu.memory_space<smem>>
    %188 = vector.extract_strided_slice %12 {offsets = [5, 0, 0], sizes = [1, 8, 33], strides = [1, 1, 1]} : vector<8x8x33xf32> to vector<1x8x33xf32>
    %189 = vector.shape_cast %188 : vector<1x8x33xf32> to vector<8x33xf32>
    %190 = vector.broadcast %187 : f32 to vector<8x33xf32>
    %191 = arith.mulf %190, %189 : vector<8x33xf32>
    %192 = arith.addf %186, %191 : vector<8x33xf32>
    %c30 = arith.constant 30 : index
    %193 = memref.load %arg2[%c30] : memref<192xf32, #tpu.memory_space<smem>>
    %194 = vector.extract_strided_slice %12 {offsets = [6, 0, 0], sizes = [1, 8, 33], strides = [1, 1, 1]} : vector<8x8x33xf32> to vector<1x8x33xf32>
    %195 = vector.shape_cast %194 : vector<1x8x33xf32> to vector<8x33xf32>
    %196 = vector.broadcast %193 : f32 to vector<8x33xf32>
    %197 = arith.mulf %196, %195 : vector<8x33xf32>
    %198 = arith.addf %192, %197 : vector<8x33xf32>
    %c31 = arith.constant 31 : index
    %199 = memref.load %arg2[%c31] : memref<192xf32, #tpu.memory_space<smem>>
    %200 = vector.extract_strided_slice %12 {offsets = [7, 0, 0], sizes = [1, 8, 33], strides = [1, 1, 1]} : vector<8x8x33xf32> to vector<1x8x33xf32>
    %201 = vector.shape_cast %200 : vector<1x8x33xf32> to vector<8x33xf32>
    %202 = vector.broadcast %199 : f32 to vector<8x33xf32>
    %203 = arith.mulf %202, %201 : vector<8x33xf32>
    %204 = arith.addf %198, %203 : vector<8x33xf32>
    %c0_10 = arith.constant 0 : index
    %c0_11 = arith.constant 0 : index
    %c0_12 = arith.constant 0 : index
    %c0_13 = arith.constant 0 : index
    %c1_14 = arith.constant 1 : index
    %205 = vector.load %arg4[%c0_10, %c0_11, %c0_12, %c0_13, %c1_14] : memref<1x1x8x9x35xf32, #tpu.memory_space<vmem>>, vector<1x1x8x8x33xf32>
    %206 = vector.shape_cast %205 : vector<1x1x8x8x33xf32> to vector<8x8x33xf32>
    %c32 = arith.constant 32 : index
    %207 = memref.load %arg2[%c32] : memref<192xf32, #tpu.memory_space<smem>>
    %208 = vector.extract_strided_slice %206 {offsets = [0, 0, 0], sizes = [1, 8, 33], strides = [1, 1, 1]} : vector<8x8x33xf32> to vector<1x8x33xf32>
    %209 = vector.shape_cast %208 : vector<1x8x33xf32> to vector<8x33xf32>
    %210 = vector.broadcast %207 : f32 to vector<8x33xf32>
    %211 = arith.mulf %210, %209 : vector<8x33xf32>
    %212 = arith.addf %60, %211 : vector<8x33xf32>
    %c33 = arith.constant 33 : index
    %213 = memref.load %arg2[%c33] : memref<192xf32, #tpu.memory_space<smem>>
    %214 = vector.extract_strided_slice %206 {offsets = [1, 0, 0], sizes = [1, 8, 33], strides = [1, 1, 1]} : vector<8x8x33xf32> to vector<1x8x33xf32>
    %215 = vector.shape_cast %214 : vector<1x8x33xf32> to vector<8x33xf32>
    %216 = vector.broadcast %213 : f32 to vector<8x33xf32>
    %217 = arith.mulf %216, %215 : vector<8x33xf32>
    %218 = arith.addf %212, %217 : vector<8x33xf32>
    %c34 = arith.constant 34 : index
    %219 = memref.load %arg2[%c34] : memref<192xf32, #tpu.memory_space<smem>>
    %220 = vector.extract_strided_slice %206 {offsets = [2, 0, 0], sizes = [1, 8, 33], strides = [1, 1, 1]} : vector<8x8x33xf32> to vector<1x8x33xf32>
    %221 = vector.shape_cast %220 : vector<1x8x33xf32> to vector<8x33xf32>
    %222 = vector.broadcast %219 : f32 to vector<8x33xf32>
    %223 = arith.mulf %222, %221 : vector<8x33xf32>
    %224 = arith.addf %218, %223 : vector<8x33xf32>
    %c35 = arith.constant 35 : index
    %225 = memref.load %arg2[%c35] : memref<192xf32, #tpu.memory_space<smem>>
    %226 = vector.extract_strided_slice %206 {offsets = [3, 0, 0], sizes = [1, 8, 33], strides = [1, 1, 1]} : vector<8x8x33xf32> to vector<1x8x33xf32>
    %227 = vector.shape_cast %226 : vector<1x8x33xf32> to vector<8x33xf32>
    %228 = vector.broadcast %225 : f32 to vector<8x33xf32>
    %229 = arith.mulf %228, %227 : vector<8x33xf32>
    %230 = arith.addf %224, %229 : vector<8x33xf32>
    %c36 = arith.constant 36 : index
    %231 = memref.load %arg2[%c36] : memref<192xf32, #tpu.memory_space<smem>>
    %232 = vector.extract_strided_slice %206 {offsets = [4, 0, 0], sizes = [1, 8, 33], strides = [1, 1, 1]} : vector<8x8x33xf32> to vector<1x8x33xf32>
    %233 = vector.shape_cast %232 : vector<1x8x33xf32> to vector<8x33xf32>
    %234 = vector.broadcast %231 : f32 to vector<8x33xf32>
    %235 = arith.mulf %234, %233 : vector<8x33xf32>
    %236 = arith.addf %230, %235 : vector<8x33xf32>
    %c37 = arith.constant 37 : index
    %237 = memref.load %arg2[%c37] : memref<192xf32, #tpu.memory_space<smem>>
    %238 = vector.extract_strided_slice %206 {offsets = [5, 0, 0], sizes = [1, 8, 33], strides = [1, 1, 1]} : vector<8x8x33xf32> to vector<1x8x33xf32>
    %239 = vector.shape_cast %238 : vector<1x8x33xf32> to vector<8x33xf32>
    %240 = vector.broadcast %237 : f32 to vector<8x33xf32>
    %241 = arith.mulf %240, %239 : vector<8x33xf32>
    %242 = arith.addf %236, %241 : vector<8x33xf32>
    %c38 = arith.constant 38 : index
    %243 = memref.load %arg2[%c38] : memref<192xf32, #tpu.memory_space<smem>>
    %244 = vector.extract_strided_slice %206 {offsets = [6, 0, 0], sizes = [1, 8, 33], strides = [1, 1, 1]} : vector<8x8x33xf32> to vector<1x8x33xf32>
    %245 = vector.shape_cast %244 : vector<1x8x33xf32> to vector<8x33xf32>
    %246 = vector.broadcast %243 : f32 to vector<8x33xf32>
    %247 = arith.mulf %246, %245 : vector<8x33xf32>
    %248 = arith.addf %242, %247 : vector<8x33xf32>
    %c39 = arith.constant 39 : index
    %249 = memref.load %arg2[%c39] : memref<192xf32, #tpu.memory_space<smem>>
    %250 = vector.extract_strided_slice %206 {offsets = [7, 0, 0], sizes = [1, 8, 33], strides = [1, 1, 1]} : vector<8x8x33xf32> to vector<1x8x33xf32>
    %251 = vector.shape_cast %250 : vector<1x8x33xf32> to vector<8x33xf32>
    %252 = vector.broadcast %249 : f32 to vector<8x33xf32>
    %253 = arith.mulf %252, %251 : vector<8x33xf32>
    %254 = arith.addf %248, %253 : vector<8x33xf32>
    %c40 = arith.constant 40 : index
    %255 = memref.load %arg2[%c40] : memref<192xf32, #tpu.memory_space<smem>>
    %256 = vector.extract_strided_slice %206 {offsets = [0, 0, 0], sizes = [1, 8, 33], strides = [1, 1, 1]} : vector<8x8x33xf32> to vector<1x8x33xf32>
    %257 = vector.shape_cast %256 : vector<1x8x33xf32> to vector<8x33xf32>
    %258 = vector.broadcast %255 : f32 to vector<8x33xf32>
    %259 = arith.mulf %258, %257 : vector<8x33xf32>
    %260 = arith.addf %108, %259 : vector<8x33xf32>
    %c41 = arith.constant 41 : index
    %261 = memref.load %arg2[%c41] : memref<192xf32, #tpu.memory_space<smem>>
    %262 = vector.extract_strided_slice %206 {offsets = [1, 0, 0], sizes = [1, 8, 33], strides = [1, 1, 1]} : vector<8x8x33xf32> to vector<1x8x33xf32>
    %263 = vector.shape_cast %262 : vector<1x8x33xf32> to vector<8x33xf32>
    %264 = vector.broadcast %261 : f32 to vector<8x33xf32>
    %265 = arith.mulf %264, %263 : vector<8x33xf32>
    %266 = arith.addf %260, %265 : vector<8x33xf32>
    %c42 = arith.constant 42 : index
    %267 = memref.load %arg2[%c42] : memref<192xf32, #tpu.memory_space<smem>>
    %268 = vector.extract_strided_slice %206 {offsets = [2, 0, 0], sizes = [1, 8, 33], strides = [1, 1, 1]} : vector<8x8x33xf32> to vector<1x8x33xf32>
    %269 = vector.shape_cast %268 : vector<1x8x33xf32> to vector<8x33xf32>
    %270 = vector.broadcast %267 : f32 to vector<8x33xf32>
    %271 = arith.mulf %270, %269 : vector<8x33xf32>
    %272 = arith.addf %266, %271 : vector<8x33xf32>
    %c43 = arith.constant 43 : index
    %273 = memref.load %arg2[%c43] : memref<192xf32, #tpu.memory_space<smem>>
    %274 = vector.extract_strided_slice %206 {offsets = [3, 0, 0], sizes = [1, 8, 33], strides = [1, 1, 1]} : vector<8x8x33xf32> to vector<1x8x33xf32>
    %275 = vector.shape_cast %274 : vector<1x8x33xf32> to vector<8x33xf32>
    %276 = vector.broadcast %273 : f32 to vector<8x33xf32>
    %277 = arith.mulf %276, %275 : vector<8x33xf32>
    %278 = arith.addf %272, %277 : vector<8x33xf32>
    %c44 = arith.constant 44 : index
    %279 = memref.load %arg2[%c44] : memref<192xf32, #tpu.memory_space<smem>>
    %280 = vector.extract_strided_slice %206 {offsets = [4, 0, 0], sizes = [1, 8, 33], strides = [1, 1, 1]} : vector<8x8x33xf32> to vector<1x8x33xf32>
    %281 = vector.shape_cast %280 : vector<1x8x33xf32> to vector<8x33xf32>
    %282 = vector.broadcast %279 : f32 to vector<8x33xf32>
    %283 = arith.mulf %282, %281 : vector<8x33xf32>
    %284 = arith.addf %278, %283 : vector<8x33xf32>
    %c45 = arith.constant 45 : index
    %285 = memref.load %arg2[%c45] : memref<192xf32, #tpu.memory_space<smem>>
    %286 = vector.extract_strided_slice %206 {offsets = [5, 0, 0], sizes = [1, 8, 33], strides = [1, 1, 1]} : vector<8x8x33xf32> to vector<1x8x33xf32>
    %287 = vector.shape_cast %286 : vector<1x8x33xf32> to vector<8x33xf32>
    %288 = vector.broadcast %285 : f32 to vector<8x33xf32>
    %289 = arith.mulf %288, %287 : vector<8x33xf32>
    %290 = arith.addf %284, %289 : vector<8x33xf32>
    %c46 = arith.constant 46 : index
    %291 = memref.load %arg2[%c46] : memref<192xf32, #tpu.memory_space<smem>>
    %292 = vector.extract_strided_slice %206 {offsets = [6, 0, 0], sizes = [1, 8, 33], strides = [1, 1, 1]} : vector<8x8x33xf32> to vector<1x8x33xf32>
    %293 = vector.shape_cast %292 : vector<1x8x33xf32> to vector<8x33xf32>
    %294 = vector.broadcast %291 : f32 to vector<8x33xf32>
    %295 = arith.mulf %294, %293 : vector<8x33xf32>
    %296 = arith.addf %290, %295 : vector<8x33xf32>
    %c47 = arith.constant 47 : index
    %297 = memref.load %arg2[%c47] : memref<192xf32, #tpu.memory_space<smem>>
    %298 = vector.extract_strided_slice %206 {offsets = [7, 0, 0], sizes = [1, 8, 33], strides = [1, 1, 1]} : vector<8x8x33xf32> to vector<1x8x33xf32>
    %299 = vector.shape_cast %298 : vector<1x8x33xf32> to vector<8x33xf32>
    %300 = vector.broadcast %297 : f32 to vector<8x33xf32>
    %301 = arith.mulf %300, %299 : vector<8x33xf32>
    %302 = arith.addf %296, %301 : vector<8x33xf32>
    %c48 = arith.constant 48 : index
    %303 = memref.load %arg2[%c48] : memref<192xf32, #tpu.memory_space<smem>>
    %304 = vector.extract_strided_slice %206 {offsets = [0, 0, 0], sizes = [1, 8, 33], strides = [1, 1, 1]} : vector<8x8x33xf32> to vector<1x8x33xf32>
    %305 = vector.shape_cast %304 : vector<1x8x33xf32> to vector<8x33xf32>
    %306 = vector.broadcast %303 : f32 to vector<8x33xf32>
    %307 = arith.mulf %306, %305 : vector<8x33xf32>
    %308 = arith.addf %156, %307 : vector<8x33xf32>
    %c49 = arith.constant 49 : index
    %309 = memref.load %arg2[%c49] : memref<192xf32, #tpu.memory_space<smem>>
    %310 = vector.extract_strided_slice %206 {offsets = [1, 0, 0], sizes = [1, 8, 33], strides = [1, 1, 1]} : vector<8x8x33xf32> to vector<1x8x33xf32>
    %311 = vector.shape_cast %310 : vector<1x8x33xf32> to vector<8x33xf32>
    %312 = vector.broadcast %309 : f32 to vector<8x33xf32>
    %313 = arith.mulf %312, %311 : vector<8x33xf32>
    %314 = arith.addf %308, %313 : vector<8x33xf32>
    %c50 = arith.constant 50 : index
    %315 = memref.load %arg2[%c50] : memref<192xf32, #tpu.memory_space<smem>>
    %316 = vector.extract_strided_slice %206 {offsets = [2, 0, 0], sizes = [1, 8, 33], strides = [1, 1, 1]} : vector<8x8x33xf32> to vector<1x8x33xf32>
    %317 = vector.shape_cast %316 : vector<1x8x33xf32> to vector<8x33xf32>
    %318 = vector.broadcast %315 : f32 to vector<8x33xf32>
    %319 = arith.mulf %318, %317 : vector<8x33xf32>
    %320 = arith.addf %314, %319 : vector<8x33xf32>
    %c51 = arith.constant 51 : index
    %321 = memref.load %arg2[%c51] : memref<192xf32, #tpu.memory_space<smem>>
    %322 = vector.extract_strided_slice %206 {offsets = [3, 0, 0], sizes = [1, 8, 33], strides = [1, 1, 1]} : vector<8x8x33xf32> to vector<1x8x33xf32>
    %323 = vector.shape_cast %322 : vector<1x8x33xf32> to vector<8x33xf32>
    %324 = vector.broadcast %321 : f32 to vector<8x33xf32>
    %325 = arith.mulf %324, %323 : vector<8x33xf32>
    %326 = arith.addf %320, %325 : vector<8x33xf32>
    %c52 = arith.constant 52 : index
    %327 = memref.load %arg2[%c52] : memref<192xf32, #tpu.memory_space<smem>>
    %328 = vector.extract_strided_slice %206 {offsets = [4, 0, 0], sizes = [1, 8, 33], strides = [1, 1, 1]} : vector<8x8x33xf32> to vector<1x8x33xf32>
    %329 = vector.shape_cast %328 : vector<1x8x33xf32> to vector<8x33xf32>
    %330 = vector.broadcast %327 : f32 to vector<8x33xf32>
    %331 = arith.mulf %330, %329 : vector<8x33xf32>
    %332 = arith.addf %326, %331 : vector<8x33xf32>
    %c53 = arith.constant 53 : index
    %333 = memref.load %arg2[%c53] : memref<192xf32, #tpu.memory_space<smem>>
    %334 = vector.extract_strided_slice %206 {offsets = [5, 0, 0], sizes = [1, 8, 33], strides = [1, 1, 1]} : vector<8x8x33xf32> to vector<1x8x33xf32>
    %335 = vector.shape_cast %334 : vector<1x8x33xf32> to vector<8x33xf32>
    %336 = vector.broadcast %333 : f32 to vector<8x33xf32>
    %337 = arith.mulf %336, %335 : vector<8x33xf32>
    %338 = arith.addf %332, %337 : vector<8x33xf32>
    %c54 = arith.constant 54 : index
    %339 = memref.load %arg2[%c54] : memref<192xf32, #tpu.memory_space<smem>>
    %340 = vector.extract_strided_slice %206 {offsets = [6, 0, 0], sizes = [1, 8, 33], strides = [1, 1, 1]} : vector<8x8x33xf32> to vector<1x8x33xf32>
    %341 = vector.shape_cast %340 : vector<1x8x33xf32> to vector<8x33xf32>
    %342 = vector.broadcast %339 : f32 to vector<8x33xf32>
    %343 = arith.mulf %342, %341 : vector<8x33xf32>
    %344 = arith.addf %338, %343 : vector<8x33xf32>
    %c55 = arith.constant 55 : index
    %345 = memref.load %arg2[%c55] : memref<192xf32, #tpu.memory_space<smem>>
    %346 = vector.extract_strided_slice %206 {offsets = [7, 0, 0], sizes = [1, 8, 33], strides = [1, 1, 1]} : vector<8x8x33xf32> to vector<1x8x33xf32>
    %347 = vector.shape_cast %346 : vector<1x8x33xf32> to vector<8x33xf32>
    %348 = vector.broadcast %345 : f32 to vector<8x33xf32>
    %349 = arith.mulf %348, %347 : vector<8x33xf32>
    %350 = arith.addf %344, %349 : vector<8x33xf32>
    %c56 = arith.constant 56 : index
    %351 = memref.load %arg2[%c56] : memref<192xf32, #tpu.memory_space<smem>>
    %352 = vector.extract_strided_slice %206 {offsets = [0, 0, 0], sizes = [1, 8, 33], strides = [1, 1, 1]} : vector<8x8x33xf32> to vector<1x8x33xf32>
    %353 = vector.shape_cast %352 : vector<1x8x33xf32> to vector<8x33xf32>
    %354 = vector.broadcast %351 : f32 to vector<8x33xf32>
    %355 = arith.mulf %354, %353 : vector<8x33xf32>
    %356 = arith.addf %204, %355 : vector<8x33xf32>
    %c57 = arith.constant 57 : index
    %357 = memref.load %arg2[%c57] : memref<192xf32, #tpu.memory_space<smem>>
    %358 = vector.extract_strided_slice %206 {offsets = [1, 0, 0], sizes = [1, 8, 33], strides = [1, 1, 1]} : vector<8x8x33xf32> to vector<1x8x33xf32>
    %359 = vector.shape_cast %358 : vector<1x8x33xf32> to vector<8x33xf32>
    %360 = vector.broadcast %357 : f32 to vector<8x33xf32>
    %361 = arith.mulf %360, %359 : vector<8x33xf32>
    %362 = arith.addf %356, %361 : vector<8x33xf32>
    %c58 = arith.constant 58 : index
    %363 = memref.load %arg2[%c58] : memref<192xf32, #tpu.memory_space<smem>>
    %364 = vector.extract_strided_slice %206 {offsets = [2, 0, 0], sizes = [1, 8, 33], strides = [1, 1, 1]} : vector<8x8x33xf32> to vector<1x8x33xf32>
    %365 = vector.shape_cast %364 : vector<1x8x33xf32> to vector<8x33xf32>
    %366 = vector.broadcast %363 : f32 to vector<8x33xf32>
    %367 = arith.mulf %366, %365 : vector<8x33xf32>
    %368 = arith.addf %362, %367 : vector<8x33xf32>
    %c59 = arith.constant 59 : index
    %369 = memref.load %arg2[%c59] : memref<192xf32, #tpu.memory_space<smem>>
    %370 = vector.extract_strided_slice %206 {offsets = [3, 0, 0], sizes = [1, 8, 33], strides = [1, 1, 1]} : vector<8x8x33xf32> to vector<1x8x33xf32>
    %371 = vector.shape_cast %370 : vector<1x8x33xf32> to vector<8x33xf32>
    %372 = vector.broadcast %369 : f32 to vector<8x33xf32>
    %373 = arith.mulf %372, %371 : vector<8x33xf32>
    %374 = arith.addf %368, %373 : vector<8x33xf32>
    %c60 = arith.constant 60 : index
    %375 = memref.load %arg2[%c60] : memref<192xf32, #tpu.memory_space<smem>>
    %376 = vector.extract_strided_slice %206 {offsets = [4, 0, 0], sizes = [1, 8, 33], strides = [1, 1, 1]} : vector<8x8x33xf32> to vector<1x8x33xf32>
    %377 = vector.shape_cast %376 : vector<1x8x33xf32> to vector<8x33xf32>
    %378 = vector.broadcast %375 : f32 to vector<8x33xf32>
    %379 = arith.mulf %378, %377 : vector<8x33xf32>
    %380 = arith.addf %374, %379 : vector<8x33xf32>
    %c61 = arith.constant 61 : index
    %381 = memref.load %arg2[%c61] : memref<192xf32, #tpu.memory_space<smem>>
    %382 = vector.extract_strided_slice %206 {offsets = [5, 0, 0], sizes = [1, 8, 33], strides = [1, 1, 1]} : vector<8x8x33xf32> to vector<1x8x33xf32>
    %383 = vector.shape_cast %382 : vector<1x8x33xf32> to vector<8x33xf32>
    %384 = vector.broadcast %381 : f32 to vector<8x33xf32>
    %385 = arith.mulf %384, %383 : vector<8x33xf32>
    %386 = arith.addf %380, %385 : vector<8x33xf32>
    %c62 = arith.constant 62 : index
    %387 = memref.load %arg2[%c62] : memref<192xf32, #tpu.memory_space<smem>>
    %388 = vector.extract_strided_slice %206 {offsets = [6, 0, 0], sizes = [1, 8, 33], strides = [1, 1, 1]} : vector<8x8x33xf32> to vector<1x8x33xf32>
    %389 = vector.shape_cast %388 : vector<1x8x33xf32> to vector<8x33xf32>
    %390 = vector.broadcast %387 : f32 to vector<8x33xf32>
    %391 = arith.mulf %390, %389 : vector<8x33xf32>
    %392 = arith.addf %386, %391 : vector<8x33xf32>
    %c63 = arith.constant 63 : index
    %393 = memref.load %arg2[%c63] : memref<192xf32, #tpu.memory_space<smem>>
    %394 = vector.extract_strided_slice %206 {offsets = [7, 0, 0], sizes = [1, 8, 33], strides = [1, 1, 1]} : vector<8x8x33xf32> to vector<1x8x33xf32>
    %395 = vector.shape_cast %394 : vector<1x8x33xf32> to vector<8x33xf32>
    %396 = vector.broadcast %393 : f32 to vector<8x33xf32>
    %397 = arith.mulf %396, %395 : vector<8x33xf32>
    %398 = arith.addf %392, %397 : vector<8x33xf32>
    %c0_15 = arith.constant 0 : index
    %c0_16 = arith.constant 0 : index
    %c0_17 = arith.constant 0 : index
    %c0_18 = arith.constant 0 : index
    %c2_19 = arith.constant 2 : index
    %399 = vector.load %arg4[%c0_15, %c0_16, %c0_17, %c0_18, %c2_19] : memref<1x1x8x9x35xf32, #tpu.memory_space<vmem>>, vector<1x1x8x8x33xf32>
    %400 = vector.shape_cast %399 : vector<1x1x8x8x33xf32> to vector<8x8x33xf32>
    %c64 = arith.constant 64 : index
    %401 = memref.load %arg2[%c64] : memref<192xf32, #tpu.memory_space<smem>>
    %402 = vector.extract_strided_slice %400 {offsets = [0, 0, 0], sizes = [1, 8, 33], strides = [1, 1, 1]} : vector<8x8x33xf32> to vector<1x8x33xf32>
    %403 = vector.shape_cast %402 : vector<1x8x33xf32> to vector<8x33xf32>
    %404 = vector.broadcast %401 : f32 to vector<8x33xf32>
    %405 = arith.mulf %404, %403 : vector<8x33xf32>
    %406 = arith.addf %254, %405 : vector<8x33xf32>
    %c65 = arith.constant 65 : index
    %407 = memref.load %arg2[%c65] : memref<192xf32, #tpu.memory_space<smem>>
    %408 = vector.extract_strided_slice %400 {offsets = [1, 0, 0], sizes = [1, 8, 33], strides = [1, 1, 1]} : vector<8x8x33xf32> to vector<1x8x33xf32>
    %409 = vector.shape_cast %408 : vector<1x8x33xf32> to vector<8x33xf32>
    %410 = vector.broadcast %407 : f32 to vector<8x33xf32>
    %411 = arith.mulf %410, %409 : vector<8x33xf32>
    %412 = arith.addf %406, %411 : vector<8x33xf32>
    %c66 = arith.constant 66 : index
    %413 = memref.load %arg2[%c66] : memref<192xf32, #tpu.memory_space<smem>>
    %414 = vector.extract_strided_slice %400 {offsets = [2, 0, 0], sizes = [1, 8, 33], strides = [1, 1, 1]} : vector<8x8x33xf32> to vector<1x8x33xf32>
    %415 = vector.shape_cast %414 : vector<1x8x33xf32> to vector<8x33xf32>
    %416 = vector.broadcast %413 : f32 to vector<8x33xf32>
    %417 = arith.mulf %416, %415 : vector<8x33xf32>
    %418 = arith.addf %412, %417 : vector<8x33xf32>
    %c67 = arith.constant 67 : index
    %419 = memref.load %arg2[%c67] : memref<192xf32, #tpu.memory_space<smem>>
    %420 = vector.extract_strided_slice %400 {offsets = [3, 0, 0], sizes = [1, 8, 33], strides = [1, 1, 1]} : vector<8x8x33xf32> to vector<1x8x33xf32>
    %421 = vector.shape_cast %420 : vector<1x8x33xf32> to vector<8x33xf32>
    %422 = vector.broadcast %419 : f32 to vector<8x33xf32>
    %423 = arith.mulf %422, %421 : vector<8x33xf32>
    %424 = arith.addf %418, %423 : vector<8x33xf32>
    %c68 = arith.constant 68 : index
    %425 = memref.load %arg2[%c68] : memref<192xf32, #tpu.memory_space<smem>>
    %426 = vector.extract_strided_slice %400 {offsets = [4, 0, 0], sizes = [1, 8, 33], strides = [1, 1, 1]} : vector<8x8x33xf32> to vector<1x8x33xf32>
    %427 = vector.shape_cast %426 : vector<1x8x33xf32> to vector<8x33xf32>
    %428 = vector.broadcast %425 : f32 to vector<8x33xf32>
    %429 = arith.mulf %428, %427 : vector<8x33xf32>
    %430 = arith.addf %424, %429 : vector<8x33xf32>
    %c69 = arith.constant 69 : index
    %431 = memref.load %arg2[%c69] : memref<192xf32, #tpu.memory_space<smem>>
    %432 = vector.extract_strided_slice %400 {offsets = [5, 0, 0], sizes = [1, 8, 33], strides = [1, 1, 1]} : vector<8x8x33xf32> to vector<1x8x33xf32>
    %433 = vector.shape_cast %432 : vector<1x8x33xf32> to vector<8x33xf32>
    %434 = vector.broadcast %431 : f32 to vector<8x33xf32>
    %435 = arith.mulf %434, %433 : vector<8x33xf32>
    %436 = arith.addf %430, %435 : vector<8x33xf32>
    %c70 = arith.constant 70 : index
    %437 = memref.load %arg2[%c70] : memref<192xf32, #tpu.memory_space<smem>>
    %438 = vector.extract_strided_slice %400 {offsets = [6, 0, 0], sizes = [1, 8, 33], strides = [1, 1, 1]} : vector<8x8x33xf32> to vector<1x8x33xf32>
    %439 = vector.shape_cast %438 : vector<1x8x33xf32> to vector<8x33xf32>
    %440 = vector.broadcast %437 : f32 to vector<8x33xf32>
    %441 = arith.mulf %440, %439 : vector<8x33xf32>
    %442 = arith.addf %436, %441 : vector<8x33xf32>
    %c71 = arith.constant 71 : index
    %443 = memref.load %arg2[%c71] : memref<192xf32, #tpu.memory_space<smem>>
    %444 = vector.extract_strided_slice %400 {offsets = [7, 0, 0], sizes = [1, 8, 33], strides = [1, 1, 1]} : vector<8x8x33xf32> to vector<1x8x33xf32>
    %445 = vector.shape_cast %444 : vector<1x8x33xf32> to vector<8x33xf32>
    %446 = vector.broadcast %443 : f32 to vector<8x33xf32>
    %447 = arith.mulf %446, %445 : vector<8x33xf32>
    %448 = arith.addf %442, %447 : vector<8x33xf32>
    %c72 = arith.constant 72 : index
    %449 = memref.load %arg2[%c72] : memref<192xf32, #tpu.memory_space<smem>>
    %450 = vector.extract_strided_slice %400 {offsets = [0, 0, 0], sizes = [1, 8, 33], strides = [1, 1, 1]} : vector<8x8x33xf32> to vector<1x8x33xf32>
    %451 = vector.shape_cast %450 : vector<1x8x33xf32> to vector<8x33xf32>
    %452 = vector.broadcast %449 : f32 to vector<8x33xf32>
    %453 = arith.mulf %452, %451 : vector<8x33xf32>
    %454 = arith.addf %302, %453 : vector<8x33xf32>
    %c73 = arith.constant 73 : index
    %455 = memref.load %arg2[%c73] : memref<192xf32, #tpu.memory_space<smem>>
    %456 = vector.extract_strided_slice %400 {offsets = [1, 0, 0], sizes = [1, 8, 33], strides = [1, 1, 1]} : vector<8x8x33xf32> to vector<1x8x33xf32>
    %457 = vector.shape_cast %456 : vector<1x8x33xf32> to vector<8x33xf32>
    %458 = vector.broadcast %455 : f32 to vector<8x33xf32>
    %459 = arith.mulf %458, %457 : vector<8x33xf32>
    %460 = arith.addf %454, %459 : vector<8x33xf32>
    %c74 = arith.constant 74 : index
    %461 = memref.load %arg2[%c74] : memref<192xf32, #tpu.memory_space<smem>>
    %462 = vector.extract_strided_slice %400 {offsets = [2, 0, 0], sizes = [1, 8, 33], strides = [1, 1, 1]} : vector<8x8x33xf32> to vector<1x8x33xf32>
    %463 = vector.shape_cast %462 : vector<1x8x33xf32> to vector<8x33xf32>
    %464 = vector.broadcast %461 : f32 to vector<8x33xf32>
    %465 = arith.mulf %464, %463 : vector<8x33xf32>
    %466 = arith.addf %460, %465 : vector<8x33xf32>
    %c75 = arith.constant 75 : index
    %467 = memref.load %arg2[%c75] : memref<192xf32, #tpu.memory_space<smem>>
    %468 = vector.extract_strided_slice %400 {offsets = [3, 0, 0], sizes = [1, 8, 33], strides = [1, 1, 1]} : vector<8x8x33xf32> to vector<1x8x33xf32>
    %469 = vector.shape_cast %468 : vector<1x8x33xf32> to vector<8x33xf32>
    %470 = vector.broadcast %467 : f32 to vector<8x33xf32>
    %471 = arith.mulf %470, %469 : vector<8x33xf32>
    %472 = arith.addf %466, %471 : vector<8x33xf32>
    %c76 = arith.constant 76 : index
    %473 = memref.load %arg2[%c76] : memref<192xf32, #tpu.memory_space<smem>>
    %474 = vector.extract_strided_slice %400 {offsets = [4, 0, 0], sizes = [1, 8, 33], strides = [1, 1, 1]} : vector<8x8x33xf32> to vector<1x8x33xf32>
    %475 = vector.shape_cast %474 : vector<1x8x33xf32> to vector<8x33xf32>
    %476 = vector.broadcast %473 : f32 to vector<8x33xf32>
    %477 = arith.mulf %476, %475 : vector<8x33xf32>
    %478 = arith.addf %472, %477 : vector<8x33xf32>
    %c77 = arith.constant 77 : index
    %479 = memref.load %arg2[%c77] : memref<192xf32, #tpu.memory_space<smem>>
    %480 = vector.extract_strided_slice %400 {offsets = [5, 0, 0], sizes = [1, 8, 33], strides = [1, 1, 1]} : vector<8x8x33xf32> to vector<1x8x33xf32>
    %481 = vector.shape_cast %480 : vector<1x8x33xf32> to vector<8x33xf32>
    %482 = vector.broadcast %479 : f32 to vector<8x33xf32>
    %483 = arith.mulf %482, %481 : vector<8x33xf32>
    %484 = arith.addf %478, %483 : vector<8x33xf32>
    %c78 = arith.constant 78 : index
    %485 = memref.load %arg2[%c78] : memref<192xf32, #tpu.memory_space<smem>>
    %486 = vector.extract_strided_slice %400 {offsets = [6, 0, 0], sizes = [1, 8, 33], strides = [1, 1, 1]} : vector<8x8x33xf32> to vector<1x8x33xf32>
    %487 = vector.shape_cast %486 : vector<1x8x33xf32> to vector<8x33xf32>
    %488 = vector.broadcast %485 : f32 to vector<8x33xf32>
    %489 = arith.mulf %488, %487 : vector<8x33xf32>
    %490 = arith.addf %484, %489 : vector<8x33xf32>
    %c79 = arith.constant 79 : index
    %491 = memref.load %arg2[%c79] : memref<192xf32, #tpu.memory_space<smem>>
    %492 = vector.extract_strided_slice %400 {offsets = [7, 0, 0], sizes = [1, 8, 33], strides = [1, 1, 1]} : vector<8x8x33xf32> to vector<1x8x33xf32>
    %493 = vector.shape_cast %492 : vector<1x8x33xf32> to vector<8x33xf32>
    %494 = vector.broadcast %491 : f32 to vector<8x33xf32>
    %495 = arith.mulf %494, %493 : vector<8x33xf32>
    %496 = arith.addf %490, %495 : vector<8x33xf32>
    %c80 = arith.constant 80 : index
    %497 = memref.load %arg2[%c80] : memref<192xf32, #tpu.memory_space<smem>>
    %498 = vector.extract_strided_slice %400 {offsets = [0, 0, 0], sizes = [1, 8, 33], strides = [1, 1, 1]} : vector<8x8x33xf32> to vector<1x8x33xf32>
    %499 = vector.shape_cast %498 : vector<1x8x33xf32> to vector<8x33xf32>
    %500 = vector.broadcast %497 : f32 to vector<8x33xf32>
    %501 = arith.mulf %500, %499 : vector<8x33xf32>
    %502 = arith.addf %350, %501 : vector<8x33xf32>
    %c81 = arith.constant 81 : index
    %503 = memref.load %arg2[%c81] : memref<192xf32, #tpu.memory_space<smem>>
    %504 = vector.extract_strided_slice %400 {offsets = [1, 0, 0], sizes = [1, 8, 33], strides = [1, 1, 1]} : vector<8x8x33xf32> to vector<1x8x33xf32>
    %505 = vector.shape_cast %504 : vector<1x8x33xf32> to vector<8x33xf32>
    %506 = vector.broadcast %503 : f32 to vector<8x33xf32>
    %507 = arith.mulf %506, %505 : vector<8x33xf32>
    %508 = arith.addf %502, %507 : vector<8x33xf32>
    %c82 = arith.constant 82 : index
    %509 = memref.load %arg2[%c82] : memref<192xf32, #tpu.memory_space<smem>>
    %510 = vector.extract_strided_slice %400 {offsets = [2, 0, 0], sizes = [1, 8, 33], strides = [1, 1, 1]} : vector<8x8x33xf32> to vector<1x8x33xf32>
    %511 = vector.shape_cast %510 : vector<1x8x33xf32> to vector<8x33xf32>
    %512 = vector.broadcast %509 : f32 to vector<8x33xf32>
    %513 = arith.mulf %512, %511 : vector<8x33xf32>
    %514 = arith.addf %508, %513 : vector<8x33xf32>
    %c83 = arith.constant 83 : index
    %515 = memref.load %arg2[%c83] : memref<192xf32, #tpu.memory_space<smem>>
    %516 = vector.extract_strided_slice %400 {offsets = [3, 0, 0], sizes = [1, 8, 33], strides = [1, 1, 1]} : vector<8x8x33xf32> to vector<1x8x33xf32>
    %517 = vector.shape_cast %516 : vector<1x8x33xf32> to vector<8x33xf32>
    %518 = vector.broadcast %515 : f32 to vector<8x33xf32>
    %519 = arith.mulf %518, %517 : vector<8x33xf32>
    %520 = arith.addf %514, %519 : vector<8x33xf32>
    %c84 = arith.constant 84 : index
    %521 = memref.load %arg2[%c84] : memref<192xf32, #tpu.memory_space<smem>>
    %522 = vector.extract_strided_slice %400 {offsets = [4, 0, 0], sizes = [1, 8, 33], strides = [1, 1, 1]} : vector<8x8x33xf32> to vector<1x8x33xf32>
    %523 = vector.shape_cast %522 : vector<1x8x33xf32> to vector<8x33xf32>
    %524 = vector.broadcast %521 : f32 to vector<8x33xf32>
    %525 = arith.mulf %524, %523 : vector<8x33xf32>
    %526 = arith.addf %520, %525 : vector<8x33xf32>
    %c85 = arith.constant 85 : index
    %527 = memref.load %arg2[%c85] : memref<192xf32, #tpu.memory_space<smem>>
    %528 = vector.extract_strided_slice %400 {offsets = [5, 0, 0], sizes = [1, 8, 33], strides = [1, 1, 1]} : vector<8x8x33xf32> to vector<1x8x33xf32>
    %529 = vector.shape_cast %528 : vector<1x8x33xf32> to vector<8x33xf32>
    %530 = vector.broadcast %527 : f32 to vector<8x33xf32>
    %531 = arith.mulf %530, %529 : vector<8x33xf32>
    %532 = arith.addf %526, %531 : vector<8x33xf32>
    %c86 = arith.constant 86 : index
    %533 = memref.load %arg2[%c86] : memref<192xf32, #tpu.memory_space<smem>>
    %534 = vector.extract_strided_slice %400 {offsets = [6, 0, 0], sizes = [1, 8, 33], strides = [1, 1, 1]} : vector<8x8x33xf32> to vector<1x8x33xf32>
    %535 = vector.shape_cast %534 : vector<1x8x33xf32> to vector<8x33xf32>
    %536 = vector.broadcast %533 : f32 to vector<8x33xf32>
    %537 = arith.mulf %536, %535 : vector<8x33xf32>
    %538 = arith.addf %532, %537 : vector<8x33xf32>
    %c87 = arith.constant 87 : index
    %539 = memref.load %arg2[%c87] : memref<192xf32, #tpu.memory_space<smem>>
    %540 = vector.extract_strided_slice %400 {offsets = [7, 0, 0], sizes = [1, 8, 33], strides = [1, 1, 1]} : vector<8x8x33xf32> to vector<1x8x33xf32>
    %541 = vector.shape_cast %540 : vector<1x8x33xf32> to vector<8x33xf32>
    %542 = vector.broadcast %539 : f32 to vector<8x33xf32>
    %543 = arith.mulf %542, %541 : vector<8x33xf32>
    %544 = arith.addf %538, %543 : vector<8x33xf32>
    %c88 = arith.constant 88 : index
    %545 = memref.load %arg2[%c88] : memref<192xf32, #tpu.memory_space<smem>>
    %546 = vector.extract_strided_slice %400 {offsets = [0, 0, 0], sizes = [1, 8, 33], strides = [1, 1, 1]} : vector<8x8x33xf32> to vector<1x8x33xf32>
    %547 = vector.shape_cast %546 : vector<1x8x33xf32> to vector<8x33xf32>
    %548 = vector.broadcast %545 : f32 to vector<8x33xf32>
    %549 = arith.mulf %548, %547 : vector<8x33xf32>
    %550 = arith.addf %398, %549 : vector<8x33xf32>
    %c89 = arith.constant 89 : index
    %551 = memref.load %arg2[%c89] : memref<192xf32, #tpu.memory_space<smem>>
    %552 = vector.extract_strided_slice %400 {offsets = [1, 0, 0], sizes = [1, 8, 33], strides = [1, 1, 1]} : vector<8x8x33xf32> to vector<1x8x33xf32>
    %553 = vector.shape_cast %552 : vector<1x8x33xf32> to vector<8x33xf32>
    %554 = vector.broadcast %551 : f32 to vector<8x33xf32>
    %555 = arith.mulf %554, %553 : vector<8x33xf32>
    %556 = arith.addf %550, %555 : vector<8x33xf32>
    %c90 = arith.constant 90 : index
    %557 = memref.load %arg2[%c90] : memref<192xf32, #tpu.memory_space<smem>>
    %558 = vector.extract_strided_slice %400 {offsets = [2, 0, 0], sizes = [1, 8, 33], strides = [1, 1, 1]} : vector<8x8x33xf32> to vector<1x8x33xf32>
    %559 = vector.shape_cast %558 : vector<1x8x33xf32> to vector<8x33xf32>
    %560 = vector.broadcast %557 : f32 to vector<8x33xf32>
    %561 = arith.mulf %560, %559 : vector<8x33xf32>
    %562 = arith.addf %556, %561 : vector<8x33xf32>
    %c91 = arith.constant 91 : index
    %563 = memref.load %arg2[%c91] : memref<192xf32, #tpu.memory_space<smem>>
    %564 = vector.extract_strided_slice %400 {offsets = [3, 0, 0], sizes = [1, 8, 33], strides = [1, 1, 1]} : vector<8x8x33xf32> to vector<1x8x33xf32>
    %565 = vector.shape_cast %564 : vector<1x8x33xf32> to vector<8x33xf32>
    %566 = vector.broadcast %563 : f32 to vector<8x33xf32>
    %567 = arith.mulf %566, %565 : vector<8x33xf32>
    %568 = arith.addf %562, %567 : vector<8x33xf32>
    %c92 = arith.constant 92 : index
    %569 = memref.load %arg2[%c92] : memref<192xf32, #tpu.memory_space<smem>>
    %570 = vector.extract_strided_slice %400 {offsets = [4, 0, 0], sizes = [1, 8, 33], strides = [1, 1, 1]} : vector<8x8x33xf32> to vector<1x8x33xf32>
    %571 = vector.shape_cast %570 : vector<1x8x33xf32> to vector<8x33xf32>
    %572 = vector.broadcast %569 : f32 to vector<8x33xf32>
    %573 = arith.mulf %572, %571 : vector<8x33xf32>
    %574 = arith.addf %568, %573 : vector<8x33xf32>
    %c93 = arith.constant 93 : index
    %575 = memref.load %arg2[%c93] : memref<192xf32, #tpu.memory_space<smem>>
    %576 = vector.extract_strided_slice %400 {offsets = [5, 0, 0], sizes = [1, 8, 33], strides = [1, 1, 1]} : vector<8x8x33xf32> to vector<1x8x33xf32>
    %577 = vector.shape_cast %576 : vector<1x8x33xf32> to vector<8x33xf32>
    %578 = vector.broadcast %575 : f32 to vector<8x33xf32>
    %579 = arith.mulf %578, %577 : vector<8x33xf32>
    %580 = arith.addf %574, %579 : vector<8x33xf32>
    %c94 = arith.constant 94 : index
    %581 = memref.load %arg2[%c94] : memref<192xf32, #tpu.memory_space<smem>>
    %582 = vector.extract_strided_slice %400 {offsets = [6, 0, 0], sizes = [1, 8, 33], strides = [1, 1, 1]} : vector<8x8x33xf32> to vector<1x8x33xf32>
    %583 = vector.shape_cast %582 : vector<1x8x33xf32> to vector<8x33xf32>
    %584 = vector.broadcast %581 : f32 to vector<8x33xf32>
    %585 = arith.mulf %584, %583 : vector<8x33xf32>
    %586 = arith.addf %580, %585 : vector<8x33xf32>
    %c95 = arith.constant 95 : index
    %587 = memref.load %arg2[%c95] : memref<192xf32, #tpu.memory_space<smem>>
    %588 = vector.extract_strided_slice %400 {offsets = [7, 0, 0], sizes = [1, 8, 33], strides = [1, 1, 1]} : vector<8x8x33xf32> to vector<1x8x33xf32>
    %589 = vector.shape_cast %588 : vector<1x8x33xf32> to vector<8x33xf32>
    %590 = vector.broadcast %587 : f32 to vector<8x33xf32>
    %591 = arith.mulf %590, %589 : vector<8x33xf32>
    %592 = arith.addf %586, %591 : vector<8x33xf32>
    %c0_20 = arith.constant 0 : index
    %c0_21 = arith.constant 0 : index
    %c0_22 = arith.constant 0 : index
    %c1_23 = arith.constant 1 : index
    %c0_24 = arith.constant 0 : index
    %593 = vector.load %arg4[%c0_20, %c0_21, %c0_22, %c1_23, %c0_24] : memref<1x1x8x9x35xf32, #tpu.memory_space<vmem>>, vector<1x1x8x8x33xf32>
    %594 = vector.shape_cast %593 : vector<1x1x8x8x33xf32> to vector<8x8x33xf32>
    %c96 = arith.constant 96 : index
    %595 = memref.load %arg2[%c96] : memref<192xf32, #tpu.memory_space<smem>>
    %596 = vector.extract_strided_slice %594 {offsets = [0, 0, 0], sizes = [1, 8, 33], strides = [1, 1, 1]} : vector<8x8x33xf32> to vector<1x8x33xf32>
    %597 = vector.shape_cast %596 : vector<1x8x33xf32> to vector<8x33xf32>
    %598 = vector.broadcast %595 : f32 to vector<8x33xf32>
    %599 = arith.mulf %598, %597 : vector<8x33xf32>
    %600 = arith.addf %448, %599 : vector<8x33xf32>
    %c97 = arith.constant 97 : index
    %601 = memref.load %arg2[%c97] : memref<192xf32, #tpu.memory_space<smem>>
    %602 = vector.extract_strided_slice %594 {offsets = [1, 0, 0], sizes = [1, 8, 33], strides = [1, 1, 1]} : vector<8x8x33xf32> to vector<1x8x33xf32>
    %603 = vector.shape_cast %602 : vector<1x8x33xf32> to vector<8x33xf32>
    %604 = vector.broadcast %601 : f32 to vector<8x33xf32>
    %605 = arith.mulf %604, %603 : vector<8x33xf32>
    %606 = arith.addf %600, %605 : vector<8x33xf32>
    %c98 = arith.constant 98 : index
    %607 = memref.load %arg2[%c98] : memref<192xf32, #tpu.memory_space<smem>>
    %608 = vector.extract_strided_slice %594 {offsets = [2, 0, 0], sizes = [1, 8, 33], strides = [1, 1, 1]} : vector<8x8x33xf32> to vector<1x8x33xf32>
    %609 = vector.shape_cast %608 : vector<1x8x33xf32> to vector<8x33xf32>
    %610 = vector.broadcast %607 : f32 to vector<8x33xf32>
    %611 = arith.mulf %610, %609 : vector<8x33xf32>
    %612 = arith.addf %606, %611 : vector<8x33xf32>
    %c99 = arith.constant 99 : index
    %613 = memref.load %arg2[%c99] : memref<192xf32, #tpu.memory_space<smem>>
    %614 = vector.extract_strided_slice %594 {offsets = [3, 0, 0], sizes = [1, 8, 33], strides = [1, 1, 1]} : vector<8x8x33xf32> to vector<1x8x33xf32>
    %615 = vector.shape_cast %614 : vector<1x8x33xf32> to vector<8x33xf32>
    %616 = vector.broadcast %613 : f32 to vector<8x33xf32>
    %617 = arith.mulf %616, %615 : vector<8x33xf32>
    %618 = arith.addf %612, %617 : vector<8x33xf32>
    %c100 = arith.constant 100 : index
    %619 = memref.load %arg2[%c100] : memref<192xf32, #tpu.memory_space<smem>>
    %620 = vector.extract_strided_slice %594 {offsets = [4, 0, 0], sizes = [1, 8, 33], strides = [1, 1, 1]} : vector<8x8x33xf32> to vector<1x8x33xf32>
    %621 = vector.shape_cast %620 : vector<1x8x33xf32> to vector<8x33xf32>
    %622 = vector.broadcast %619 : f32 to vector<8x33xf32>
    %623 = arith.mulf %622, %621 : vector<8x33xf32>
    %624 = arith.addf %618, %623 : vector<8x33xf32>
    %c101 = arith.constant 101 : index
    %625 = memref.load %arg2[%c101] : memref<192xf32, #tpu.memory_space<smem>>
    %626 = vector.extract_strided_slice %594 {offsets = [5, 0, 0], sizes = [1, 8, 33], strides = [1, 1, 1]} : vector<8x8x33xf32> to vector<1x8x33xf32>
    %627 = vector.shape_cast %626 : vector<1x8x33xf32> to vector<8x33xf32>
    %628 = vector.broadcast %625 : f32 to vector<8x33xf32>
    %629 = arith.mulf %628, %627 : vector<8x33xf32>
    %630 = arith.addf %624, %629 : vector<8x33xf32>
    %c102 = arith.constant 102 : index
    %631 = memref.load %arg2[%c102] : memref<192xf32, #tpu.memory_space<smem>>
    %632 = vector.extract_strided_slice %594 {offsets = [6, 0, 0], sizes = [1, 8, 33], strides = [1, 1, 1]} : vector<8x8x33xf32> to vector<1x8x33xf32>
    %633 = vector.shape_cast %632 : vector<1x8x33xf32> to vector<8x33xf32>
    %634 = vector.broadcast %631 : f32 to vector<8x33xf32>
    %635 = arith.mulf %634, %633 : vector<8x33xf32>
    %636 = arith.addf %630, %635 : vector<8x33xf32>
    %c103 = arith.constant 103 : index
    %637 = memref.load %arg2[%c103] : memref<192xf32, #tpu.memory_space<smem>>
    %638 = vector.extract_strided_slice %594 {offsets = [7, 0, 0], sizes = [1, 8, 33], strides = [1, 1, 1]} : vector<8x8x33xf32> to vector<1x8x33xf32>
    %639 = vector.shape_cast %638 : vector<1x8x33xf32> to vector<8x33xf32>
    %640 = vector.broadcast %637 : f32 to vector<8x33xf32>
    %641 = arith.mulf %640, %639 : vector<8x33xf32>
    %642 = arith.addf %636, %641 : vector<8x33xf32>
    %c104 = arith.constant 104 : index
    %643 = memref.load %arg2[%c104] : memref<192xf32, #tpu.memory_space<smem>>
    %644 = vector.extract_strided_slice %594 {offsets = [0, 0, 0], sizes = [1, 8, 33], strides = [1, 1, 1]} : vector<8x8x33xf32> to vector<1x8x33xf32>
    %645 = vector.shape_cast %644 : vector<1x8x33xf32> to vector<8x33xf32>
    %646 = vector.broadcast %643 : f32 to vector<8x33xf32>
    %647 = arith.mulf %646, %645 : vector<8x33xf32>
    %648 = arith.addf %496, %647 : vector<8x33xf32>
    %c105 = arith.constant 105 : index
    %649 = memref.load %arg2[%c105] : memref<192xf32, #tpu.memory_space<smem>>
    %650 = vector.extract_strided_slice %594 {offsets = [1, 0, 0], sizes = [1, 8, 33], strides = [1, 1, 1]} : vector<8x8x33xf32> to vector<1x8x33xf32>
    %651 = vector.shape_cast %650 : vector<1x8x33xf32> to vector<8x33xf32>
    %652 = vector.broadcast %649 : f32 to vector<8x33xf32>
    %653 = arith.mulf %652, %651 : vector<8x33xf32>
    %654 = arith.addf %648, %653 : vector<8x33xf32>
    %c106 = arith.constant 106 : index
    %655 = memref.load %arg2[%c106] : memref<192xf32, #tpu.memory_space<smem>>
    %656 = vector.extract_strided_slice %594 {offsets = [2, 0, 0], sizes = [1, 8, 33], strides = [1, 1, 1]} : vector<8x8x33xf32> to vector<1x8x33xf32>
    %657 = vector.shape_cast %656 : vector<1x8x33xf32> to vector<8x33xf32>
    %658 = vector.broadcast %655 : f32 to vector<8x33xf32>
    %659 = arith.mulf %658, %657 : vector<8x33xf32>
    %660 = arith.addf %654, %659 : vector<8x33xf32>
    %c107 = arith.constant 107 : index
    %661 = memref.load %arg2[%c107] : memref<192xf32, #tpu.memory_space<smem>>
    %662 = vector.extract_strided_slice %594 {offsets = [3, 0, 0], sizes = [1, 8, 33], strides = [1, 1, 1]} : vector<8x8x33xf32> to vector<1x8x33xf32>
    %663 = vector.shape_cast %662 : vector<1x8x33xf32> to vector<8x33xf32>
    %664 = vector.broadcast %661 : f32 to vector<8x33xf32>
    %665 = arith.mulf %664, %663 : vector<8x33xf32>
    %666 = arith.addf %660, %665 : vector<8x33xf32>
    %c108 = arith.constant 108 : index
    %667 = memref.load %arg2[%c108] : memref<192xf32, #tpu.memory_space<smem>>
    %668 = vector.extract_strided_slice %594 {offsets = [4, 0, 0], sizes = [1, 8, 33], strides = [1, 1, 1]} : vector<8x8x33xf32> to vector<1x8x33xf32>
    %669 = vector.shape_cast %668 : vector<1x8x33xf32> to vector<8x33xf32>
    %670 = vector.broadcast %667 : f32 to vector<8x33xf32>
    %671 = arith.mulf %670, %669 : vector<8x33xf32>
    %672 = arith.addf %666, %671 : vector<8x33xf32>
    %c109 = arith.constant 109 : index
    %673 = memref.load %arg2[%c109] : memref<192xf32, #tpu.memory_space<smem>>
    %674 = vector.extract_strided_slice %594 {offsets = [5, 0, 0], sizes = [1, 8, 33], strides = [1, 1, 1]} : vector<8x8x33xf32> to vector<1x8x33xf32>
    %675 = vector.shape_cast %674 : vector<1x8x33xf32> to vector<8x33xf32>
    %676 = vector.broadcast %673 : f32 to vector<8x33xf32>
    %677 = arith.mulf %676, %675 : vector<8x33xf32>
    %678 = arith.addf %672, %677 : vector<8x33xf32>
    %c110 = arith.constant 110 : index
    %679 = memref.load %arg2[%c110] : memref<192xf32, #tpu.memory_space<smem>>
    %680 = vector.extract_strided_slice %594 {offsets = [6, 0, 0], sizes = [1, 8, 33], strides = [1, 1, 1]} : vector<8x8x33xf32> to vector<1x8x33xf32>
    %681 = vector.shape_cast %680 : vector<1x8x33xf32> to vector<8x33xf32>
    %682 = vector.broadcast %679 : f32 to vector<8x33xf32>
    %683 = arith.mulf %682, %681 : vector<8x33xf32>
    %684 = arith.addf %678, %683 : vector<8x33xf32>
    %c111 = arith.constant 111 : index
    %685 = memref.load %arg2[%c111] : memref<192xf32, #tpu.memory_space<smem>>
    %686 = vector.extract_strided_slice %594 {offsets = [7, 0, 0], sizes = [1, 8, 33], strides = [1, 1, 1]} : vector<8x8x33xf32> to vector<1x8x33xf32>
    %687 = vector.shape_cast %686 : vector<1x8x33xf32> to vector<8x33xf32>
    %688 = vector.broadcast %685 : f32 to vector<8x33xf32>
    %689 = arith.mulf %688, %687 : vector<8x33xf32>
    %690 = arith.addf %684, %689 : vector<8x33xf32>
    %c112 = arith.constant 112 : index
    %691 = memref.load %arg2[%c112] : memref<192xf32, #tpu.memory_space<smem>>
    %692 = vector.extract_strided_slice %594 {offsets = [0, 0, 0], sizes = [1, 8, 33], strides = [1, 1, 1]} : vector<8x8x33xf32> to vector<1x8x33xf32>
    %693 = vector.shape_cast %692 : vector<1x8x33xf32> to vector<8x33xf32>
    %694 = vector.broadcast %691 : f32 to vector<8x33xf32>
    %695 = arith.mulf %694, %693 : vector<8x33xf32>
    %696 = arith.addf %544, %695 : vector<8x33xf32>
    %c113 = arith.constant 113 : index
    %697 = memref.load %arg2[%c113] : memref<192xf32, #tpu.memory_space<smem>>
    %698 = vector.extract_strided_slice %594 {offsets = [1, 0, 0], sizes = [1, 8, 33], strides = [1, 1, 1]} : vector<8x8x33xf32> to vector<1x8x33xf32>
    %699 = vector.shape_cast %698 : vector<1x8x33xf32> to vector<8x33xf32>
    %700 = vector.broadcast %697 : f32 to vector<8x33xf32>
    %701 = arith.mulf %700, %699 : vector<8x33xf32>
    %702 = arith.addf %696, %701 : vector<8x33xf32>
    %c114 = arith.constant 114 : index
    %703 = memref.load %arg2[%c114] : memref<192xf32, #tpu.memory_space<smem>>
    %704 = vector.extract_strided_slice %594 {offsets = [2, 0, 0], sizes = [1, 8, 33], strides = [1, 1, 1]} : vector<8x8x33xf32> to vector<1x8x33xf32>
    %705 = vector.shape_cast %704 : vector<1x8x33xf32> to vector<8x33xf32>
    %706 = vector.broadcast %703 : f32 to vector<8x33xf32>
    %707 = arith.mulf %706, %705 : vector<8x33xf32>
    %708 = arith.addf %702, %707 : vector<8x33xf32>
    %c115 = arith.constant 115 : index
    %709 = memref.load %arg2[%c115] : memref<192xf32, #tpu.memory_space<smem>>
    %710 = vector.extract_strided_slice %594 {offsets = [3, 0, 0], sizes = [1, 8, 33], strides = [1, 1, 1]} : vector<8x8x33xf32> to vector<1x8x33xf32>
    %711 = vector.shape_cast %710 : vector<1x8x33xf32> to vector<8x33xf32>
    %712 = vector.broadcast %709 : f32 to vector<8x33xf32>
    %713 = arith.mulf %712, %711 : vector<8x33xf32>
    %714 = arith.addf %708, %713 : vector<8x33xf32>
    %c116 = arith.constant 116 : index
    %715 = memref.load %arg2[%c116] : memref<192xf32, #tpu.memory_space<smem>>
    %716 = vector.extract_strided_slice %594 {offsets = [4, 0, 0], sizes = [1, 8, 33], strides = [1, 1, 1]} : vector<8x8x33xf32> to vector<1x8x33xf32>
    %717 = vector.shape_cast %716 : vector<1x8x33xf32> to vector<8x33xf32>
    %718 = vector.broadcast %715 : f32 to vector<8x33xf32>
    %719 = arith.mulf %718, %717 : vector<8x33xf32>
    %720 = arith.addf %714, %719 : vector<8x33xf32>
    %c117 = arith.constant 117 : index
    %721 = memref.load %arg2[%c117] : memref<192xf32, #tpu.memory_space<smem>>
    %722 = vector.extract_strided_slice %594 {offsets = [5, 0, 0], sizes = [1, 8, 33], strides = [1, 1, 1]} : vector<8x8x33xf32> to vector<1x8x33xf32>
    %723 = vector.shape_cast %722 : vector<1x8x33xf32> to vector<8x33xf32>
    %724 = vector.broadcast %721 : f32 to vector<8x33xf32>
    %725 = arith.mulf %724, %723 : vector<8x33xf32>
    %726 = arith.addf %720, %725 : vector<8x33xf32>
    %c118 = arith.constant 118 : index
    %727 = memref.load %arg2[%c118] : memref<192xf32, #tpu.memory_space<smem>>
    %728 = vector.extract_strided_slice %594 {offsets = [6, 0, 0], sizes = [1, 8, 33], strides = [1, 1, 1]} : vector<8x8x33xf32> to vector<1x8x33xf32>
    %729 = vector.shape_cast %728 : vector<1x8x33xf32> to vector<8x33xf32>
    %730 = vector.broadcast %727 : f32 to vector<8x33xf32>
    %731 = arith.mulf %730, %729 : vector<8x33xf32>
    %732 = arith.addf %726, %731 : vector<8x33xf32>
    %c119 = arith.constant 119 : index
    %733 = memref.load %arg2[%c119] : memref<192xf32, #tpu.memory_space<smem>>
    %734 = vector.extract_strided_slice %594 {offsets = [7, 0, 0], sizes = [1, 8, 33], strides = [1, 1, 1]} : vector<8x8x33xf32> to vector<1x8x33xf32>
    %735 = vector.shape_cast %734 : vector<1x8x33xf32> to vector<8x33xf32>
    %736 = vector.broadcast %733 : f32 to vector<8x33xf32>
    %737 = arith.mulf %736, %735 : vector<8x33xf32>
    %738 = arith.addf %732, %737 : vector<8x33xf32>
    %c120 = arith.constant 120 : index
    %739 = memref.load %arg2[%c120] : memref<192xf32, #tpu.memory_space<smem>>
    %740 = vector.extract_strided_slice %594 {offsets = [0, 0, 0], sizes = [1, 8, 33], strides = [1, 1, 1]} : vector<8x8x33xf32> to vector<1x8x33xf32>
    %741 = vector.shape_cast %740 : vector<1x8x33xf32> to vector<8x33xf32>
    %742 = vector.broadcast %739 : f32 to vector<8x33xf32>
    %743 = arith.mulf %742, %741 : vector<8x33xf32>
    %744 = arith.addf %592, %743 : vector<8x33xf32>
    %c121 = arith.constant 121 : index
    %745 = memref.load %arg2[%c121] : memref<192xf32, #tpu.memory_space<smem>>
    %746 = vector.extract_strided_slice %594 {offsets = [1, 0, 0], sizes = [1, 8, 33], strides = [1, 1, 1]} : vector<8x8x33xf32> to vector<1x8x33xf32>
    %747 = vector.shape_cast %746 : vector<1x8x33xf32> to vector<8x33xf32>
    %748 = vector.broadcast %745 : f32 to vector<8x33xf32>
    %749 = arith.mulf %748, %747 : vector<8x33xf32>
    %750 = arith.addf %744, %749 : vector<8x33xf32>
    %c122 = arith.constant 122 : index
    %751 = memref.load %arg2[%c122] : memref<192xf32, #tpu.memory_space<smem>>
    %752 = vector.extract_strided_slice %594 {offsets = [2, 0, 0], sizes = [1, 8, 33], strides = [1, 1, 1]} : vector<8x8x33xf32> to vector<1x8x33xf32>
    %753 = vector.shape_cast %752 : vector<1x8x33xf32> to vector<8x33xf32>
    %754 = vector.broadcast %751 : f32 to vector<8x33xf32>
    %755 = arith.mulf %754, %753 : vector<8x33xf32>
    %756 = arith.addf %750, %755 : vector<8x33xf32>
    %c123 = arith.constant 123 : index
    %757 = memref.load %arg2[%c123] : memref<192xf32, #tpu.memory_space<smem>>
    %758 = vector.extract_strided_slice %594 {offsets = [3, 0, 0], sizes = [1, 8, 33], strides = [1, 1, 1]} : vector<8x8x33xf32> to vector<1x8x33xf32>
    %759 = vector.shape_cast %758 : vector<1x8x33xf32> to vector<8x33xf32>
    %760 = vector.broadcast %757 : f32 to vector<8x33xf32>
    %761 = arith.mulf %760, %759 : vector<8x33xf32>
    %762 = arith.addf %756, %761 : vector<8x33xf32>
    %c124 = arith.constant 124 : index
    %763 = memref.load %arg2[%c124] : memref<192xf32, #tpu.memory_space<smem>>
    %764 = vector.extract_strided_slice %594 {offsets = [4, 0, 0], sizes = [1, 8, 33], strides = [1, 1, 1]} : vector<8x8x33xf32> to vector<1x8x33xf32>
    %765 = vector.shape_cast %764 : vector<1x8x33xf32> to vector<8x33xf32>
    %766 = vector.broadcast %763 : f32 to vector<8x33xf32>
    %767 = arith.mulf %766, %765 : vector<8x33xf32>
    %768 = arith.addf %762, %767 : vector<8x33xf32>
    %c125 = arith.constant 125 : index
    %769 = memref.load %arg2[%c125] : memref<192xf32, #tpu.memory_space<smem>>
    %770 = vector.extract_strided_slice %594 {offsets = [5, 0, 0], sizes = [1, 8, 33], strides = [1, 1, 1]} : vector<8x8x33xf32> to vector<1x8x33xf32>
    %771 = vector.shape_cast %770 : vector<1x8x33xf32> to vector<8x33xf32>
    %772 = vector.broadcast %769 : f32 to vector<8x33xf32>
    %773 = arith.mulf %772, %771 : vector<8x33xf32>
    %774 = arith.addf %768, %773 : vector<8x33xf32>
    %c126 = arith.constant 126 : index
    %775 = memref.load %arg2[%c126] : memref<192xf32, #tpu.memory_space<smem>>
    %776 = vector.extract_strided_slice %594 {offsets = [6, 0, 0], sizes = [1, 8, 33], strides = [1, 1, 1]} : vector<8x8x33xf32> to vector<1x8x33xf32>
    %777 = vector.shape_cast %776 : vector<1x8x33xf32> to vector<8x33xf32>
    %778 = vector.broadcast %775 : f32 to vector<8x33xf32>
    %779 = arith.mulf %778, %777 : vector<8x33xf32>
    %780 = arith.addf %774, %779 : vector<8x33xf32>
    %c127 = arith.constant 127 : index
    %781 = memref.load %arg2[%c127] : memref<192xf32, #tpu.memory_space<smem>>
    %782 = vector.extract_strided_slice %594 {offsets = [7, 0, 0], sizes = [1, 8, 33], strides = [1, 1, 1]} : vector<8x8x33xf32> to vector<1x8x33xf32>
    %783 = vector.shape_cast %782 : vector<1x8x33xf32> to vector<8x33xf32>
    %784 = vector.broadcast %781 : f32 to vector<8x33xf32>
    %785 = arith.mulf %784, %783 : vector<8x33xf32>
    %786 = arith.addf %780, %785 : vector<8x33xf32>
    %c0_25 = arith.constant 0 : index
    %c0_26 = arith.constant 0 : index
    %c0_27 = arith.constant 0 : index
    %c1_28 = arith.constant 1 : index
    %c1_29 = arith.constant 1 : index
    %787 = vector.load %arg4[%c0_25, %c0_26, %c0_27, %c1_28, %c1_29] : memref<1x1x8x9x35xf32, #tpu.memory_space<vmem>>, vector<1x1x8x8x33xf32>
    %788 = vector.shape_cast %787 : vector<1x1x8x8x33xf32> to vector<8x8x33xf32>
    %c128 = arith.constant 128 : index
    %789 = memref.load %arg2[%c128] : memref<192xf32, #tpu.memory_space<smem>>
    %790 = vector.extract_strided_slice %788 {offsets = [0, 0, 0], sizes = [1, 8, 33], strides = [1, 1, 1]} : vector<8x8x33xf32> to vector<1x8x33xf32>
    %791 = vector.shape_cast %790 : vector<1x8x33xf32> to vector<8x33xf32>
    %792 = vector.broadcast %789 : f32 to vector<8x33xf32>
    %793 = arith.mulf %792, %791 : vector<8x33xf32>
    %794 = arith.addf %642, %793 : vector<8x33xf32>
    %c129 = arith.constant 129 : index
    %795 = memref.load %arg2[%c129] : memref<192xf32, #tpu.memory_space<smem>>
    %796 = vector.extract_strided_slice %788 {offsets = [1, 0, 0], sizes = [1, 8, 33], strides = [1, 1, 1]} : vector<8x8x33xf32> to vector<1x8x33xf32>
    %797 = vector.shape_cast %796 : vector<1x8x33xf32> to vector<8x33xf32>
    %798 = vector.broadcast %795 : f32 to vector<8x33xf32>
    %799 = arith.mulf %798, %797 : vector<8x33xf32>
    %800 = arith.addf %794, %799 : vector<8x33xf32>
    %c130 = arith.constant 130 : index
    %801 = memref.load %arg2[%c130] : memref<192xf32, #tpu.memory_space<smem>>
    %802 = vector.extract_strided_slice %788 {offsets = [2, 0, 0], sizes = [1, 8, 33], strides = [1, 1, 1]} : vector<8x8x33xf32> to vector<1x8x33xf32>
    %803 = vector.shape_cast %802 : vector<1x8x33xf32> to vector<8x33xf32>
    %804 = vector.broadcast %801 : f32 to vector<8x33xf32>
    %805 = arith.mulf %804, %803 : vector<8x33xf32>
    %806 = arith.addf %800, %805 : vector<8x33xf32>
    %c131 = arith.constant 131 : index
    %807 = memref.load %arg2[%c131] : memref<192xf32, #tpu.memory_space<smem>>
    %808 = vector.extract_strided_slice %788 {offsets = [3, 0, 0], sizes = [1, 8, 33], strides = [1, 1, 1]} : vector<8x8x33xf32> to vector<1x8x33xf32>
    %809 = vector.shape_cast %808 : vector<1x8x33xf32> to vector<8x33xf32>
    %810 = vector.broadcast %807 : f32 to vector<8x33xf32>
    %811 = arith.mulf %810, %809 : vector<8x33xf32>
    %812 = arith.addf %806, %811 : vector<8x33xf32>
    %c132 = arith.constant 132 : index
    %813 = memref.load %arg2[%c132] : memref<192xf32, #tpu.memory_space<smem>>
    %814 = vector.extract_strided_slice %788 {offsets = [4, 0, 0], sizes = [1, 8, 33], strides = [1, 1, 1]} : vector<8x8x33xf32> to vector<1x8x33xf32>
    %815 = vector.shape_cast %814 : vector<1x8x33xf32> to vector<8x33xf32>
    %816 = vector.broadcast %813 : f32 to vector<8x33xf32>
    %817 = arith.mulf %816, %815 : vector<8x33xf32>
    %818 = arith.addf %812, %817 : vector<8x33xf32>
    %c133 = arith.constant 133 : index
    %819 = memref.load %arg2[%c133] : memref<192xf32, #tpu.memory_space<smem>>
    %820 = vector.extract_strided_slice %788 {offsets = [5, 0, 0], sizes = [1, 8, 33], strides = [1, 1, 1]} : vector<8x8x33xf32> to vector<1x8x33xf32>
    %821 = vector.shape_cast %820 : vector<1x8x33xf32> to vector<8x33xf32>
    %822 = vector.broadcast %819 : f32 to vector<8x33xf32>
    %823 = arith.mulf %822, %821 : vector<8x33xf32>
    %824 = arith.addf %818, %823 : vector<8x33xf32>
    %c134 = arith.constant 134 : index
    %825 = memref.load %arg2[%c134] : memref<192xf32, #tpu.memory_space<smem>>
    %826 = vector.extract_strided_slice %788 {offsets = [6, 0, 0], sizes = [1, 8, 33], strides = [1, 1, 1]} : vector<8x8x33xf32> to vector<1x8x33xf32>
    %827 = vector.shape_cast %826 : vector<1x8x33xf32> to vector<8x33xf32>
    %828 = vector.broadcast %825 : f32 to vector<8x33xf32>
    %829 = arith.mulf %828, %827 : vector<8x33xf32>
    %830 = arith.addf %824, %829 : vector<8x33xf32>
    %c135 = arith.constant 135 : index
    %831 = memref.load %arg2[%c135] : memref<192xf32, #tpu.memory_space<smem>>
    %832 = vector.extract_strided_slice %788 {offsets = [7, 0, 0], sizes = [1, 8, 33], strides = [1, 1, 1]} : vector<8x8x33xf32> to vector<1x8x33xf32>
    %833 = vector.shape_cast %832 : vector<1x8x33xf32> to vector<8x33xf32>
    %834 = vector.broadcast %831 : f32 to vector<8x33xf32>
    %835 = arith.mulf %834, %833 : vector<8x33xf32>
    %836 = arith.addf %830, %835 : vector<8x33xf32>
    %c136 = arith.constant 136 : index
    %837 = memref.load %arg2[%c136] : memref<192xf32, #tpu.memory_space<smem>>
    %838 = vector.extract_strided_slice %788 {offsets = [0, 0, 0], sizes = [1, 8, 33], strides = [1, 1, 1]} : vector<8x8x33xf32> to vector<1x8x33xf32>
    %839 = vector.shape_cast %838 : vector<1x8x33xf32> to vector<8x33xf32>
    %840 = vector.broadcast %837 : f32 to vector<8x33xf32>
    %841 = arith.mulf %840, %839 : vector<8x33xf32>
    %842 = arith.addf %690, %841 : vector<8x33xf32>
    %c137 = arith.constant 137 : index
    %843 = memref.load %arg2[%c137] : memref<192xf32, #tpu.memory_space<smem>>
    %844 = vector.extract_strided_slice %788 {offsets = [1, 0, 0], sizes = [1, 8, 33], strides = [1, 1, 1]} : vector<8x8x33xf32> to vector<1x8x33xf32>
    %845 = vector.shape_cast %844 : vector<1x8x33xf32> to vector<8x33xf32>
    %846 = vector.broadcast %843 : f32 to vector<8x33xf32>
    %847 = arith.mulf %846, %845 : vector<8x33xf32>
    %848 = arith.addf %842, %847 : vector<8x33xf32>
    %c138 = arith.constant 138 : index
    %849 = memref.load %arg2[%c138] : memref<192xf32, #tpu.memory_space<smem>>
    %850 = vector.extract_strided_slice %788 {offsets = [2, 0, 0], sizes = [1, 8, 33], strides = [1, 1, 1]} : vector<8x8x33xf32> to vector<1x8x33xf32>
    %851 = vector.shape_cast %850 : vector<1x8x33xf32> to vector<8x33xf32>
    %852 = vector.broadcast %849 : f32 to vector<8x33xf32>
    %853 = arith.mulf %852, %851 : vector<8x33xf32>
    %854 = arith.addf %848, %853 : vector<8x33xf32>
    %c139 = arith.constant 139 : index
    %855 = memref.load %arg2[%c139] : memref<192xf32, #tpu.memory_space<smem>>
    %856 = vector.extract_strided_slice %788 {offsets = [3, 0, 0], sizes = [1, 8, 33], strides = [1, 1, 1]} : vector<8x8x33xf32> to vector<1x8x33xf32>
    %857 = vector.shape_cast %856 : vector<1x8x33xf32> to vector<8x33xf32>
    %858 = vector.broadcast %855 : f32 to vector<8x33xf32>
    %859 = arith.mulf %858, %857 : vector<8x33xf32>
    %860 = arith.addf %854, %859 : vector<8x33xf32>
    %c140 = arith.constant 140 : index
    %861 = memref.load %arg2[%c140] : memref<192xf32, #tpu.memory_space<smem>>
    %862 = vector.extract_strided_slice %788 {offsets = [4, 0, 0], sizes = [1, 8, 33], strides = [1, 1, 1]} : vector<8x8x33xf32> to vector<1x8x33xf32>
    %863 = vector.shape_cast %862 : vector<1x8x33xf32> to vector<8x33xf32>
    %864 = vector.broadcast %861 : f32 to vector<8x33xf32>
    %865 = arith.mulf %864, %863 : vector<8x33xf32>
    %866 = arith.addf %860, %865 : vector<8x33xf32>
    %c141 = arith.constant 141 : index
    %867 = memref.load %arg2[%c141] : memref<192xf32, #tpu.memory_space<smem>>
    %868 = vector.extract_strided_slice %788 {offsets = [5, 0, 0], sizes = [1, 8, 33], strides = [1, 1, 1]} : vector<8x8x33xf32> to vector<1x8x33xf32>
    %869 = vector.shape_cast %868 : vector<1x8x33xf32> to vector<8x33xf32>
    %870 = vector.broadcast %867 : f32 to vector<8x33xf32>
    %871 = arith.mulf %870, %869 : vector<8x33xf32>
    %872 = arith.addf %866, %871 : vector<8x33xf32>
    %c142 = arith.constant 142 : index
    %873 = memref.load %arg2[%c142] : memref<192xf32, #tpu.memory_space<smem>>
    %874 = vector.extract_strided_slice %788 {offsets = [6, 0, 0], sizes = [1, 8, 33], strides = [1, 1, 1]} : vector<8x8x33xf32> to vector<1x8x33xf32>
    %875 = vector.shape_cast %874 : vector<1x8x33xf32> to vector<8x33xf32>
    %876 = vector.broadcast %873 : f32 to vector<8x33xf32>
    %877 = arith.mulf %876, %875 : vector<8x33xf32>
    %878 = arith.addf %872, %877 : vector<8x33xf32>
    %c143 = arith.constant 143 : index
    %879 = memref.load %arg2[%c143] : memref<192xf32, #tpu.memory_space<smem>>
    %880 = vector.extract_strided_slice %788 {offsets = [7, 0, 0], sizes = [1, 8, 33], strides = [1, 1, 1]} : vector<8x8x33xf32> to vector<1x8x33xf32>
    %881 = vector.shape_cast %880 : vector<1x8x33xf32> to vector<8x33xf32>
    %882 = vector.broadcast %879 : f32 to vector<8x33xf32>
    %883 = arith.mulf %882, %881 : vector<8x33xf32>
    %884 = arith.addf %878, %883 : vector<8x33xf32>
    %c144 = arith.constant 144 : index
    %885 = memref.load %arg2[%c144] : memref<192xf32, #tpu.memory_space<smem>>
    %886 = vector.extract_strided_slice %788 {offsets = [0, 0, 0], sizes = [1, 8, 33], strides = [1, 1, 1]} : vector<8x8x33xf32> to vector<1x8x33xf32>
    %887 = vector.shape_cast %886 : vector<1x8x33xf32> to vector<8x33xf32>
    %888 = vector.broadcast %885 : f32 to vector<8x33xf32>
    %889 = arith.mulf %888, %887 : vector<8x33xf32>
    %890 = arith.addf %738, %889 : vector<8x33xf32>
    %c145 = arith.constant 145 : index
    %891 = memref.load %arg2[%c145] : memref<192xf32, #tpu.memory_space<smem>>
    %892 = vector.extract_strided_slice %788 {offsets = [1, 0, 0], sizes = [1, 8, 33], strides = [1, 1, 1]} : vector<8x8x33xf32> to vector<1x8x33xf32>
    %893 = vector.shape_cast %892 : vector<1x8x33xf32> to vector<8x33xf32>
    %894 = vector.broadcast %891 : f32 to vector<8x33xf32>
    %895 = arith.mulf %894, %893 : vector<8x33xf32>
    %896 = arith.addf %890, %895 : vector<8x33xf32>
    %c146 = arith.constant 146 : index
    %897 = memref.load %arg2[%c146] : memref<192xf32, #tpu.memory_space<smem>>
    %898 = vector.extract_strided_slice %788 {offsets = [2, 0, 0], sizes = [1, 8, 33], strides = [1, 1, 1]} : vector<8x8x33xf32> to vector<1x8x33xf32>
    %899 = vector.shape_cast %898 : vector<1x8x33xf32> to vector<8x33xf32>
    %900 = vector.broadcast %897 : f32 to vector<8x33xf32>
    %901 = arith.mulf %900, %899 : vector<8x33xf32>
    %902 = arith.addf %896, %901 : vector<8x33xf32>
    %c147 = arith.constant 147 : index
    %903 = memref.load %arg2[%c147] : memref<192xf32, #tpu.memory_space<smem>>
    %904 = vector.extract_strided_slice %788 {offsets = [3, 0, 0], sizes = [1, 8, 33], strides = [1, 1, 1]} : vector<8x8x33xf32> to vector<1x8x33xf32>
    %905 = vector.shape_cast %904 : vector<1x8x33xf32> to vector<8x33xf32>
    %906 = vector.broadcast %903 : f32 to vector<8x33xf32>
    %907 = arith.mulf %906, %905 : vector<8x33xf32>
    %908 = arith.addf %902, %907 : vector<8x33xf32>
    %c148 = arith.constant 148 : index
    %909 = memref.load %arg2[%c148] : memref<192xf32, #tpu.memory_space<smem>>
    %910 = vector.extract_strided_slice %788 {offsets = [4, 0, 0], sizes = [1, 8, 33], strides = [1, 1, 1]} : vector<8x8x33xf32> to vector<1x8x33xf32>
    %911 = vector.shape_cast %910 : vector<1x8x33xf32> to vector<8x33xf32>
    %912 = vector.broadcast %909 : f32 to vector<8x33xf32>
    %913 = arith.mulf %912, %911 : vector<8x33xf32>
    %914 = arith.addf %908, %913 : vector<8x33xf32>
    %c149 = arith.constant 149 : index
    %915 = memref.load %arg2[%c149] : memref<192xf32, #tpu.memory_space<smem>>
    %916 = vector.extract_strided_slice %788 {offsets = [5, 0, 0], sizes = [1, 8, 33], strides = [1, 1, 1]} : vector<8x8x33xf32> to vector<1x8x33xf32>
    %917 = vector.shape_cast %916 : vector<1x8x33xf32> to vector<8x33xf32>
    %918 = vector.broadcast %915 : f32 to vector<8x33xf32>
    %919 = arith.mulf %918, %917 : vector<8x33xf32>
    %920 = arith.addf %914, %919 : vector<8x33xf32>
    %c150 = arith.constant 150 : index
    %921 = memref.load %arg2[%c150] : memref<192xf32, #tpu.memory_space<smem>>
    %922 = vector.extract_strided_slice %788 {offsets = [6, 0, 0], sizes = [1, 8, 33], strides = [1, 1, 1]} : vector<8x8x33xf32> to vector<1x8x33xf32>
    %923 = vector.shape_cast %922 : vector<1x8x33xf32> to vector<8x33xf32>
    %924 = vector.broadcast %921 : f32 to vector<8x33xf32>
    %925 = arith.mulf %924, %923 : vector<8x33xf32>
    %926 = arith.addf %920, %925 : vector<8x33xf32>
    %c151 = arith.constant 151 : index
    %927 = memref.load %arg2[%c151] : memref<192xf32, #tpu.memory_space<smem>>
    %928 = vector.extract_strided_slice %788 {offsets = [7, 0, 0], sizes = [1, 8, 33], strides = [1, 1, 1]} : vector<8x8x33xf32> to vector<1x8x33xf32>
    %929 = vector.shape_cast %928 : vector<1x8x33xf32> to vector<8x33xf32>
    %930 = vector.broadcast %927 : f32 to vector<8x33xf32>
    %931 = arith.mulf %930, %929 : vector<8x33xf32>
    %932 = arith.addf %926, %931 : vector<8x33xf32>
    %c152 = arith.constant 152 : index
    %933 = memref.load %arg2[%c152] : memref<192xf32, #tpu.memory_space<smem>>
    %934 = vector.extract_strided_slice %788 {offsets = [0, 0, 0], sizes = [1, 8, 33], strides = [1, 1, 1]} : vector<8x8x33xf32> to vector<1x8x33xf32>
    %935 = vector.shape_cast %934 : vector<1x8x33xf32> to vector<8x33xf32>
    %936 = vector.broadcast %933 : f32 to vector<8x33xf32>
    %937 = arith.mulf %936, %935 : vector<8x33xf32>
    %938 = arith.addf %786, %937 : vector<8x33xf32>
    %c153 = arith.constant 153 : index
    %939 = memref.load %arg2[%c153] : memref<192xf32, #tpu.memory_space<smem>>
    %940 = vector.extract_strided_slice %788 {offsets = [1, 0, 0], sizes = [1, 8, 33], strides = [1, 1, 1]} : vector<8x8x33xf32> to vector<1x8x33xf32>
    %941 = vector.shape_cast %940 : vector<1x8x33xf32> to vector<8x33xf32>
    %942 = vector.broadcast %939 : f32 to vector<8x33xf32>
    %943 = arith.mulf %942, %941 : vector<8x33xf32>
    %944 = arith.addf %938, %943 : vector<8x33xf32>
    %c154 = arith.constant 154 : index
    %945 = memref.load %arg2[%c154] : memref<192xf32, #tpu.memory_space<smem>>
    %946 = vector.extract_strided_slice %788 {offsets = [2, 0, 0], sizes = [1, 8, 33], strides = [1, 1, 1]} : vector<8x8x33xf32> to vector<1x8x33xf32>
    %947 = vector.shape_cast %946 : vector<1x8x33xf32> to vector<8x33xf32>
    %948 = vector.broadcast %945 : f32 to vector<8x33xf32>
    %949 = arith.mulf %948, %947 : vector<8x33xf32>
    %950 = arith.addf %944, %949 : vector<8x33xf32>
    %c155 = arith.constant 155 : index
    %951 = memref.load %arg2[%c155] : memref<192xf32, #tpu.memory_space<smem>>
    %952 = vector.extract_strided_slice %788 {offsets = [3, 0, 0], sizes = [1, 8, 33], strides = [1, 1, 1]} : vector<8x8x33xf32> to vector<1x8x33xf32>
    %953 = vector.shape_cast %952 : vector<1x8x33xf32> to vector<8x33xf32>
    %954 = vector.broadcast %951 : f32 to vector<8x33xf32>
    %955 = arith.mulf %954, %953 : vector<8x33xf32>
    %956 = arith.addf %950, %955 : vector<8x33xf32>
    %c156 = arith.constant 156 : index
    %957 = memref.load %arg2[%c156] : memref<192xf32, #tpu.memory_space<smem>>
    %958 = vector.extract_strided_slice %788 {offsets = [4, 0, 0], sizes = [1, 8, 33], strides = [1, 1, 1]} : vector<8x8x33xf32> to vector<1x8x33xf32>
    %959 = vector.shape_cast %958 : vector<1x8x33xf32> to vector<8x33xf32>
    %960 = vector.broadcast %957 : f32 to vector<8x33xf32>
    %961 = arith.mulf %960, %959 : vector<8x33xf32>
    %962 = arith.addf %956, %961 : vector<8x33xf32>
    %c157 = arith.constant 157 : index
    %963 = memref.load %arg2[%c157] : memref<192xf32, #tpu.memory_space<smem>>
    %964 = vector.extract_strided_slice %788 {offsets = [5, 0, 0], sizes = [1, 8, 33], strides = [1, 1, 1]} : vector<8x8x33xf32> to vector<1x8x33xf32>
    %965 = vector.shape_cast %964 : vector<1x8x33xf32> to vector<8x33xf32>
    %966 = vector.broadcast %963 : f32 to vector<8x33xf32>
    %967 = arith.mulf %966, %965 : vector<8x33xf32>
    %968 = arith.addf %962, %967 : vector<8x33xf32>
    %c158 = arith.constant 158 : index
    %969 = memref.load %arg2[%c158] : memref<192xf32, #tpu.memory_space<smem>>
    %970 = vector.extract_strided_slice %788 {offsets = [6, 0, 0], sizes = [1, 8, 33], strides = [1, 1, 1]} : vector<8x8x33xf32> to vector<1x8x33xf32>
    %971 = vector.shape_cast %970 : vector<1x8x33xf32> to vector<8x33xf32>
    %972 = vector.broadcast %969 : f32 to vector<8x33xf32>
    %973 = arith.mulf %972, %971 : vector<8x33xf32>
    %974 = arith.addf %968, %973 : vector<8x33xf32>
    %c159 = arith.constant 159 : index
    %975 = memref.load %arg2[%c159] : memref<192xf32, #tpu.memory_space<smem>>
    %976 = vector.extract_strided_slice %788 {offsets = [7, 0, 0], sizes = [1, 8, 33], strides = [1, 1, 1]} : vector<8x8x33xf32> to vector<1x8x33xf32>
    %977 = vector.shape_cast %976 : vector<1x8x33xf32> to vector<8x33xf32>
    %978 = vector.broadcast %975 : f32 to vector<8x33xf32>
    %979 = arith.mulf %978, %977 : vector<8x33xf32>
    %980 = arith.addf %974, %979 : vector<8x33xf32>
    %c0_30 = arith.constant 0 : index
    %c0_31 = arith.constant 0 : index
    %c0_32 = arith.constant 0 : index
    %c1_33 = arith.constant 1 : index
    %c2_34 = arith.constant 2 : index
    %981 = vector.load %arg4[%c0_30, %c0_31, %c0_32, %c1_33, %c2_34] : memref<1x1x8x9x35xf32, #tpu.memory_space<vmem>>, vector<1x1x8x8x33xf32>
    %982 = vector.shape_cast %981 : vector<1x1x8x8x33xf32> to vector<8x8x33xf32>
    %c160 = arith.constant 160 : index
    %983 = memref.load %arg2[%c160] : memref<192xf32, #tpu.memory_space<smem>>
    %984 = vector.extract_strided_slice %982 {offsets = [0, 0, 0], sizes = [1, 8, 33], strides = [1, 1, 1]} : vector<8x8x33xf32> to vector<1x8x33xf32>
    %985 = vector.shape_cast %984 : vector<1x8x33xf32> to vector<8x33xf32>
    %986 = vector.broadcast %983 : f32 to vector<8x33xf32>
    %987 = arith.mulf %986, %985 : vector<8x33xf32>
    %988 = arith.addf %836, %987 : vector<8x33xf32>
    %c161 = arith.constant 161 : index
    %989 = memref.load %arg2[%c161] : memref<192xf32, #tpu.memory_space<smem>>
    %990 = vector.extract_strided_slice %982 {offsets = [1, 0, 0], sizes = [1, 8, 33], strides = [1, 1, 1]} : vector<8x8x33xf32> to vector<1x8x33xf32>
    %991 = vector.shape_cast %990 : vector<1x8x33xf32> to vector<8x33xf32>
    %992 = vector.broadcast %989 : f32 to vector<8x33xf32>
    %993 = arith.mulf %992, %991 : vector<8x33xf32>
    %994 = arith.addf %988, %993 : vector<8x33xf32>
    %c162 = arith.constant 162 : index
    %995 = memref.load %arg2[%c162] : memref<192xf32, #tpu.memory_space<smem>>
    %996 = vector.extract_strided_slice %982 {offsets = [2, 0, 0], sizes = [1, 8, 33], strides = [1, 1, 1]} : vector<8x8x33xf32> to vector<1x8x33xf32>
    %997 = vector.shape_cast %996 : vector<1x8x33xf32> to vector<8x33xf32>
    %998 = vector.broadcast %995 : f32 to vector<8x33xf32>
    %999 = arith.mulf %998, %997 : vector<8x33xf32>
    %1000 = arith.addf %994, %999 : vector<8x33xf32>
    %c163 = arith.constant 163 : index
    %1001 = memref.load %arg2[%c163] : memref<192xf32, #tpu.memory_space<smem>>
    %1002 = vector.extract_strided_slice %982 {offsets = [3, 0, 0], sizes = [1, 8, 33], strides = [1, 1, 1]} : vector<8x8x33xf32> to vector<1x8x33xf32>
    %1003 = vector.shape_cast %1002 : vector<1x8x33xf32> to vector<8x33xf32>
    %1004 = vector.broadcast %1001 : f32 to vector<8x33xf32>
    %1005 = arith.mulf %1004, %1003 : vector<8x33xf32>
    %1006 = arith.addf %1000, %1005 : vector<8x33xf32>
    %c164 = arith.constant 164 : index
    %1007 = memref.load %arg2[%c164] : memref<192xf32, #tpu.memory_space<smem>>
    %1008 = vector.extract_strided_slice %982 {offsets = [4, 0, 0], sizes = [1, 8, 33], strides = [1, 1, 1]} : vector<8x8x33xf32> to vector<1x8x33xf32>
    %1009 = vector.shape_cast %1008 : vector<1x8x33xf32> to vector<8x33xf32>
    %1010 = vector.broadcast %1007 : f32 to vector<8x33xf32>
    %1011 = arith.mulf %1010, %1009 : vector<8x33xf32>
    %1012 = arith.addf %1006, %1011 : vector<8x33xf32>
    %c165 = arith.constant 165 : index
    %1013 = memref.load %arg2[%c165] : memref<192xf32, #tpu.memory_space<smem>>
    %1014 = vector.extract_strided_slice %982 {offsets = [5, 0, 0], sizes = [1, 8, 33], strides = [1, 1, 1]} : vector<8x8x33xf32> to vector<1x8x33xf32>
    %1015 = vector.shape_cast %1014 : vector<1x8x33xf32> to vector<8x33xf32>
    %1016 = vector.broadcast %1013 : f32 to vector<8x33xf32>
    %1017 = arith.mulf %1016, %1015 : vector<8x33xf32>
    %1018 = arith.addf %1012, %1017 : vector<8x33xf32>
    %c166 = arith.constant 166 : index
    %1019 = memref.load %arg2[%c166] : memref<192xf32, #tpu.memory_space<smem>>
    %1020 = vector.extract_strided_slice %982 {offsets = [6, 0, 0], sizes = [1, 8, 33], strides = [1, 1, 1]} : vector<8x8x33xf32> to vector<1x8x33xf32>
    %1021 = vector.shape_cast %1020 : vector<1x8x33xf32> to vector<8x33xf32>
    %1022 = vector.broadcast %1019 : f32 to vector<8x33xf32>
    %1023 = arith.mulf %1022, %1021 : vector<8x33xf32>
    %1024 = arith.addf %1018, %1023 : vector<8x33xf32>
    %c167 = arith.constant 167 : index
    %1025 = memref.load %arg2[%c167] : memref<192xf32, #tpu.memory_space<smem>>
    %1026 = vector.extract_strided_slice %982 {offsets = [7, 0, 0], sizes = [1, 8, 33], strides = [1, 1, 1]} : vector<8x8x33xf32> to vector<1x8x33xf32>
    %1027 = vector.shape_cast %1026 : vector<1x8x33xf32> to vector<8x33xf32>
    %1028 = vector.broadcast %1025 : f32 to vector<8x33xf32>
    %1029 = arith.mulf %1028, %1027 : vector<8x33xf32>
    %1030 = arith.addf %1024, %1029 : vector<8x33xf32>
    %c168 = arith.constant 168 : index
    %1031 = memref.load %arg2[%c168] : memref<192xf32, #tpu.memory_space<smem>>
    %1032 = vector.extract_strided_slice %982 {offsets = [0, 0, 0], sizes = [1, 8, 33], strides = [1, 1, 1]} : vector<8x8x33xf32> to vector<1x8x33xf32>
    %1033 = vector.shape_cast %1032 : vector<1x8x33xf32> to vector<8x33xf32>
    %1034 = vector.broadcast %1031 : f32 to vector<8x33xf32>
    %1035 = arith.mulf %1034, %1033 : vector<8x33xf32>
    %1036 = arith.addf %884, %1035 : vector<8x33xf32>
    %c169 = arith.constant 169 : index
    %1037 = memref.load %arg2[%c169] : memref<192xf32, #tpu.memory_space<smem>>
    %1038 = vector.extract_strided_slice %982 {offsets = [1, 0, 0], sizes = [1, 8, 33], strides = [1, 1, 1]} : vector<8x8x33xf32> to vector<1x8x33xf32>
    %1039 = vector.shape_cast %1038 : vector<1x8x33xf32> to vector<8x33xf32>
    %1040 = vector.broadcast %1037 : f32 to vector<8x33xf32>
    %1041 = arith.mulf %1040, %1039 : vector<8x33xf32>
    %1042 = arith.addf %1036, %1041 : vector<8x33xf32>
    %c170 = arith.constant 170 : index
    %1043 = memref.load %arg2[%c170] : memref<192xf32, #tpu.memory_space<smem>>
    %1044 = vector.extract_strided_slice %982 {offsets = [2, 0, 0], sizes = [1, 8, 33], strides = [1, 1, 1]} : vector<8x8x33xf32> to vector<1x8x33xf32>
    %1045 = vector.shape_cast %1044 : vector<1x8x33xf32> to vector<8x33xf32>
    %1046 = vector.broadcast %1043 : f32 to vector<8x33xf32>
    %1047 = arith.mulf %1046, %1045 : vector<8x33xf32>
    %1048 = arith.addf %1042, %1047 : vector<8x33xf32>
    %c171 = arith.constant 171 : index
    %1049 = memref.load %arg2[%c171] : memref<192xf32, #tpu.memory_space<smem>>
    %1050 = vector.extract_strided_slice %982 {offsets = [3, 0, 0], sizes = [1, 8, 33], strides = [1, 1, 1]} : vector<8x8x33xf32> to vector<1x8x33xf32>
    %1051 = vector.shape_cast %1050 : vector<1x8x33xf32> to vector<8x33xf32>
    %1052 = vector.broadcast %1049 : f32 to vector<8x33xf32>
    %1053 = arith.mulf %1052, %1051 : vector<8x33xf32>
    %1054 = arith.addf %1048, %1053 : vector<8x33xf32>
    %c172 = arith.constant 172 : index
    %1055 = memref.load %arg2[%c172] : memref<192xf32, #tpu.memory_space<smem>>
    %1056 = vector.extract_strided_slice %982 {offsets = [4, 0, 0], sizes = [1, 8, 33], strides = [1, 1, 1]} : vector<8x8x33xf32> to vector<1x8x33xf32>
    %1057 = vector.shape_cast %1056 : vector<1x8x33xf32> to vector<8x33xf32>
    %1058 = vector.broadcast %1055 : f32 to vector<8x33xf32>
    %1059 = arith.mulf %1058, %1057 : vector<8x33xf32>
    %1060 = arith.addf %1054, %1059 : vector<8x33xf32>
    %c173 = arith.constant 173 : index
    %1061 = memref.load %arg2[%c173] : memref<192xf32, #tpu.memory_space<smem>>
    %1062 = vector.extract_strided_slice %982 {offsets = [5, 0, 0], sizes = [1, 8, 33], strides = [1, 1, 1]} : vector<8x8x33xf32> to vector<1x8x33xf32>
    %1063 = vector.shape_cast %1062 : vector<1x8x33xf32> to vector<8x33xf32>
    %1064 = vector.broadcast %1061 : f32 to vector<8x33xf32>
    %1065 = arith.mulf %1064, %1063 : vector<8x33xf32>
    %1066 = arith.addf %1060, %1065 : vector<8x33xf32>
    %c174 = arith.constant 174 : index
    %1067 = memref.load %arg2[%c174] : memref<192xf32, #tpu.memory_space<smem>>
    %1068 = vector.extract_strided_slice %982 {offsets = [6, 0, 0], sizes = [1, 8, 33], strides = [1, 1, 1]} : vector<8x8x33xf32> to vector<1x8x33xf32>
    %1069 = vector.shape_cast %1068 : vector<1x8x33xf32> to vector<8x33xf32>
    %1070 = vector.broadcast %1067 : f32 to vector<8x33xf32>
    %1071 = arith.mulf %1070, %1069 : vector<8x33xf32>
    %1072 = arith.addf %1066, %1071 : vector<8x33xf32>
    %c175 = arith.constant 175 : index
    %1073 = memref.load %arg2[%c175] : memref<192xf32, #tpu.memory_space<smem>>
    %1074 = vector.extract_strided_slice %982 {offsets = [7, 0, 0], sizes = [1, 8, 33], strides = [1, 1, 1]} : vector<8x8x33xf32> to vector<1x8x33xf32>
    %1075 = vector.shape_cast %1074 : vector<1x8x33xf32> to vector<8x33xf32>
    %1076 = vector.broadcast %1073 : f32 to vector<8x33xf32>
    %1077 = arith.mulf %1076, %1075 : vector<8x33xf32>
    %1078 = arith.addf %1072, %1077 : vector<8x33xf32>
    %c176 = arith.constant 176 : index
    %1079 = memref.load %arg2[%c176] : memref<192xf32, #tpu.memory_space<smem>>
    %1080 = vector.extract_strided_slice %982 {offsets = [0, 0, 0], sizes = [1, 8, 33], strides = [1, 1, 1]} : vector<8x8x33xf32> to vector<1x8x33xf32>
    %1081 = vector.shape_cast %1080 : vector<1x8x33xf32> to vector<8x33xf32>
    %1082 = vector.broadcast %1079 : f32 to vector<8x33xf32>
    %1083 = arith.mulf %1082, %1081 : vector<8x33xf32>
    %1084 = arith.addf %932, %1083 : vector<8x33xf32>
    %c177 = arith.constant 177 : index
    %1085 = memref.load %arg2[%c177] : memref<192xf32, #tpu.memory_space<smem>>
    %1086 = vector.extract_strided_slice %982 {offsets = [1, 0, 0], sizes = [1, 8, 33], strides = [1, 1, 1]} : vector<8x8x33xf32> to vector<1x8x33xf32>
    %1087 = vector.shape_cast %1086 : vector<1x8x33xf32> to vector<8x33xf32>
    %1088 = vector.broadcast %1085 : f32 to vector<8x33xf32>
    %1089 = arith.mulf %1088, %1087 : vector<8x33xf32>
    %1090 = arith.addf %1084, %1089 : vector<8x33xf32>
    %c178 = arith.constant 178 : index
    %1091 = memref.load %arg2[%c178] : memref<192xf32, #tpu.memory_space<smem>>
    %1092 = vector.extract_strided_slice %982 {offsets = [2, 0, 0], sizes = [1, 8, 33], strides = [1, 1, 1]} : vector<8x8x33xf32> to vector<1x8x33xf32>
    %1093 = vector.shape_cast %1092 : vector<1x8x33xf32> to vector<8x33xf32>
    %1094 = vector.broadcast %1091 : f32 to vector<8x33xf32>
    %1095 = arith.mulf %1094, %1093 : vector<8x33xf32>
    %1096 = arith.addf %1090, %1095 : vector<8x33xf32>
    %c179 = arith.constant 179 : index
    %1097 = memref.load %arg2[%c179] : memref<192xf32, #tpu.memory_space<smem>>
    %1098 = vector.extract_strided_slice %982 {offsets = [3, 0, 0], sizes = [1, 8, 33], strides = [1, 1, 1]} : vector<8x8x33xf32> to vector<1x8x33xf32>
    %1099 = vector.shape_cast %1098 : vector<1x8x33xf32> to vector<8x33xf32>
    %1100 = vector.broadcast %1097 : f32 to vector<8x33xf32>
    %1101 = arith.mulf %1100, %1099 : vector<8x33xf32>
    %1102 = arith.addf %1096, %1101 : vector<8x33xf32>
    %c180 = arith.constant 180 : index
    %1103 = memref.load %arg2[%c180] : memref<192xf32, #tpu.memory_space<smem>>
    %1104 = vector.extract_strided_slice %982 {offsets = [4, 0, 0], sizes = [1, 8, 33], strides = [1, 1, 1]} : vector<8x8x33xf32> to vector<1x8x33xf32>
    %1105 = vector.shape_cast %1104 : vector<1x8x33xf32> to vector<8x33xf32>
    %1106 = vector.broadcast %1103 : f32 to vector<8x33xf32>
    %1107 = arith.mulf %1106, %1105 : vector<8x33xf32>
    %1108 = arith.addf %1102, %1107 : vector<8x33xf32>
    %c181 = arith.constant 181 : index
    %1109 = memref.load %arg2[%c181] : memref<192xf32, #tpu.memory_space<smem>>
    %1110 = vector.extract_strided_slice %982 {offsets = [5, 0, 0], sizes = [1, 8, 33], strides = [1, 1, 1]} : vector<8x8x33xf32> to vector<1x8x33xf32>
    %1111 = vector.shape_cast %1110 : vector<1x8x33xf32> to vector<8x33xf32>
    %1112 = vector.broadcast %1109 : f32 to vector<8x33xf32>
    %1113 = arith.mulf %1112, %1111 : vector<8x33xf32>
    %1114 = arith.addf %1108, %1113 : vector<8x33xf32>
    %c182 = arith.constant 182 : index
    %1115 = memref.load %arg2[%c182] : memref<192xf32, #tpu.memory_space<smem>>
    %1116 = vector.extract_strided_slice %982 {offsets = [6, 0, 0], sizes = [1, 8, 33], strides = [1, 1, 1]} : vector<8x8x33xf32> to vector<1x8x33xf32>
    %1117 = vector.shape_cast %1116 : vector<1x8x33xf32> to vector<8x33xf32>
    %1118 = vector.broadcast %1115 : f32 to vector<8x33xf32>
    %1119 = arith.mulf %1118, %1117 : vector<8x33xf32>
    %1120 = arith.addf %1114, %1119 : vector<8x33xf32>
    %c183 = arith.constant 183 : index
    %1121 = memref.load %arg2[%c183] : memref<192xf32, #tpu.memory_space<smem>>
    %1122 = vector.extract_strided_slice %982 {offsets = [7, 0, 0], sizes = [1, 8, 33], strides = [1, 1, 1]} : vector<8x8x33xf32> to vector<1x8x33xf32>
    %1123 = vector.shape_cast %1122 : vector<1x8x33xf32> to vector<8x33xf32>
    %1124 = vector.broadcast %1121 : f32 to vector<8x33xf32>
    %1125 = arith.mulf %1124, %1123 : vector<8x33xf32>
    %1126 = arith.addf %1120, %1125 : vector<8x33xf32>
    %c184 = arith.constant 184 : index
    %1127 = memref.load %arg2[%c184] : memref<192xf32, #tpu.memory_space<smem>>
    %1128 = vector.extract_strided_slice %982 {offsets = [0, 0, 0], sizes = [1, 8, 33], strides = [1, 1, 1]} : vector<8x8x33xf32> to vector<1x8x33xf32>
    %1129 = vector.shape_cast %1128 : vector<1x8x33xf32> to vector<8x33xf32>
    %1130 = vector.broadcast %1127 : f32 to vector<8x33xf32>
    %1131 = arith.mulf %1130, %1129 : vector<8x33xf32>
    %1132 = arith.addf %980, %1131 : vector<8x33xf32>
    %c185 = arith.constant 185 : index
    %1133 = memref.load %arg2[%c185] : memref<192xf32, #tpu.memory_space<smem>>
    %1134 = vector.extract_strided_slice %982 {offsets = [1, 0, 0], sizes = [1, 8, 33], strides = [1, 1, 1]} : vector<8x8x33xf32> to vector<1x8x33xf32>
    %1135 = vector.shape_cast %1134 : vector<1x8x33xf32> to vector<8x33xf32>
    %1136 = vector.broadcast %1133 : f32 to vector<8x33xf32>
    %1137 = arith.mulf %1136, %1135 : vector<8x33xf32>
    %1138 = arith.addf %1132, %1137 : vector<8x33xf32>
    %c186 = arith.constant 186 : index
    %1139 = memref.load %arg2[%c186] : memref<192xf32, #tpu.memory_space<smem>>
    %1140 = vector.extract_strided_slice %982 {offsets = [2, 0, 0], sizes = [1, 8, 33], strides = [1, 1, 1]} : vector<8x8x33xf32> to vector<1x8x33xf32>
    %1141 = vector.shape_cast %1140 : vector<1x8x33xf32> to vector<8x33xf32>
    %1142 = vector.broadcast %1139 : f32 to vector<8x33xf32>
    %1143 = arith.mulf %1142, %1141 : vector<8x33xf32>
    %1144 = arith.addf %1138, %1143 : vector<8x33xf32>
    %c187 = arith.constant 187 : index
    %1145 = memref.load %arg2[%c187] : memref<192xf32, #tpu.memory_space<smem>>
    %1146 = vector.extract_strided_slice %982 {offsets = [3, 0, 0], sizes = [1, 8, 33], strides = [1, 1, 1]} : vector<8x8x33xf32> to vector<1x8x33xf32>
    %1147 = vector.shape_cast %1146 : vector<1x8x33xf32> to vector<8x33xf32>
    %1148 = vector.broadcast %1145 : f32 to vector<8x33xf32>
    %1149 = arith.mulf %1148, %1147 : vector<8x33xf32>
    %1150 = arith.addf %1144, %1149 : vector<8x33xf32>
    %c188 = arith.constant 188 : index
    %1151 = memref.load %arg2[%c188] : memref<192xf32, #tpu.memory_space<smem>>
    %1152 = vector.extract_strided_slice %982 {offsets = [4, 0, 0], sizes = [1, 8, 33], strides = [1, 1, 1]} : vector<8x8x33xf32> to vector<1x8x33xf32>
    %1153 = vector.shape_cast %1152 : vector<1x8x33xf32> to vector<8x33xf32>
    %1154 = vector.broadcast %1151 : f32 to vector<8x33xf32>
    %1155 = arith.mulf %1154, %1153 : vector<8x33xf32>
    %1156 = arith.addf %1150, %1155 : vector<8x33xf32>
    %c189 = arith.constant 189 : index
    %1157 = memref.load %arg2[%c189] : memref<192xf32, #tpu.memory_space<smem>>
    %1158 = vector.extract_strided_slice %982 {offsets = [5, 0, 0], sizes = [1, 8, 33], strides = [1, 1, 1]} : vector<8x8x33xf32> to vector<1x8x33xf32>
    %1159 = vector.shape_cast %1158 : vector<1x8x33xf32> to vector<8x33xf32>
    %1160 = vector.broadcast %1157 : f32 to vector<8x33xf32>
    %1161 = arith.mulf %1160, %1159 : vector<8x33xf32>
    %1162 = arith.addf %1156, %1161 : vector<8x33xf32>
    %c190 = arith.constant 190 : index
    %1163 = memref.load %arg2[%c190] : memref<192xf32, #tpu.memory_space<smem>>
    %1164 = vector.extract_strided_slice %982 {offsets = [6, 0, 0], sizes = [1, 8, 33], strides = [1, 1, 1]} : vector<8x8x33xf32> to vector<1x8x33xf32>
    %1165 = vector.shape_cast %1164 : vector<1x8x33xf32> to vector<8x33xf32>
    %1166 = vector.broadcast %1163 : f32 to vector<8x33xf32>
    %1167 = arith.mulf %1166, %1165 : vector<8x33xf32>
    %1168 = arith.addf %1162, %1167 : vector<8x33xf32>
    %c191 = arith.constant 191 : index
    %1169 = memref.load %arg2[%c191] : memref<192xf32, #tpu.memory_space<smem>>
    %1170 = vector.extract_strided_slice %982 {offsets = [7, 0, 0], sizes = [1, 8, 33], strides = [1, 1, 1]} : vector<8x8x33xf32> to vector<1x8x33xf32>
    %1171 = vector.shape_cast %1170 : vector<1x8x33xf32> to vector<8x33xf32>
    %1172 = vector.broadcast %1169 : f32 to vector<8x33xf32>
    %1173 = arith.mulf %1172, %1171 : vector<8x33xf32>
    %1174 = arith.addf %1168, %1173 : vector<8x33xf32>
    %cst = arith.constant 0.000000e+00 : f32
    %1175 = vector.broadcast %cst : f32 to vector<8x1xf32>
    %cst_35 = arith.constant 0.000000e+00 : f32
    %1176 = vector.broadcast %cst_35 : f32 to vector<8x1xf32>
    %cst_36 = arith.constant dense<0.000000e+00> : vector<8xf32>
    %1177 = vector.multi_reduction <add>, %1030, %cst_36 [1] : vector<8x33xf32> to vector<8xf32>
    %1178 = vector.shape_cast %1177 : vector<8xf32> to vector<8x1xf32>
    %1179 = arith.addf %1175, %1178 : vector<8x1xf32>
    %1180 = arith.mulf %1030, %1030 : vector<8x33xf32>
    %cst_37 = arith.constant dense<0.000000e+00> : vector<8xf32>
    %1181 = vector.multi_reduction <add>, %1180, %cst_37 [1] : vector<8x33xf32> to vector<8xf32>
    %1182 = vector.shape_cast %1181 : vector<8xf32> to vector<8x1xf32>
    %1183 = arith.addf %1176, %1182 : vector<8x1xf32>
    %cst_38 = arith.constant dense<0.000000e+00> : vector<8xf32>
    %1184 = vector.multi_reduction <add>, %1078, %cst_38 [1] : vector<8x33xf32> to vector<8xf32>
    %1185 = vector.shape_cast %1184 : vector<8xf32> to vector<8x1xf32>
    %1186 = arith.addf %1179, %1185 : vector<8x1xf32>
    %1187 = arith.mulf %1078, %1078 : vector<8x33xf32>
    %cst_39 = arith.constant dense<0.000000e+00> : vector<8xf32>
    %1188 = vector.multi_reduction <add>, %1187, %cst_39 [1] : vector<8x33xf32> to vector<8xf32>
    %1189 = vector.shape_cast %1188 : vector<8xf32> to vector<8x1xf32>
    %1190 = arith.addf %1183, %1189 : vector<8x1xf32>
    %cst_40 = arith.constant dense<0.000000e+00> : vector<8xf32>
    %1191 = vector.multi_reduction <add>, %1126, %cst_40 [1] : vector<8x33xf32> to vector<8xf32>
    %1192 = vector.shape_cast %1191 : vector<8xf32> to vector<8x1xf32>
    %1193 = arith.addf %1186, %1192 : vector<8x1xf32>
    %1194 = arith.mulf %1126, %1126 : vector<8x33xf32>
    %cst_41 = arith.constant dense<0.000000e+00> : vector<8xf32>
    %1195 = vector.multi_reduction <add>, %1194, %cst_41 [1] : vector<8x33xf32> to vector<8xf32>
    %1196 = vector.shape_cast %1195 : vector<8xf32> to vector<8x1xf32>
    %1197 = arith.addf %1190, %1196 : vector<8x1xf32>
    %cst_42 = arith.constant dense<0.000000e+00> : vector<8xf32>
    %1198 = vector.multi_reduction <add>, %1174, %cst_42 [1] : vector<8x33xf32> to vector<8xf32>
    %1199 = vector.shape_cast %1198 : vector<8xf32> to vector<8x1xf32>
    %1200 = arith.addf %1193, %1199 : vector<8x1xf32>
    %1201 = arith.mulf %1174, %1174 : vector<8x33xf32>
    %cst_43 = arith.constant dense<0.000000e+00> : vector<8xf32>
    %1202 = vector.multi_reduction <add>, %1201, %cst_43 [1] : vector<8x33xf32> to vector<8xf32>
    %1203 = vector.shape_cast %1202 : vector<8xf32> to vector<8x1xf32>
    %1204 = arith.addf %1197, %1203 : vector<8x1xf32>
    %1205 = tpu.iota {dimensions = array<i32: 0>} : vector<8x8xi32>
    %1206 = tpu.iota {dimensions = array<i32: 1>} : vector<8x8xi32>
    %1207 = arith.cmpi sle, %1206, %1205 : vector<8x8xi32>
    %1208 = arith.extui %1207 : vector<8x8xi1> to vector<8x8xi32>
    %1209 = arith.sitofp %1208 : vector<8x8xi32> to vector<8x8xf32>
    %cst_44 = arith.constant dense<0.000000e+00> : vector<8x1xf32>
    %1210 = tpu.matmul %1209, %1200, %cst_44 {dimension_numbers = #tpu.dot_dimension_numbers<[1], [0], [0], [1], [0, 0, 1, 1], [], []>} : vector<8x8xf32>, vector<8x1xf32>, vector<8x1xf32> -> vector<8x1xf32>
    %c0_45 = arith.constant 0 : index
    %c0_46 = arith.constant 0 : index
    %1211 = vector.load %arg6[%c0_45, %c0_46] : memref<1x1xf32, #tpu.memory_space<vmem>>, vector<1x1xf32>
    %1212 = vector.broadcast %1211 : vector<1x1xf32> to vector<8x1xf32>
    %1213 = arith.addf %1210, %1212 : vector<8x1xf32>
    %cst_47 = arith.constant dense<0.000000e+00> : vector<8x1xf32>
    %1214 = tpu.matmul %1209, %1204, %cst_47 {dimension_numbers = #tpu.dot_dimension_numbers<[1], [0], [0], [1], [0, 0, 1, 1], [], []>} : vector<8x8xf32>, vector<8x1xf32>, vector<8x1xf32> -> vector<8x1xf32>
    %c0_48 = arith.constant 0 : index
    %c0_49 = arith.constant 0 : index
    %1215 = vector.load %arg7[%c0_48, %c0_49] : memref<1x1xf32, #tpu.memory_space<vmem>>, vector<1x1xf32>
    %1216 = vector.broadcast %1215 : vector<1x1xf32> to vector<8x1xf32>
    %1217 = arith.addf %1214, %1216 : vector<8x1xf32>
    %1218 = vector.extract_strided_slice %1213 {offsets = [7, 0], sizes = [1, 1], strides = [1, 1]} : vector<8x1xf32> to vector<1x1xf32>
    %c0_50 = arith.constant 0 : index
    %c0_51 = arith.constant 0 : index
    %1219 = vector.load %arg6[%c0_50, %c0_51] : memref<1x1xf32, #tpu.memory_space<vmem>>, vector<1x1xf32>
    tpu.vector_store %arg6[%c0_50, %c0_51], %1218 {strides = array<i32>} : memref<1x1xf32, #tpu.memory_space<vmem>>, vector<1x1xf32>,
    %1220 = vector.extract_strided_slice %1217 {offsets = [7, 0], sizes = [1, 1], strides = [1, 1]} : vector<8x1xf32> to vector<1x1xf32>
    %c0_52 = arith.constant 0 : index
    %c0_53 = arith.constant 0 : index
    %1221 = vector.load %arg7[%c0_52, %c0_53] : memref<1x1xf32, #tpu.memory_space<vmem>>, vector<1x1xf32>
    tpu.vector_store %arg7[%c0_52, %c0_53], %1220 {strides = array<i32>} : memref<1x1xf32, #tpu.memory_space<vmem>>, vector<1x1xf32>,
    %1222 = tpu.iota {dimensions = array<i32: 0>} : vector<8x1xi32>
    %c8_i32 = arith.constant 8 : i32
    %1223 = arith.muli %arg1, %c8_i32 : i32
    %1224 = vector.broadcast %1223 : i32 to vector<8x1xi32>
    %1225 = arith.addi %1222, %1224 : vector<8x1xi32>
    %1226 = arith.sitofp %1225 : vector<8x1xi32> to vector<8x1xf32>
    %cst_54 = arith.constant 1.000000e+00 : f32
    %1227 = vector.broadcast %cst_54 : f32 to vector<8x1xf32>
    %1228 = arith.addf %1226, %1227 : vector<8x1xf32>
    %cst_55 = arith.constant 1.320000e+02 : f32
    %1229 = vector.broadcast %cst_55 : f32 to vector<8x1xf32>
    %1230 = arith.mulf %1228, %1229 : vector<8x1xf32>
    %1231 = arith.divf %1213, %1230 : vector<8x1xf32>
    %cst_56 = arith.constant 2.000000e+00 : f32
    %1232 = vector.broadcast %cst_56 : f32 to vector<8x1xf32>
    %1233 = arith.mulf %1232, %1231 : vector<8x1xf32>
    %1234 = arith.mulf %1233, %1213 : vector<8x1xf32>
    %1235 = arith.subf %1217, %1234 : vector<8x1xf32>
    %1236 = arith.divf %1235, %1230 : vector<8x1xf32>
    %1237 = arith.mulf %1231, %1231 : vector<8x1xf32>
    %1238 = arith.addf %1236, %1237 : vector<8x1xf32>
    %cst_57 = arith.constant 0.000000e+00 : f32
    %1239 = vector.broadcast %cst_57 : f32 to vector<8x1xf32>
    %1240 = arith.maximumf %1238, %1239 : vector<8x1xf32>
    %cst_58 = arith.constant 9.99999974E-6 : f32
    %1241 = vector.broadcast %cst_58 : f32 to vector<8x1xf32>
    %1242 = arith.addf %1240, %1241 : vector<8x1xf32>
    %1243 = math.rsqrt %1242 : vector<8x1xf32>
    %1244 = vector.broadcast %1231 : vector<8x1xf32> to vector<8x33xf32>
    %1245 = arith.subf %1030, %1244 : vector<8x33xf32>
    %1246 = vector.broadcast %1243 : vector<8x1xf32> to vector<8x33xf32>
    %1247 = arith.mulf %1245, %1246 : vector<8x33xf32>
    %c4_59 = arith.constant 4 : index
    %1248 = memref.load %arg3[%c4_59] : memref<16xf32, #tpu.memory_space<smem>>
    %1249 = vector.broadcast %1248 : f32 to vector<8x33xf32>
    %1250 = arith.mulf %1247, %1249 : vector<8x33xf32>
    %c8_60 = arith.constant 8 : index
    %1251 = memref.load %arg3[%c8_60] : memref<16xf32, #tpu.memory_space<smem>>
    %1252 = vector.broadcast %1251 : f32 to vector<8x33xf32>
    %1253 = arith.addf %1250, %1252 : vector<8x33xf32>
    %cst_61 = arith.constant 0.000000e+00 : f32
    %1254 = vector.broadcast %cst_61 : f32 to vector<8x33xf32>
    %1255 = arith.cmpf oge, %1253, %1254 : vector<8x33xf32>
    %c12_62 = arith.constant 12 : index
    %1256 = memref.load %arg3[%c12_62] : memref<16xf32, #tpu.memory_space<smem>>
    %1257 = vector.broadcast %1256 : f32 to vector<8x33xf32>
    %1258 = arith.mulf %1257, %1253 : vector<8x33xf32>
    %1259 = arith.select %1255, %1253, %1258 : vector<8x33xi1>, vector<8x33xf32>
    %c0_63 = arith.constant 0 : index
    %c0_64 = arith.constant 0 : index
    %c0_65 = arith.constant 0 : index
    %c0_66 = arith.constant 0 : index
    %1260 = vector.load %arg5[%c0_63, %c0_64, %c0_65, %c0_66] : memref<1x4x8x33xf32, #tpu.memory_space<vmem>>, vector<1x1x8x33xf32>
    %1261 = vector.shape_cast %1260 : vector<1x1x8x33xf32> to vector<8x33xf32>
    %1262 = vector.shape_cast %1259 : vector<8x33xf32> to vector<1x1x8x33xf32>
    tpu.vector_store %arg5[%c0_63, %c0_64, %c0_65, %c0_66], %1262 {strides = array<i32>} : memref<1x4x8x33xf32, #tpu.memory_space<vmem>>, vector<1x1x8x33xf32>,
    %1263 = vector.broadcast %1231 : vector<8x1xf32> to vector<8x33xf32>
    %1264 = arith.subf %1078, %1263 : vector<8x33xf32>
    %1265 = vector.broadcast %1243 : vector<8x1xf32> to vector<8x33xf32>
    %1266 = arith.mulf %1264, %1265 : vector<8x33xf32>
    %c5_67 = arith.constant 5 : index
    %1267 = memref.load %arg3[%c5_67] : memref<16xf32, #tpu.memory_space<smem>>
    %1268 = vector.broadcast %1267 : f32 to vector<8x33xf32>
    %1269 = arith.mulf %1266, %1268 : vector<8x33xf32>
    %c9_68 = arith.constant 9 : index
    %1270 = memref.load %arg3[%c9_68] : memref<16xf32, #tpu.memory_space<smem>>
    %1271 = vector.broadcast %1270 : f32 to vector<8x33xf32>
    %1272 = arith.addf %1269, %1271 : vector<8x33xf32>
    %cst_69 = arith.constant 0.000000e+00 : f32
    %1273 = vector.broadcast %cst_69 : f32 to vector<8x33xf32>
    %1274 = arith.cmpf oge, %1272, %1273 : vector<8x33xf32>
    %c13_70 = arith.constant 13 : index
    %1275 = memref.load %arg3[%c13_70] : memref<16xf32, #tpu.memory_space<smem>>
    %1276 = vector.broadcast %1275 : f32 to vector<8x33xf32>
    %1277 = arith.mulf %1276, %1272 : vector<8x33xf32>
    %1278 = arith.select %1274, %1272, %1277 : vector<8x33xi1>, vector<8x33xf32>
    %c0_71 = arith.constant 0 : index
    %c1_72 = arith.constant 1 : index
    %c0_73 = arith.constant 0 : index
    %c0_74 = arith.constant 0 : index
    %1279 = vector.load %arg5[%c0_71, %c1_72, %c0_73, %c0_74] : memref<1x4x8x33xf32, #tpu.memory_space<vmem>>, vector<1x1x8x33xf32>
    %1280 = vector.shape_cast %1279 : vector<1x1x8x33xf32> to vector<8x33xf32>
    %1281 = vector.shape_cast %1278 : vector<8x33xf32> to vector<1x1x8x33xf32>
    tpu.vector_store %arg5[%c0_71, %c1_72, %c0_73, %c0_74], %1281 {strides = array<i32>} : memref<1x4x8x33xf32, #tpu.memory_space<vmem>>, vector<1x1x8x33xf32>,
    %1282 = vector.broadcast %1231 : vector<8x1xf32> to vector<8x33xf32>
    %1283 = arith.subf %1126, %1282 : vector<8x33xf32>
    %1284 = vector.broadcast %1243 : vector<8x1xf32> to vector<8x33xf32>
    %1285 = arith.mulf %1283, %1284 : vector<8x33xf32>
    %c6_75 = arith.constant 6 : index
    %1286 = memref.load %arg3[%c6_75] : memref<16xf32, #tpu.memory_space<smem>>
    %1287 = vector.broadcast %1286 : f32 to vector<8x33xf32>
    %1288 = arith.mulf %1285, %1287 : vector<8x33xf32>
    %c10_76 = arith.constant 10 : index
    %1289 = memref.load %arg3[%c10_76] : memref<16xf32, #tpu.memory_space<smem>>
    %1290 = vector.broadcast %1289 : f32 to vector<8x33xf32>
    %1291 = arith.addf %1288, %1290 : vector<8x33xf32>
    %cst_77 = arith.constant 0.000000e+00 : f32
    %1292 = vector.broadcast %cst_77 : f32 to vector<8x33xf32>
    %1293 = arith.cmpf oge, %1291, %1292 : vector<8x33xf32>
    %c14_78 = arith.constant 14 : index
    %1294 = memref.load %arg3[%c14_78] : memref<16xf32, #tpu.memory_space<smem>>
    %1295 = vector.broadcast %1294 : f32 to vector<8x33xf32>
    %1296 = arith.mulf %1295, %1291 : vector<8x33xf32>
    %1297 = arith.select %1293, %1291, %1296 : vector<8x33xi1>, vector<8x33xf32>
    %c0_79 = arith.constant 0 : index
    %c2_80 = arith.constant 2 : index
    %c0_81 = arith.constant 0 : index
    %c0_82 = arith.constant 0 : index
    %1298 = vector.load %arg5[%c0_79, %c2_80, %c0_81, %c0_82] : memref<1x4x8x33xf32, #tpu.memory_space<vmem>>, vector<1x1x8x33xf32>
    %1299 = vector.shape_cast %1298 : vector<1x1x8x33xf32> to vector<8x33xf32>
    %1300 = vector.shape_cast %1297 : vector<8x33xf32> to vector<1x1x8x33xf32>
    tpu.vector_store %arg5[%c0_79, %c2_80, %c0_81, %c0_82], %1300 {strides = array<i32>} : memref<1x4x8x33xf32, #tpu.memory_space<vmem>>, vector<1x1x8x33xf32>,
    %1301 = vector.broadcast %1231 : vector<8x1xf32> to vector<8x33xf32>
    %1302 = arith.subf %1174, %1301 : vector<8x33xf32>
    %1303 = vector.broadcast %1243 : vector<8x1xf32> to vector<8x33xf32>
    %1304 = arith.mulf %1302, %1303 : vector<8x33xf32>
    %c7_83 = arith.constant 7 : index
    %1305 = memref.load %arg3[%c7_83] : memref<16xf32, #tpu.memory_space<smem>>
    %1306 = vector.broadcast %1305 : f32 to vector<8x33xf32>
    %1307 = arith.mulf %1304, %1306 : vector<8x33xf32>
    %c11_84 = arith.constant 11 : index
    %1308 = memref.load %arg3[%c11_84] : memref<16xf32, #tpu.memory_space<smem>>
    %1309 = vector.broadcast %1308 : f32 to vector<8x33xf32>
    %1310 = arith.addf %1307, %1309 : vector<8x33xf32>
    %cst_85 = arith.constant 0.000000e+00 : f32
    %1311 = vector.broadcast %cst_85 : f32 to vector<8x33xf32>
    %1312 = arith.cmpf oge, %1310, %1311 : vector<8x33xf32>
    %c15_86 = arith.constant 15 : index
    %1313 = memref.load %arg3[%c15_86] : memref<16xf32, #tpu.memory_space<smem>>
    %1314 = vector.broadcast %1313 : f32 to vector<8x33xf32>
    %1315 = arith.mulf %1314, %1310 : vector<8x33xf32>
    %1316 = arith.select %1312, %1310, %1315 : vector<8x33xi1>, vector<8x33xf32>
    %c0_87 = arith.constant 0 : index
    %c3_88 = arith.constant 3 : index
    %c0_89 = arith.constant 0 : index
    %c0_90 = arith.constant 0 : index
    %1317 = vector.load %arg5[%c0_87, %c3_88, %c0_89, %c0_90] : memref<1x4x8x33xf32, #tpu.memory_space<vmem>>, vector<1x1x8x33xf32>
    %1318 = vector.shape_cast %1317 : vector<1x1x8x33xf32> to vector<8x33xf32>
    %1319 = vector.shape_cast %1316 : vector<8x33xf32> to vector<1x1x8x33xf32>
    tpu.vector_store %arg5[%c0_87, %c3_88, %c0_89, %c0_90], %1319 {strides = array<i32>} : memref<1x4x8x33xf32, #tpu.memory_space<vmem>>, vector<1x1x8x33xf32>,
    return
  }
  func.func @transform_0(%arg0: i32, %arg1: i32) -> i32 {
    %c0_i32 = arith.constant 0 : i32
    %c0_i32_0 = arith.constant 0 : i32
    return %c0_i32 : i32
  }
  func.func @transform_1(%arg0: i32, %arg1: i32) -> i32 {
    %c0_i32 = arith.constant 0 : i32
    %c0_i32_0 = arith.constant 0 : i32
    return %c0_i32 : i32
  }
  func.func @transform_2(%arg0: i32, %arg1: i32) -> (i32, i32, i32, i32, i32) {
    %c0_i32 = arith.constant 0 : i32
    %c0_i32_0 = arith.constant 0 : i32
    %c0_i32_1 = arith.constant 0 : i32
    %c0_i32_2 = arith.constant 0 : i32
    return %arg0, %arg1, %c0_i32, %c0_i32_0, %c0_i32_1 : i32, i32, i32, i32, i32
  }
  func.func @transform_3(%arg0: i32, %arg1: i32) -> (i32, i32, i32, i32) {
    %c0_i32 = arith.constant 0 : i32
    %c0_i32_0 = arith.constant 0 : i32
    %c0_i32_1 = arith.constant 0 : i32
    return %arg0, %c0_i32, %arg1, %c0_i32_0 : i32, i32, i32, i32
  }
}

</mosaic_0001>

<llo_original>
// kernel: tpu_custom_call.1
$region0: #{tpu_custom_call.1}
  #allocation0 [shape = 'u32[]', space=smem, size = 0x4, offset = 0x4, fixed_abs, tag = 'smem constant byte address 0x4 - core index']
  #allocation1 [shape = 'u32[72,128]{1,0:T(1,128)}', space=vmem, size = 0x9000, scoped, tag = 'internal scratch']
  #allocation2 [shape = 'f32[1,1]{1,0:T(1,128)}', space=vmem, size = 0x200, scoped, tag = 'scratch operand']
  #allocation3 [shape = 'f32[1,1]{1,0:T(1,128)}', space=vmem, size = 0x200, scoped, tag = 'scratch operand']
  %s0 = inlined_call_operand.vmem [shape: f32[192], index: 0, kind: input, shape index: {}]
  %s1 = inlined_call_operand.vmem [shape: f32[16], index: 1, kind: input, shape index: {}]
  %s2 = inlined_call_operand.vmem [shape: f32[2,3,8,9,35], index: 2, kind: input, shape index: {}]
  %s3 = inlined_call_operand.hbm [shape: f32[2,4,24,33], index: 3, kind: output, shape index: {}]
  %s4 = sld [smem:[#allocation0]]
  $region57: #{tpu_custom_call.1} parent=0
    _
  %s6 = ssub.s32 1, %s4
  %s7 = scalar_select 0, %s6, %s4
  $region1: #{tpu_custom_call.1} parent=0
    #allocation4 [shape = 'u8[1024]{0}', space=smem, size = 0x400, scoped, tag = 'input window, operand 0, single buffered']
    #allocation5 [shape = 's32[2]{0}', space=sflag, size = 0x8, scoped, tag = 'scoped memory for tpu_custom_call.1']
    #allocation6 [shape = 's32[2]{0}', space=sflag, size = 0x8, scoped, tag = 'scoped memory for tpu_custom_call.1']
    #allocation7 [shape = 'u8[512]{0}', space=smem, size = 0x200, scoped, tag = 'input window, operand 1, single buffered']
    #allocation8 [shape = 's32[1]{0}', space=sflag, size = 0x4, scoped, tag = 'scoped memory for tpu_custom_call.1']
    #allocation9 [shape = 'u8[32768]{0}', space=vmem, size = 0x8000, scoped, tag = 'output window, operand 0']
    %8 = vsyncpa [#allocation6], 0
    %9 = vsyncpa [#allocation8], 0
    %10 = vsyncpa [#allocation5], 0
    %s11 = scalar_lea.sflag [#allocation5], 1
    %12 = vsyncpa %s11, 0
    loop: start=0, step=1, limit=8
    $region2: #{tpu_custom_call.1} parent=1 // loop_pre_header
      _
    $region3: #{tpu_custom_call.1} parent=1 // loop_header
      %s14 = sphi 0, %s18
      %p15 = scmp.ge.s32.totalorder %s14, 8
      %s21 = sphi 0, %s33
      %s22 = sphi 0, %s29
      %s23 = sphi 0, %s21
      %s24 = sphi 0, %s22
      %s25 = sphi 0, %s23
      %s26 = sphi 0, %s24
      %s34 = sphi 0, %s34
      %s36 = sphi 0, %s34
      %s37 = sphi 0, %s36
      %s51 = sphi 0, %s37
      %s55 = sphi 0, %s55
      %s57 = sphi 0, %s55
      %s58 = sphi 0, %s57
      %s72 = sphi 0, %s58
      %s80 = sphi 0, %s82
      %s83 = sphi 0, %s80
      %s84 = sphi 0, %s83
      %s100 = sphi 0, %s84
      %s108 = sphi 0, %s110
      %s111 = sphi 0, %s108
      %s112 = sphi 0, %s111
      %s128 = sphi 0, %s112
    $region4: #{tpu_custom_call.1} parent=1 // loop_header_branch
      %17 = sbr.rel (%p15) target = $region8
    $region5: #{tpu_custom_call.1} parent=1 // loop_body
      %s19 = ssub.s32 %s14, 1
      %s20 = ssub.s32 %s14, 2
      %s27 = sadd.s32 1, %s22
      %p28 = scmp.ge.s32.totalorder %s27, 3
      %s29 = scalar_select %p28, 0, %s27
      %s30 = sadd.s32 1, %s21
      %s31 = scalar_select %p28, %s30, %s21
      %p32 = scmp.ge.s32.totalorder %s31, 2
      %s33 = scalar_select %p32, 0, %s31
      %s35 = sadd.s32 %s34, 1
      %p38 = scmp.eq.s32.totalorder %s14, 5
      %p39 = scmp.ne.s32.totalorder %s34, %s36
      %p40 = scmp.eq.s32.totalorder %s14, 0
      %p41 = por %p39, %p40
      %p42 = scmp.ne.s32.totalorder %s34, %s36
      %p43 = scmp.eq.s32.totalorder %s19, 5
      %p44 = por %p42, %p43
      %p45 = scmp.ne.s32.totalorder %s36, %s37
      %p46 = scmp.eq.s32.totalorder %s19, 0
      %p47 = por %p45, %p46
      %p48 = scmp.ne.s32.totalorder %s36, %s37
      %p49 = scmp.eq.s32.totalorder %s20, 5
      %p50 = por %p48, %p49
      %p52 = scmp.ne.s32.totalorder %s37, %s51
      %p53 = scmp.eq.s32.totalorder %s20, 0
      %p54 = por %p52, %p53
      %s56 = sadd.s32 %s55, 1
      %p59 = scmp.eq.s32.totalorder %s14, 5
      %p60 = scmp.ne.s32.totalorder %s55, %s57
      %p61 = scmp.eq.s32.totalorder %s14, 0
      %p62 = por %p60, %p61
      %p63 = scmp.ne.s32.totalorder %s55, %s57
      %p64 = scmp.eq.s32.totalorder %s19, 5
      %p65 = por %p63, %p64
      %p66 = scmp.ne.s32.totalorder %s57, %s58
      %p67 = scmp.eq.s32.totalorder %s19, 0
      %p68 = por %p66, %p67
      %p69 = scmp.ne.s32.totalorder %s57, %s58
      %p70 = scmp.eq.s32.totalorder %s20, 5
      %p71 = por %p69, %p70
      %p73 = scmp.ne.s32.totalorder %s58, %s72
      %p74 = scmp.eq.s32.totalorder %s20, 0
      %p75 = por %p73, %p74
      %s76 = ssub.s32 %s21, %s33
      %s77 = ssub.s32 %s22, %s29
      %s78 = sor.u32 %s76, %s77
      %p79 = scmp.eq.s32.totalorder %s78, 0
      %s81 = sadd.s32 %s80, 1
      %s82 = scalar_select %p79, %s80, %s81
      %p85 = pneg %p79
      %p86 = scmp.eq.s32.totalorder %s14, 5
      %p87 = por %p85, %p86
      %p88 = scmp.ne.s32.totalorder %s80, %s83
      %p89 = scmp.eq.s32.totalorder %s14, 0
      %p90 = por %p88, %p89
      %p91 = scmp.ne.s32.totalorder %s80, %s83
      %p92 = scmp.eq.s32.totalorder %s19, 5
      %p93 = por %p91, %p92
      %p94 = scmp.ne.s32.totalorder %s83, %s84
      %p95 = scmp.eq.s32.totalorder %s19, 0
      %p96 = por %p94, %p95
      %p97 = scmp.ne.s32.totalorder %s83, %s84
      %p98 = scmp.eq.s32.totalorder %s20, 5
      %p99 = por %p97, %p98
      %p101 = scmp.ne.s32.totalorder %s84, %s100
      %p102 = scmp.eq.s32.totalorder %s20, 0
      %p103 = por %p101, %p102
      %s104 = ssub.s32 %s21, %s33
      %s105 = ssub.s32 %s22, %s29
      %s106 = sor.u32 %s104, %s105
      %p107 = scmp.eq.s32.totalorder %s106, 0
      %s109 = sadd.s32 %s108, 1
      %s110 = scalar_select %p107, %s108, %s109
      %p113 = pneg %p107
      %p114 = scmp.eq.s32.totalorder %s14, 5
      %p115 = por %p113, %p114
      %p116 = scmp.ne.s32.totalorder %s108, %s111
      %p117 = scmp.eq.s32.totalorder %s14, 0
      %p118 = por %p116, %p117
      %p119 = scmp.ne.s32.totalorder %s108, %s111
      %p120 = scmp.eq.s32.totalorder %s19, 5
      %p121 = por %p119, %p120
      %p122 = scmp.ne.s32.totalorder %s111, %s112
      %p123 = scmp.eq.s32.totalorder %s19, 0
      %p124 = por %p122, %p123
      %p125 = scmp.ne.s32.totalorder %s111, %s112
      %p126 = scmp.eq.s32.totalorder %s20, 5
      %p127 = por %p125, %p126
      %p129 = scmp.ne.s32.totalorder %s112, %s128
      %p130 = scmp.eq.s32.totalorder %s20, 0
      %p131 = por %p129, %p130
      %p132 = scmp.le.s32.totalorder 1, %s14
      %p133 = scmp.lt.s32.totalorder %s14, 7
      %p134 = pnand %p132, %p133
      %p135 = pneg %p134
      // Predicated region
      $region9: #{tpu_custom_call.1} parent=5 // pred_check
        _
      $region10: #{tpu_custom_call.1} parent=5 // pred_check_branch
        %137 = sbr.rel (%p134) target = $region12
      $region11: #{tpu_custom_call.1} parent=5 // pred_region
        %s138 = ssub.s32 %s14, 1
        // Predicated region
        $region13: #{tpu_custom_call.1} parent=11 // pred_check
          %p139 = pneg %p47
        $region14: #{tpu_custom_call.1} parent=11 // pred_check_branch
          %141 = sbr.rel (%p139) target = $region16
        $region15: #{tpu_custom_call.1} parent=11 // pred_region
          %143 = vsyncadd [#allocation6], 0
          %s145 = sshll.u32 %s0, 4
          %s146 = int_to_ptr.vmem [resolvable:$true] %s145
          %148 = dma.vmem_to_smem %s146, 32, [#allocation4], [#allocation6]
        $region16: #{tpu_custom_call.1} parent=11 // pred_fallthru
          _
        // Predicated region
        $region17: #{tpu_custom_call.1} parent=11 // pred_check
          %p149 = pneg %p68
        $region18: #{tpu_custom_call.1} parent=11 // pred_check_branch
          %151 = sbr.rel (%p149) target = $region20
        $region19: #{tpu_custom_call.1} parent=11 // pred_region
          %153 = vsyncadd [#allocation8], 0
          %s155 = sshll.u32 %s1, 4
          %s156 = int_to_ptr.vmem [resolvable:$true] %s155
          %158 = dma.vmem_to_smem %s156, 16, [#allocation7], [#allocation8]
        $region20: #{tpu_custom_call.1} parent=11 // pred_fallthru
          _
      $region12: #{tpu_custom_call.1} parent=5 // pred_fallthru
        _
      %p159 = scmp.lt.s32.totalorder %s14, 6
      // Predicated region
      $region21: #{tpu_custom_call.1} parent=5 // pred_check
        %p160 = pneg %p159
      $region22: #{tpu_custom_call.1} parent=5 // pred_check_branch
        %162 = sbr.rel (%p160) target = $region24
      $region23: #{tpu_custom_call.1} parent=5 // pred_region
        // Predicated region
        $region25: #{tpu_custom_call.1} parent=23 // pred_check
          %p163 = pneg %p90
        $region26: #{tpu_custom_call.1} parent=23 // pred_check_branch
          %165 = sbr.rel (%p163) target = $region28
        $region27: #{tpu_custom_call.1} parent=23 // pred_region
          %p166 = scmp.lt.s32.totalorder %s21, 1
          %s167 = scalar_select %p166, %s21, 1
          %p168 = scmp.lt.s32.totalorder %s22, 2
          %s169 = scalar_select %p168, %s22, 2
          %s170 = smul.addr %s169, 16
          %s171 = smul.addr %s167, 48
          %s172 = sadd.s32 %s170, %s171
          %s173 = smul.addr %s172, 8
          %s174 = scalar_lea.vmem %s2, %s173
        $region28: #{tpu_custom_call.1} parent=23 // pred_fallthru
          _
      $region24: #{tpu_custom_call.1} parent=5 // pred_fallthru
        _
      %p175 = scmp.le.s32.totalorder 1, %s14
      %p176 = scmp.lt.s32.totalorder %s14, 7
      %p177 = pnand %p175, %p176
      %p178 = pneg %p177
      // Predicated region
      $region29: #{tpu_custom_call.1} parent=5 // pred_check
        _
      $region30: #{tpu_custom_call.1} parent=5 // pred_check_branch
        %180 = sbr.rel (%p177) target = $region32
      $region31: #{tpu_custom_call.1} parent=5 // pred_region
        %s181 = ssub.s32 %s14, 1
        // Predicated region
        $region33: #{tpu_custom_call.1} parent=31 // pred_check
          %p182 = pneg %p47
        $region34: #{tpu_custom_call.1} parent=31 // pred_check_branch
          %184 = sbr.rel (%p182) target = $region36
        $region35: #{tpu_custom_call.1} parent=31 // pred_region
          %186 = dma.done [#allocation6], 32
        $region36: #{tpu_custom_call.1} parent=31 // pred_fallthru
          _
        // Predicated region
        $region37: #{tpu_custom_call.1} parent=31 // pred_check
          %p187 = pneg %p68
        $region38: #{tpu_custom_call.1} parent=31 // pred_check_branch
          %189 = sbr.rel (%p187) target = $region40
        $region39: #{tpu_custom_call.1} parent=31 // pred_region
          %191 = dma.done [#allocation8], 16
        $region40: #{tpu_custom_call.1} parent=31 // pred_fallthru
          _
        %192 = sfence
        %p193 = pneg %p47
        %p194 = pneg %p44
        %p195 = pneg %p68
        %p196 = pneg %p65
        %p197 = scmp.lt.s32.totalorder %s23, 1
        %s198 = scalar_select %p197, %s23, 1
        %p199 = scmp.lt.s32.totalorder %s24, 2
        %s200 = scalar_select %p199, %s24, 2
        %s201 = smul.addr %s200, 16
        %s202 = smul.addr %s198, 48
        %s203 = sadd.s32 %s201, %s202
        %s204 = smul.addr %s203, 8
        %s205 = scalar_lea.vmem %s2, %s204
        %p206 = pneg %p96
        %p207 = pneg %p93
        %p208 = pneg %p124
        %p209 = pneg %p121
        %s210 = sand.u32 %s111, 1
        %s211 = scalar_lea.sflag [#allocation5], %s210
        %s212 = sand.u32 %s111, 1
        %s213 = smul.addr %s212, 32
        %s214 = scalar_lea.vmem [#allocation9], %s213
        %p215 = scmp.lt.s32.totalorder %s23, 1
        %s216 = scalar_select %p215, %s23, 1
        %p217 = scmp.lt.s32.totalorder %s24, 2
        %s218 = scalar_select %p217, %s24, 2
        %s219 = smul.addr %s218, 16
        %s220 = smul.addr %s216, 48
        %s221 = sadd.s32 %s219, %s220
        %s222 = smul.addr %s221, 8
        %s223 = scalar_lea.vmem %s2, %s222
        %p224 = scmp.eq.s32.totalorder %s24, 0
        // Predicated region
        $region41: #{tpu_custom_call.1} parent=31 // pred_check
          %p225 = pneg %p224
        $region42: #{tpu_custom_call.1} parent=31 // pred_check_branch
          %227 = sbr.rel (%p225) target = $region44
        $region43: #{tpu_custom_call.1} parent=31 // pred_region
          %vm228 = vcmask 0
          %229 = vst.msk [vmem:[#allocation2] sm:$0x1] %vm228, 0.0
          %230 = vst.msk [vmem:[#allocation3] sm:$0x1] %vm228, 0.0
        $region44: #{tpu_custom_call.1} parent=31 // pred_fallthru
          _
        %s231 = sld [smem:[#allocation7]]
        %v232 = vstv %s231
        %s233 = sld [smem:[#allocation7 + $0x1]]
        %v234 = vstv %s233
        %s235 = sld [smem:[#allocation7 + $0x2]]
        %v236 = vstv %s235
        %s237 = sld [smem:[#allocation7 + $0x3]]
        %v238 = vstv %s237
        %v239 = vld [vmem:[%s223] sm:$0xff]
        %v240 = vld [vmem:[%s223 + $0x10] sm:$0xff]
        %v241 = vld [vmem:[%s223 + $0x20] sm:$0xff]
        %v242 = vld [vmem:[%s223 + $0x30] sm:$0xff]
        %v243 = vld [vmem:[%s223 + $0x40] sm:$0xff]
        %v244 = vld [vmem:[%s223 + $0x50] sm:$0xff]
        %v245 = vld [vmem:[%s223 + $0x60] sm:$0xff]
        %v246 = vld [vmem:[%s223 + $0x70] sm:$0xff]
        %s247 = sld [smem:[#allocation4]]
        %v248 = vstv %s247
        %v249 = vmul.f32 %v248, %v239
        %v250 = vadd.f32 %v232, %v249
        %s251 = sld [smem:[#allocation4 + $0x1]]
        %v252 = vstv %s251
        %v253 = vmul.f32 %v252, %v240
        %v254 = vadd.f32 %v250, %v253
        %s255 = sld [smem:[#allocation4 + $0x2]]
        %v256 = vstv %s255
        %v257 = vmul.f32 %v256, %v241
        %v258 = vadd.f32 %v254, %v257
        %s259 = sld [smem:[#allocation4 + $0x3]]
        %v260 = vstv %s259
        %v261 = vmul.f32 %v260, %v242
        %v262 = vadd.f32 %v258, %v261
        %s263 = sld [smem:[#allocation4 + $0x4]]
        %v264 = vstv %s263
        %v265 = vmul.f32 %v264, %v243
        %v266 = vadd.f32 %v262, %v265
        %s267 = sld [smem:[#allocation4 + $0x5]]
        %v268 = vstv %s267
        %v269 = vmul.f32 %v268, %v244
        %v270 = vadd.f32 %v266, %v269
        %s271 = sld [smem:[#allocation4 + $0x6]]
        %v272 = vstv %s271
        %v273 = vmul.f32 %v272, %v245
        %v274 = vadd.f32 %v270, %v273
        %s275 = sld [smem:[#allocation4 + $0x7]]
        %v276 = vstv %s275
        %v277 = vmul.f32 %v276, %v246
        %v278 = vadd.f32 %v274, %v277
        %s279 = sld [smem:[#allocation4 + $0x8]]
        %v280 = vstv %s279
        %v281 = vmul.f32 %v280, %v239
        %v282 = vadd.f32 %v234, %v281
        %s283 = sld [smem:[#allocation4 + $0x9]]
        %v284 = vstv %s283
        %v285 = vmul.f32 %v284, %v240
        %v286 = vadd.f32 %v282, %v285
        %s287 = sld [smem:[#allocation4 + $0xa]]
        %v288 = vstv %s287
        %v289 = vmul.f32 %v288, %v241
        %v290 = vadd.f32 %v286, %v289
        %s291 = sld [smem:[#allocation4 + $0xb]]
        %v292 = vstv %s291
        %v293 = vmul.f32 %v292, %v242
        %v294 = vadd.f32 %v290, %v293
        %s295 = sld [smem:[#allocation4 + $0xc]]
        %v296 = vstv %s295
        %v297 = vmul.f32 %v296, %v243
        %v298 = vadd.f32 %v294, %v297
        %s299 = sld [smem:[#allocation4 + $0xd]]
        %v300 = vstv %s299
        %v301 = vmul.f32 %v300, %v244
        %v302 = vadd.f32 %v298, %v301
        %s303 = sld [smem:[#allocation4 + $0xe]]
        %v304 = vstv %s303
        %v305 = vmul.f32 %v304, %v245
        %v306 = vadd.f32 %v302, %v305
        %s307 = sld [smem:[#allocation4 + $0xf]]
        %v308 = vstv %s307
        %v309 = vmul.f32 %v308, %v246
        %v310 = vadd.f32 %v306, %v309
        %s311 = sld [smem:[#allocation4 + $0x10]]
        %v312 = vstv %s311
        %v313 = vmul.f32 %v312, %v239
        %v314 = vadd.f32 %v236, %v313
        %s315 = sld [smem:[#allocation4 + $0x11]]
        %v316 = vstv %s315
        %v317 = vmul.f32 %v316, %v240
        %v318 = vadd.f32 %v314, %v317
        %s319 = sld [smem:[#allocation4 + $0x12]]
        %v320 = vstv %s319
        %v321 = vmul.f32 %v320, %v241
        %v322 = vadd.f32 %v318, %v321
        %s323 = sld [smem:[#allocation4 + $0x13]]
        %v324 = vstv %s323
        %v325 = vmul.f32 %v324, %v242
        %v326 = vadd.f32 %v322, %v325
        %s327 = sld [smem:[#allocation4 + $0x14]]
        %v328 = vstv %s327
        %v329 = vmul.f32 %v328, %v243
        %v330 = vadd.f32 %v326, %v329
        %s331 = sld [smem:[#allocation4 + $0x15]]
        %v332 = vstv %s331
        %v333 = vmul.f32 %v332, %v244
        %v334 = vadd.f32 %v330, %v333
        %s335 = sld [smem:[#allocation4 + $0x16]]
        %v336 = vstv %s335
        %v337 = vmul.f32 %v336, %v245
        %v338 = vadd.f32 %v334, %v337
        %s339 = sld [smem:[#allocation4 + $0x17]]
        %v340 = vstv %s339
        %v341 = vmul.f32 %v340, %v246
        %v342 = vadd.f32 %v338, %v341
        %s343 = sld [smem:[#allocation4 + $0x18]]
        %v344 = vstv %s343
        %v345 = vmul.f32 %v344, %v239
        %v346 = vadd.f32 %v238, %v345
        %s347 = sld [smem:[#allocation4 + $0x19]]
        %v348 = vstv %s347
        %v349 = vmul.f32 %v348, %v240
        %v350 = vadd.f32 %v346, %v349
        %s351 = sld [smem:[#allocation4 + $0x1a]]
        %v352 = vstv %s351
        %v353 = vmul.f32 %v352, %v241
        %v354 = vadd.f32 %v350, %v353
        %s355 = sld [smem:[#allocation4 + $0x1b]]
        %v356 = vstv %s355
        %v357 = vmul.f32 %v356, %v242
        %v358 = vadd.f32 %v354, %v357
        %s359 = sld [smem:[#allocation4 + $0x1c]]
        %v360 = vstv %s359
        %v361 = vmul.f32 %v360, %v243
        %v362 = vadd.f32 %v358, %v361
        %s363 = sld [smem:[#allocation4 + $0x1d]]
        %v364 = vstv %s363
        %v365 = vmul.f32 %v364, %v244
        %v366 = vadd.f32 %v362, %v365
        %s367 = sld [smem:[#allocation4 + $0x1e]]
        %v368 = vstv %s367
        %v369 = vmul.f32 %v368, %v245
        %v370 = vadd.f32 %v366, %v369
        %s371 = sld [smem:[#allocation4 + $0x1f]]
        %v372 = vstv %s371
        %v373 = vmul.f32 %v372, %v246
        %v374 = vadd.f32 %v370, %v373
        %s375 = sld [smem:[#allocation4 + $0x20]]
        %v376 = vstv %s375
        %v377 = vmul.f32 %v376, %v239
        %379 = vrot.lane.b32.xlu0 %v377, 127
        %v380 = vpop.permute.xlu0 %379
        %v382 = vadd.f32 %v278, %v380
        %s383 = sld [smem:[#allocation4 + $0x21]]
        %v384 = vstv %s383
        %v385 = vmul.f32 %v384, %v240
        %387 = vrot.lane.b32.xlu0 %v385, 127
        %v388 = vpop.permute.xlu0 %387
        %v390 = vadd.f32 %v382, %v388
        %s391 = sld [smem:[#allocation4 + $0x22]]
        %v392 = vstv %s391
        %v393 = vmul.f32 %v392, %v241
        %395 = vrot.lane.b32.xlu0 %v393, 127
        %v396 = vpop.permute.xlu0 %395
        %v398 = vadd.f32 %v390, %v396
        %s399 = sld [smem:[#allocation4 + $0x23]]
        %v400 = vstv %s399
        %v401 = vmul.f32 %v400, %v242
        %403 = vrot.lane.b32.xlu0 %v401, 127
        %v404 = vpop.permute.xlu0 %403
        %v406 = vadd.f32 %v398, %v404
        %s407 = sld [smem:[#allocation4 + $0x24]]
        %v408 = vstv %s407
        %v409 = vmul.f32 %v408, %v243
        %411 = vrot.lane.b32.xlu0 %v409, 127
        %v412 = vpop.permute.xlu0 %411
        %v414 = vadd.f32 %v406, %v412
        %s415 = sld [smem:[#allocation4 + $0x25]]
        %v416 = vstv %s415
        %v417 = vmul.f32 %v416, %v244
        %419 = vrot.lane.b32.xlu0 %v417, 127
        %v420 = vpop.permute.xlu0 %419
        %v422 = vadd.f32 %v414, %v420
        %s423 = sld [smem:[#allocation4 + $0x26]]
        %v424 = vstv %s423
        %v425 = vmul.f32 %v424, %v245
        %427 = vrot.lane.b32.xlu0 %v425, 127
        %v428 = vpop.permute.xlu0 %427
        %v430 = vadd.f32 %v422, %v428
        %s431 = sld [smem:[#allocation4 + $0x27]]
        %v432 = vstv %s431
        %v433 = vmul.f32 %v432, %v246
        %435 = vrot.lane.b32.xlu0 %v433, 127
        %v436 = vpop.permute.xlu0 %435
        %v438 = vadd.f32 %v430, %v436
        %s439 = sld [smem:[#allocation4 + $0x28]]
        %v440 = vstv %s439
        %v441 = vmul.f32 %v440, %v239
        %443 = vrot.lane.b32.xlu0 %v441, 127
        %v444 = vpop.permute.xlu0 %443
        %v446 = vadd.f32 %v310, %v444
        %s447 = sld [smem:[#allocation4 + $0x29]]
        %v448 = vstv %s447
        %v449 = vmul.f32 %v448, %v240
        %451 = vrot.lane.b32.xlu0 %v449, 127
        %v452 = vpop.permute.xlu0 %451
        %v454 = vadd.f32 %v446, %v452
        %s455 = sld [smem:[#allocation4 + $0x2a]]
        %v456 = vstv %s455
        %v457 = vmul.f32 %v456, %v241
        %459 = vrot.lane.b32.xlu0 %v457, 127
        %v460 = vpop.permute.xlu0 %459
        %v462 = vadd.f32 %v454, %v460
        %s463 = sld [smem:[#allocation4 + $0x2b]]
        %v464 = vstv %s463
        %v465 = vmul.f32 %v464, %v242
        %467 = vrot.lane.b32.xlu0 %v465, 127
        %v468 = vpop.permute.xlu0 %467
        %v470 = vadd.f32 %v462, %v468
        %s471 = sld [smem:[#allocation4 + $0x2c]]
        %v472 = vstv %s471
        %v473 = vmul.f32 %v472, %v243
        %475 = vrot.lane.b32.xlu0 %v473, 127
        %v476 = vpop.permute.xlu0 %475
        %v478 = vadd.f32 %v470, %v476
        %s479 = sld [smem:[#allocation4 + $0x2d]]
        %v480 = vstv %s479
        %v481 = vmul.f32 %v480, %v244
        %483 = vrot.lane.b32.xlu0 %v481, 127
        %v484 = vpop.permute.xlu0 %483
        %v486 = vadd.f32 %v478, %v484
        %s487 = sld [smem:[#allocation4 + $0x2e]]
        %v488 = vstv %s487
        %v489 = vmul.f32 %v488, %v245
        %491 = vrot.lane.b32.xlu0 %v489, 127
        %v492 = vpop.permute.xlu0 %491
        %v494 = vadd.f32 %v486, %v492
        %s495 = sld [smem:[#allocation4 + $0x2f]]
        %v496 = vstv %s495
        %v497 = vmul.f32 %v496, %v246
        %499 = vrot.lane.b32.xlu0 %v497, 127
        %v500 = vpop.permute.xlu0 %499
        %v502 = vadd.f32 %v494, %v500
        %s503 = sld [smem:[#allocation4 + $0x30]]
        %v504 = vstv %s503
        %v505 = vmul.f32 %v504, %v239
        %507 = vrot.lane.b32.xlu0 %v505, 127
        %v508 = vpop.permute.xlu0 %507
        %v510 = vadd.f32 %v342, %v508
        %s511 = sld [smem:[#allocation4 + $0x31]]
        %v512 = vstv %s511
        %v513 = vmul.f32 %v512, %v240
        %515 = vrot.lane.b32.xlu0 %v513, 127
        %v516 = vpop.permute.xlu0 %515
        %v518 = vadd.f32 %v510, %v516
        %s519 = sld [smem:[#allocation4 + $0x32]]
        %v520 = vstv %s519
        %v521 = vmul.f32 %v520, %v241
        %523 = vrot.lane.b32.xlu0 %v521, 127
        %v524 = vpop.permute.xlu0 %523
        %v526 = vadd.f32 %v518, %v524
        %s527 = sld [smem:[#allocation4 + $0x33]]
        %v528 = vstv %s527
        %v529 = vmul.f32 %v528, %v242
        %531 = vrot.lane.b32.xlu0 %v529, 127
        %v532 = vpop.permute.xlu0 %531
        %v534 = vadd.f32 %v526, %v532
        %s535 = sld [smem:[#allocation4 + $0x34]]
        %v536 = vstv %s535
        %v537 = vmul.f32 %v536, %v243
        %539 = vrot.lane.b32.xlu0 %v537, 127
        %v540 = vpop.permute.xlu0 %539
        %v542 = vadd.f32 %v534, %v540
        %s543 = sld [smem:[#allocation4 + $0x35]]
        %v544 = vstv %s543
        %v545 = vmul.f32 %v544, %v244
        %547 = vrot.lane.b32.xlu0 %v545, 127
        %v548 = vpop.permute.xlu0 %547
        %v550 = vadd.f32 %v542, %v548
        %s551 = sld [smem:[#allocation4 + $0x36]]
        %v552 = vstv %s551
        %v553 = vmul.f32 %v552, %v245
        %555 = vrot.lane.b32.xlu0 %v553, 127
        %v556 = vpop.permute.xlu0 %555
        %v558 = vadd.f32 %v550, %v556
        %s559 = sld [smem:[#allocation4 + $0x37]]
        %v560 = vstv %s559
        %v561 = vmul.f32 %v560, %v246
        %563 = vrot.lane.b32.xlu0 %v561, 127
        %v564 = vpop.permute.xlu0 %563
        %v566 = vadd.f32 %v558, %v564
        %s567 = sld [smem:[#allocation4 + $0x38]]
        %v568 = vstv %s567
        %v569 = vmul.f32 %v568, %v239
        %571 = vrot.lane.b32.xlu0 %v569, 127
        %v572 = vpop.permute.xlu0 %571
        %v574 = vadd.f32 %v374, %v572
        %s575 = sld [smem:[#allocation4 + $0x39]]
        %v576 = vstv %s575
        %v577 = vmul.f32 %v576, %v240
        %579 = vrot.lane.b32.xlu0 %v577, 127
        %v580 = vpop.permute.xlu0 %579
        %v582 = vadd.f32 %v574, %v580
        %s583 = sld [smem:[#allocation4 + $0x3a]]
        %v584 = vstv %s583
        %v585 = vmul.f32 %v584, %v241
        %587 = vrot.lane.b32.xlu0 %v585, 127
        %v588 = vpop.permute.xlu0 %587
        %v590 = vadd.f32 %v582, %v588
        %s591 = sld [smem:[#allocation4 + $0x3b]]
        %v592 = vstv %s591
        %v593 = vmul.f32 %v592, %v242
        %595 = vrot.lane.b32.xlu0 %v593, 127
        %v596 = vpop.permute.xlu0 %595
        %v598 = vadd.f32 %v590, %v596
        %s599 = sld [smem:[#allocation4 + $0x3c]]
        %v600 = vstv %s599
        %v601 = vmul.f32 %v600, %v243
        %603 = vrot.lane.b32.xlu0 %v601, 127
        %v604 = vpop.permute.xlu0 %603
        %v606 = vadd.f32 %v598, %v604
        %s607 = sld [smem:[#allocation4 + $0x3d]]
        %v608 = vstv %s607
        %v609 = vmul.f32 %v608, %v244
        %611 = vrot.lane.b32.xlu0 %v609, 127
        %v612 = vpop.permute.xlu0 %611
        %v614 = vadd.f32 %v606, %v612
        %s615 = sld [smem:[#allocation4 + $0x3e]]
        %v616 = vstv %s615
        %v617 = vmul.f32 %v616, %v245
        %619 = vrot.lane.b32.xlu0 %v617, 127
        %v620 = vpop.permute.xlu0 %619
        %v622 = vadd.f32 %v614, %v620
        %s623 = sld [smem:[#allocation4 + $0x3f]]
        %v624 = vstv %s623
        %v625 = vmul.f32 %v624, %v246
        %627 = vrot.lane.b32.xlu0 %v625, 127
        %v628 = vpop.permute.xlu0 %627
        %v630 = vadd.f32 %v622, %v628
        %s631 = sld [smem:[#allocation4 + $0x40]]
        %v632 = vstv %s631
        %v633 = vmul.f32 %v632, %v239
        %635 = vrot.lane.b32.xlu0 %v633, 126
        %v636 = vpop.permute.xlu0 %635
        %v638 = vadd.f32 %v438, %v636
        %s639 = sld [smem:[#allocation4 + $0x41]]
        %v640 = vstv %s639
        %v641 = vmul.f32 %v640, %v240
        %643 = vrot.lane.b32.xlu0 %v641, 126
        %v644 = vpop.permute.xlu0 %643
        %v646 = vadd.f32 %v638, %v644
        %s647 = sld [smem:[#allocation4 + $0x42]]
        %v648 = vstv %s647
        %v649 = vmul.f32 %v648, %v241
        %651 = vrot.lane.b32.xlu0 %v649, 126
        %v652 = vpop.permute.xlu0 %651
        %v654 = vadd.f32 %v646, %v652
        %s655 = sld [smem:[#allocation4 + $0x43]]
        %v656 = vstv %s655
        %v657 = vmul.f32 %v656, %v242
        %659 = vrot.lane.b32.xlu0 %v657, 126
        %v660 = vpop.permute.xlu0 %659
        %v662 = vadd.f32 %v654, %v660
        %s663 = sld [smem:[#allocation4 + $0x44]]
        %v664 = vstv %s663
        %v665 = vmul.f32 %v664, %v243
        %667 = vrot.lane.b32.xlu0 %v665, 126
        %v668 = vpop.permute.xlu0 %667
        %v670 = vadd.f32 %v662, %v668
        %s671 = sld [smem:[#allocation4 + $0x45]]
        %v672 = vstv %s671
        %v673 = vmul.f32 %v672, %v244
        %675 = vrot.lane.b32.xlu0 %v673, 126
        %v676 = vpop.permute.xlu0 %675
        %v678 = vadd.f32 %v670, %v676
        %s679 = sld [smem:[#allocation4 + $0x46]]
        %v680 = vstv %s679
        %v681 = vmul.f32 %v680, %v245
        %683 = vrot.lane.b32.xlu0 %v681, 126
        %v684 = vpop.permute.xlu0 %683
        %v686 = vadd.f32 %v678, %v684
        %s687 = sld [smem:[#allocation4 + $0x47]]
        %v688 = vstv %s687
        %v689 = vmul.f32 %v688, %v246
        %691 = vrot.lane.b32.xlu0 %v689, 126
        %v692 = vpop.permute.xlu0 %691
        %v694 = vadd.f32 %v686, %v692
        %s695 = sld [smem:[#allocation4 + $0x48]]
        %v696 = vstv %s695
        %v697 = vmul.f32 %v696, %v239
        %699 = vrot.lane.b32.xlu0 %v697, 126
        %v700 = vpop.permute.xlu0 %699
        %v702 = vadd.f32 %v502, %v700
        %s703 = sld [smem:[#allocation4 + $0x49]]
        %v704 = vstv %s703
        %v705 = vmul.f32 %v704, %v240
        %707 = vrot.lane.b32.xlu0 %v705, 126
        %v708 = vpop.permute.xlu0 %707
        %v710 = vadd.f32 %v702, %v708
        %s711 = sld [smem:[#allocation4 + $0x4a]]
        %v712 = vstv %s711
        %v713 = vmul.f32 %v712, %v241
        %715 = vrot.lane.b32.xlu0 %v713, 126
        %v716 = vpop.permute.xlu0 %715
        %v718 = vadd.f32 %v710, %v716
        %s719 = sld [smem:[#allocation4 + $0x4b]]
        %v720 = vstv %s719
        %v721 = vmul.f32 %v720, %v242
        %723 = vrot.lane.b32.xlu0 %v721, 126
        %v724 = vpop.permute.xlu0 %723
        %v726 = vadd.f32 %v718, %v724
        %s727 = sld [smem:[#allocation4 + $0x4c]]
        %v728 = vstv %s727
        %v729 = vmul.f32 %v728, %v243
        %731 = vrot.lane.b32.xlu0 %v729, 126
        %v732 = vpop.permute.xlu0 %731
        %v734 = vadd.f32 %v726, %v732
        %s735 = sld [smem:[#allocation4 + $0x4d]]
        %v736 = vstv %s735
        %v737 = vmul.f32 %v736, %v244
        %739 = vrot.lane.b32.xlu0 %v737, 126
        %v740 = vpop.permute.xlu0 %739
        %v742 = vadd.f32 %v734, %v740
        %s743 = sld [smem:[#allocation4 + $0x4e]]
        %v744 = vstv %s743
        %v745 = vmul.f32 %v744, %v245
        %747 = vrot.lane.b32.xlu0 %v745, 126
        %v748 = vpop.permute.xlu0 %747
        %v750 = vadd.f32 %v742, %v748
        %s751 = sld [smem:[#allocation4 + $0x4f]]
        %v752 = vstv %s751
        %v753 = vmul.f32 %v752, %v246
        %755 = vrot.lane.b32.xlu0 %v753, 126
        %v756 = vpop.permute.xlu0 %755
        %v758 = vadd.f32 %v750, %v756
        %s759 = sld [smem:[#allocation4 + $0x50]]
        %v760 = vstv %s759
        %v761 = vmul.f32 %v760, %v239
        %763 = vrot.lane.b32.xlu0 %v761, 126
        %v764 = vpop.permute.xlu0 %763
        %v766 = vadd.f32 %v566, %v764
        %s767 = sld [smem:[#allocation4 + $0x51]]
        %v768 = vstv %s767
        %v769 = vmul.f32 %v768, %v240
        %771 = vrot.lane.b32.xlu0 %v769, 126
        %v772 = vpop.permute.xlu0 %771
        %v774 = vadd.f32 %v766, %v772
        %s775 = sld [smem:[#allocation4 + $0x52]]
        %v776 = vstv %s775
        %v777 = vmul.f32 %v776, %v241
        %779 = vrot.lane.b32.xlu0 %v777, 126
        %v780 = vpop.permute.xlu0 %779
        %v782 = vadd.f32 %v774, %v780
        %s783 = sld [smem:[#allocation4 + $0x53]]
        %v784 = vstv %s783
        %v785 = vmul.f32 %v784, %v242
        %787 = vrot.lane.b32.xlu0 %v785, 126
        %v788 = vpop.permute.xlu0 %787
        %v790 = vadd.f32 %v782, %v788
        %s791 = sld [smem:[#allocation4 + $0x54]]
        %v792 = vstv %s791
        %v793 = vmul.f32 %v792, %v243
        %795 = vrot.lane.b32.xlu0 %v793, 126
        %v796 = vpop.permute.xlu0 %795
        %v798 = vadd.f32 %v790, %v796
        %s799 = sld [smem:[#allocation4 + $0x55]]
        %v800 = vstv %s799
        %v801 = vmul.f32 %v800, %v244
        %803 = vrot.lane.b32.xlu0 %v801, 126
        %v804 = vpop.permute.xlu0 %803
        %v806 = vadd.f32 %v798, %v804
        %s807 = sld [smem:[#allocation4 + $0x56]]
        %v808 = vstv %s807
        %v809 = vmul.f32 %v808, %v245
        %811 = vrot.lane.b32.xlu0 %v809, 126
        %v812 = vpop.permute.xlu0 %811
        %v814 = vadd.f32 %v806, %v812
        %s815 = sld [smem:[#allocation4 + $0x57]]
        %v816 = vstv %s815
        %v817 = vmul.f32 %v816, %v246
        %819 = vrot.lane.b32.xlu0 %v817, 126
        %v820 = vpop.permute.xlu0 %819
        %v822 = vadd.f32 %v814, %v820
        %s823 = sld [smem:[#allocation4 + $0x58]]
        %v824 = vstv %s823
        %v825 = vmul.f32 %v824, %v239
        %827 = vrot.lane.b32.xlu0 %v825, 126
        %v828 = vpop.permute.xlu0 %827
        %v830 = vadd.f32 %v630, %v828
        %s831 = sld [smem:[#allocation4 + $0x59]]
        %v832 = vstv %s831
        %v833 = vmul.f32 %v832, %v240
        %835 = vrot.lane.b32.xlu0 %v833, 126
        %v836 = vpop.permute.xlu0 %835
        %v838 = vadd.f32 %v830, %v836
        %s839 = sld [smem:[#allocation4 + $0x5a]]
        %v840 = vstv %s839
        %v841 = vmul.f32 %v840, %v241
        %843 = vrot.lane.b32.xlu0 %v841, 126
        %v844 = vpop.permute.xlu0 %843
        %v846 = vadd.f32 %v838, %v844
        %s847 = sld [smem:[#allocation4 + $0x5b]]
        %v848 = vstv %s847
        %v849 = vmul.f32 %v848, %v242
        %851 = vrot.lane.b32.xlu0 %v849, 126
        %v852 = vpop.permute.xlu0 %851
        %v854 = vadd.f32 %v846, %v852
        %s855 = sld [smem:[#allocation4 + $0x5c]]
        %v856 = vstv %s855
        %v857 = vmul.f32 %v856, %v243
        %859 = vrot.lane.b32.xlu0 %v857, 126
        %v860 = vpop.permute.xlu0 %859
        %v862 = vadd.f32 %v854, %v860
        %s863 = sld [smem:[#allocation4 + $0x5d]]
        %v864 = vstv %s863
        %v865 = vmul.f32 %v864, %v244
        %867 = vrot.lane.b32.xlu0 %v865, 126
        %v868 = vpop.permute.xlu0 %867
        %v870 = vadd.f32 %v862, %v868
        %s871 = sld [smem:[#allocation4 + $0x5e]]
        %v872 = vstv %s871
        %v873 = vmul.f32 %v872, %v245
        %875 = vrot.lane.b32.xlu0 %v873, 126
        %v876 = vpop.permute.xlu0 %875
        %v878 = vadd.f32 %v870, %v876
        %s879 = sld [smem:[#allocation4 + $0x5f]]
        %v880 = vstv %s879
        %v881 = vmul.f32 %v880, %v246
        %883 = vrot.lane.b32.xlu0 %v881, 126
        %v884 = vpop.permute.xlu0 %883
        %v886 = vadd.f32 %v878, %v884
        %v887 = vld [vmem:[%s223 + $0x1] sm:$0xff]
        %v888 = vld [vmem:[%s223 + $0x11] sm:$0xff]
        %v889 = vld [vmem:[%s223 + $0x21] sm:$0xff]
        %v890 = vld [vmem:[%s223 + $0x31] sm:$0xff]
        %v891 = vld [vmem:[%s223 + $0x41] sm:$0xff]
        %v892 = vld [vmem:[%s223 + $0x51] sm:$0xff]
        %v893 = vld [vmem:[%s223 + $0x61] sm:$0xff]
        %v894 = vld [vmem:[%s223 + $0x71] sm:$0xff]
        %s895 = sld [smem:[#allocation4 + $0x60]]
        %v896 = vstv %s895
        %v897 = vmul.f32 %v896, %v887
        %v898 = vadd.f32 %v694, %v897
        %s899 = sld [smem:[#allocation4 + $0x61]]
        %v900 = vstv %s899
        %v901 = vmul.f32 %v900, %v888
        %v902 = vadd.f32 %v898, %v901
        %s903 = sld [smem:[#allocation4 + $0x62]]
        %v904 = vstv %s903
        %v905 = vmul.f32 %v904, %v889
        %v906 = vadd.f32 %v902, %v905
        %s907 = sld [smem:[#allocation4 + $0x63]]
        %v908 = vstv %s907
        %v909 = vmul.f32 %v908, %v890
        %v910 = vadd.f32 %v906, %v909
        %s911 = sld [smem:[#allocation4 + $0x64]]
        %v912 = vstv %s911
        %v913 = vmul.f32 %v912, %v891
        %v914 = vadd.f32 %v910, %v913
        %s915 = sld [smem:[#allocation4 + $0x65]]
        %v916 = vstv %s915
        %v917 = vmul.f32 %v916, %v892
        %v918 = vadd.f32 %v914, %v917
        %s919 = sld [smem:[#allocation4 + $0x66]]
        %v920 = vstv %s919
        %v921 = vmul.f32 %v920, %v893
        %v922 = vadd.f32 %v918, %v921
        %s923 = sld [smem:[#allocation4 + $0x67]]
        %v924 = vstv %s923
        %v925 = vmul.f32 %v924, %v894
        %v926 = vadd.f32 %v922, %v925
        %s927 = sld [smem:[#allocation4 + $0x68]]
        %v928 = vstv %s927
        %v929 = vmul.f32 %v928, %v887
        %v930 = vadd.f32 %v758, %v929
        %s931 = sld [smem:[#allocation4 + $0x69]]
        %v932 = vstv %s931
        %v933 = vmul.f32 %v932, %v888
        %v934 = vadd.f32 %v930, %v933
        %s935 = sld [smem:[#allocation4 + $0x6a]]
        %v936 = vstv %s935
        %v937 = vmul.f32 %v936, %v889
        %v938 = vadd.f32 %v934, %v937
        %s939 = sld [smem:[#allocation4 + $0x6b]]
        %v940 = vstv %s939
        %v941 = vmul.f32 %v940, %v890
        %v942 = vadd.f32 %v938, %v941
        %s943 = sld [smem:[#allocation4 + $0x6c]]
        %v944 = vstv %s943
        %v945 = vmul.f32 %v944, %v891
        %v946 = vadd.f32 %v942, %v945
        %s947 = sld [smem:[#allocation4 + $0x6d]]
        %v948 = vstv %s947
        %v949 = vmul.f32 %v948, %v892
        %v950 = vadd.f32 %v946, %v949
        %s951 = sld [smem:[#allocation4 + $0x6e]]
        %v952 = vstv %s951
        %v953 = vmul.f32 %v952, %v893
        %v954 = vadd.f32 %v950, %v953
        %s955 = sld [smem:[#allocation4 + $0x6f]]
        %v956 = vstv %s955
        %v957 = vmul.f32 %v956, %v894
        %v958 = vadd.f32 %v954, %v957
        %s959 = sld [smem:[#allocation4 + $0x70]]
        %v960 = vstv %s959
        %v961 = vmul.f32 %v960, %v887
        %v962 = vadd.f32 %v822, %v961
        %s963 = sld [smem:[#allocation4 + $0x71]]
        %v964 = vstv %s963
        %v965 = vmul.f32 %v964, %v888
        %v966 = vadd.f32 %v962, %v965
        %s967 = sld [smem:[#allocation4 + $0x72]]
        %v968 = vstv %s967
        %v969 = vmul.f32 %v968, %v889
        %v970 = vadd.f32 %v966, %v969
        %s971 = sld [smem:[#allocation4 + $0x73]]
        %v972 = vstv %s971
        %v973 = vmul.f32 %v972, %v890
        %v974 = vadd.f32 %v970, %v973
        %s975 = sld [smem:[#allocation4 + $0x74]]
        %v976 = vstv %s975
        %v977 = vmul.f32 %v976, %v891
        %v978 = vadd.f32 %v974, %v977
        %s979 = sld [smem:[#allocation4 + $0x75]]
        %v980 = vstv %s979
        %v981 = vmul.f32 %v980, %v892
        %v982 = vadd.f32 %v978, %v981
        %s983 = sld [smem:[#allocation4 + $0x76]]
        %v984 = vstv %s983
        %v985 = vmul.f32 %v984, %v893
        %v986 = vadd.f32 %v982, %v985
        %s987 = sld [smem:[#allocation4 + $0x77]]
        %v988 = vstv %s987
        %v989 = vmul.f32 %v988, %v894
        %v990 = vadd.f32 %v986, %v989
        %s991 = sld [smem:[#allocation4 + $0x78]]
        %v992 = vstv %s991
        %v993 = vmul.f32 %v992, %v887
        %v994 = vadd.f32 %v886, %v993
        %s995 = sld [smem:[#allocation4 + $0x79]]
        %v996 = vstv %s995
        %v997 = vmul.f32 %v996, %v888
        %v998 = vadd.f32 %v994, %v997
        %s999 = sld [smem:[#allocation4 + $0x7a]]
        %v1000 = vstv %s999
        %v1001 = vmul.f32 %v1000, %v889
        %v1002 = vadd.f32 %v998, %v1001
        %s1003 = sld [smem:[#allocation4 + $0x7b]]
        %v1004 = vstv %s1003
        %v1005 = vmul.f32 %v1004, %v890
        %v1006 = vadd.f32 %v1002, %v1005
        %s1007 = sld [smem:[#allocation4 + $0x7c]]
        %v1008 = vstv %s1007
        %v1009 = vmul.f32 %v1008, %v891
        %v1010 = vadd.f32 %v1006, %v1009
        %s1011 = sld [smem:[#allocation4 + $0x7d]]
        %v1012 = vstv %s1011
        %v1013 = vmul.f32 %v1012, %v892
        %v1014 = vadd.f32 %v1010, %v1013
        %s1015 = sld [smem:[#allocation4 + $0x7e]]
        %v1016 = vstv %s1015
        %v1017 = vmul.f32 %v1016, %v893
        %v1018 = vadd.f32 %v1014, %v1017
        %s1019 = sld [smem:[#allocation4 + $0x7f]]
        %v1020 = vstv %s1019
        %v1021 = vmul.f32 %v1020, %v894
        %v1022 = vadd.f32 %v1018, %v1021
        %s1023 = sld [smem:[#allocation4 + $0x80]]
        %v1024 = vstv %s1023
        %v1025 = vmul.f32 %v1024, %v887
        %1027 = vrot.lane.b32.xlu0 %v1025, 127
        %v1028 = vpop.permute.xlu0 %1027
        %v1030 = vadd.f32 %v926, %v1028
        %s1031 = sld [smem:[#allocation4 + $0x81]]
        %v1032 = vstv %s1031
        %v1033 = vmul.f32 %v1032, %v888
        %1035 = vrot.lane.b32.xlu0 %v1033, 127
        %v1036 = vpop.permute.xlu0 %1035
        %v1038 = vadd.f32 %v1030, %v1036
        %s1039 = sld [smem:[#allocation4 + $0x82]]
        %v1040 = vstv %s1039
        %v1041 = vmul.f32 %v1040, %v889
        %1043 = vrot.lane.b32.xlu0 %v1041, 127
        %v1044 = vpop.permute.xlu0 %1043
        %v1046 = vadd.f32 %v1038, %v1044
        %s1047 = sld [smem:[#allocation4 + $0x83]]
        %v1048 = vstv %s1047
        %v1049 = vmul.f32 %v1048, %v890
        %1051 = vrot.lane.b32.xlu0 %v1049, 127
        %v1052 = vpop.permute.xlu0 %1051
        %v1054 = vadd.f32 %v1046, %v1052
        %s1055 = sld [smem:[#allocation4 + $0x84]]
        %v1056 = vstv %s1055
        %v1057 = vmul.f32 %v1056, %v891
        %1059 = vrot.lane.b32.xlu0 %v1057, 127
        %v1060 = vpop.permute.xlu0 %1059
        %v1062 = vadd.f32 %v1054, %v1060
        %s1063 = sld [smem:[#allocation4 + $0x85]]
        %v1064 = vstv %s1063
        %v1065 = vmul.f32 %v1064, %v892
        %1067 = vrot.lane.b32.xlu0 %v1065, 127
        %v1068 = vpop.permute.xlu0 %1067
        %v1070 = vadd.f32 %v1062, %v1068
        %s1071 = sld [smem:[#allocation4 + $0x86]]
        %v1072 = vstv %s1071
        %v1073 = vmul.f32 %v1072, %v893
        %1075 = vrot.lane.b32.xlu0 %v1073, 127
        %v1076 = vpop.permute.xlu0 %1075
        %v1078 = vadd.f32 %v1070, %v1076
        %s1079 = sld [smem:[#allocation4 + $0x87]]
        %v1080 = vstv %s1079
        %v1081 = vmul.f32 %v1080, %v894
        %1083 = vrot.lane.b32.xlu0 %v1081, 127
        %v1084 = vpop.permute.xlu0 %1083
        %v1086 = vadd.f32 %v1078, %v1084
        %s1087 = sld [smem:[#allocation4 + $0x88]]
        %v1088 = vstv %s1087
        %v1089 = vmul.f32 %v1088, %v887
        %1091 = vrot.lane.b32.xlu0 %v1089, 127
        %v1092 = vpop.permute.xlu0 %1091
        %v1094 = vadd.f32 %v958, %v1092
        %s1095 = sld [smem:[#allocation4 + $0x89]]
        %v1096 = vstv %s1095
        %v1097 = vmul.f32 %v1096, %v888
        %1099 = vrot.lane.b32.xlu0 %v1097, 127
        %v1100 = vpop.permute.xlu0 %1099
        %v1102 = vadd.f32 %v1094, %v1100
        %s1103 = sld [smem:[#allocation4 + $0x8a]]
        %v1104 = vstv %s1103
        %v1105 = vmul.f32 %v1104, %v889
        %1107 = vrot.lane.b32.xlu0 %v1105, 127
        %v1108 = vpop.permute.xlu0 %1107
        %v1110 = vadd.f32 %v1102, %v1108
        %s1111 = sld [smem:[#allocation4 + $0x8b]]
        %v1112 = vstv %s1111
        %v1113 = vmul.f32 %v1112, %v890
        %1115 = vrot.lane.b32.xlu0 %v1113, 127
        %v1116 = vpop.permute.xlu0 %1115
        %v1118 = vadd.f32 %v1110, %v1116
        %s1119 = sld [smem:[#allocation4 + $0x8c]]
        %v1120 = vstv %s1119
        %v1121 = vmul.f32 %v1120, %v891
        %1123 = vrot.lane.b32.xlu0 %v1121, 127
        %v1124 = vpop.permute.xlu0 %1123
        %v1126 = vadd.f32 %v1118, %v1124
        %s1127 = sld [smem:[#allocation4 + $0x8d]]
        %v1128 = vstv %s1127
        %v1129 = vmul.f32 %v1128, %v892
        %1131 = vrot.lane.b32.xlu0 %v1129, 127
        %v1132 = vpop.permute.xlu0 %1131
        %v1134 = vadd.f32 %v1126, %v1132
        %s1135 = sld [smem:[#allocation4 + $0x8e]]
        %v1136 = vstv %s1135
        %v1137 = vmul.f32 %v1136, %v893
        %1139 = vrot.lane.b32.xlu0 %v1137, 127
        %v1140 = vpop.permute.xlu0 %1139
        %v1142 = vadd.f32 %v1134, %v1140
        %s1143 = sld [smem:[#allocation4 + $0x8f]]
        %v1144 = vstv %s1143
        %v1145 = vmul.f32 %v1144, %v894
        %1147 = vrot.lane.b32.xlu0 %v1145, 127
        %v1148 = vpop.permute.xlu0 %1147
        %v1150 = vadd.f32 %v1142, %v1148
        %s1151 = sld [smem:[#allocation4 + $0x90]]
        %v1152 = vstv %s1151
        %v1153 = vmul.f32 %v1152, %v887
        %1155 = vrot.lane.b32.xlu0 %v1153, 127
        %v1156 = vpop.permute.xlu0 %1155
        %v1158 = vadd.f32 %v990, %v1156
        %s1159 = sld [smem:[#allocation4 + $0x91]]
        %v1160 = vstv %s1159
        %v1161 = vmul.f32 %v1160, %v888
        %1163 = vrot.lane.b32.xlu0 %v1161, 127
        %v1164 = vpop.permute.xlu0 %1163
        %v1166 = vadd.f32 %v1158, %v1164
        %s1167 = sld [smem:[#allocation4 + $0x92]]
        %v1168 = vstv %s1167
        %v1169 = vmul.f32 %v1168, %v889
        %1171 = vrot.lane.b32.xlu0 %v1169, 127
        %v1172 = vpop.permute.xlu0 %1171
        %v1174 = vadd.f32 %v1166, %v1172
        %s1175 = sld [smem:[#allocation4 + $0x93]]
        %v1176 = vstv %s1175
        %v1177 = vmul.f32 %v1176, %v890
        %1179 = vrot.lane.b32.xlu0 %v1177, 127
        %v1180 = vpop.permute.xlu0 %1179
        %v1182 = vadd.f32 %v1174, %v1180
        %s1183 = sld [smem:[#allocation4 + $0x94]]
        %v1184 = vstv %s1183
        %v1185 = vmul.f32 %v1184, %v891
        %1187 = vrot.lane.b32.xlu0 %v1185, 127
        %v1188 = vpop.permute.xlu0 %1187
        %v1190 = vadd.f32 %v1182, %v1188
        %s1191 = sld [smem:[#allocation4 + $0x95]]
        %v1192 = vstv %s1191
        %v1193 = vmul.f32 %v1192, %v892
        %1195 = vrot.lane.b32.xlu0 %v1193, 127
        %v1196 = vpop.permute.xlu0 %1195
        %v1198 = vadd.f32 %v1190, %v1196
        %s1199 = sld [smem:[#allocation4 + $0x96]]
        %v1200 = vstv %s1199
        %v1201 = vmul.f32 %v1200, %v893
        %1203 = vrot.lane.b32.xlu0 %v1201, 127
        %v1204 = vpop.permute.xlu0 %1203
        %v1206 = vadd.f32 %v1198, %v1204
        %s1207 = sld [smem:[#allocation4 + $0x97]]
        %v1208 = vstv %s1207
        %v1209 = vmul.f32 %v1208, %v894
        %1211 = vrot.lane.b32.xlu0 %v1209, 127
        %v1212 = vpop.permute.xlu0 %1211
        %v1214 = vadd.f32 %v1206, %v1212
        %s1215 = sld [smem:[#allocation4 + $0x98]]
        %v1216 = vstv %s1215
        %v1217 = vmul.f32 %v1216, %v887
        %1219 = vrot.lane.b32.xlu0 %v1217, 127
        %v1220 = vpop.permute.xlu0 %1219
        %v1222 = vadd.f32 %v1022, %v1220
        %s1223 = sld [smem:[#allocation4 + $0x99]]
        %v1224 = vstv %s1223
        %v1225 = vmul.f32 %v1224, %v888
        %1227 = vrot.lane.b32.xlu0 %v1225, 127
        %v1228 = vpop.permute.xlu0 %1227
        %v1230 = vadd.f32 %v1222, %v1228
        %s1231 = sld [smem:[#allocation4 + $0x9a]]
        %v1232 = vstv %s1231
        %v1233 = vmul.f32 %v1232, %v889
        %1235 = vrot.lane.b32.xlu0 %v1233, 127
        %v1236 = vpop.permute.xlu0 %1235
        %v1238 = vadd.f32 %v1230, %v1236
        %s1239 = sld [smem:[#allocation4 + $0x9b]]
        %v1240 = vstv %s1239
        %v1241 = vmul.f32 %v1240, %v890
        %1243 = vrot.lane.b32.xlu0 %v1241, 127
        %v1244 = vpop.permute.xlu0 %1243
        %v1246 = vadd.f32 %v1238, %v1244
        %s1247 = sld [smem:[#allocation4 + $0x9c]]
        %v1248 = vstv %s1247
        %v1249 = vmul.f32 %v1248, %v891
        %1251 = vrot.lane.b32.xlu0 %v1249, 127
        %v1252 = vpop.permute.xlu0 %1251
        %v1254 = vadd.f32 %v1246, %v1252
        %s1255 = sld [smem:[#allocation4 + $0x9d]]
        %v1256 = vstv %s1255
        %v1257 = vmul.f32 %v1256, %v892
        %1259 = vrot.lane.b32.xlu0 %v1257, 127
        %v1260 = vpop.permute.xlu0 %1259
        %v1262 = vadd.f32 %v1254, %v1260
        %s1263 = sld [smem:[#allocation4 + $0x9e]]
        %v1264 = vstv %s1263
        %v1265 = vmul.f32 %v1264, %v893
        %1267 = vrot.lane.b32.xlu0 %v1265, 127
        %v1268 = vpop.permute.xlu0 %1267
        %v1270 = vadd.f32 %v1262, %v1268
        %s1271 = sld [smem:[#allocation4 + $0x9f]]
        %v1272 = vstv %s1271
        %v1273 = vmul.f32 %v1272, %v894
        %1275 = vrot.lane.b32.xlu0 %v1273, 127
        %v1276 = vpop.permute.xlu0 %1275
        %v1278 = vadd.f32 %v1270, %v1276
        %s1279 = sld [smem:[#allocation4 + $0xa0]]
        %v1280 = vstv %s1279
        %v1281 = vmul.f32 %v1280, %v887
        %1283 = vrot.lane.b32.xlu0 %v1281, 126
        %v1284 = vpop.permute.xlu0 %1283
        %v1286 = vadd.f32 %v1086, %v1284
        %s1287 = sld [smem:[#allocation4 + $0xa1]]
        %v1288 = vstv %s1287
        %v1289 = vmul.f32 %v1288, %v888
        %1291 = vrot.lane.b32.xlu0 %v1289, 126
        %v1292 = vpop.permute.xlu0 %1291
        %v1294 = vadd.f32 %v1286, %v1292
        %s1295 = sld [smem:[#allocation4 + $0xa2]]
        %v1296 = vstv %s1295
        %v1297 = vmul.f32 %v1296, %v889
        %1299 = vrot.lane.b32.xlu0 %v1297, 126
        %v1300 = vpop.permute.xlu0 %1299
        %v1302 = vadd.f32 %v1294, %v1300
        %s1303 = sld [smem:[#allocation4 + $0xa3]]
        %v1304 = vstv %s1303
        %v1305 = vmul.f32 %v1304, %v890
        %1307 = vrot.lane.b32.xlu0 %v1305, 126
        %v1308 = vpop.permute.xlu0 %1307
        %v1310 = vadd.f32 %v1302, %v1308
        %s1311 = sld [smem:[#allocation4 + $0xa4]]
        %v1312 = vstv %s1311
        %v1313 = vmul.f32 %v1312, %v891
        %1315 = vrot.lane.b32.xlu0 %v1313, 126
        %v1316 = vpop.permute.xlu0 %1315
        %v1318 = vadd.f32 %v1310, %v1316
        %s1319 = sld [smem:[#allocation4 + $0xa5]]
        %v1320 = vstv %s1319
        %v1321 = vmul.f32 %v1320, %v892
        %1323 = vrot.lane.b32.xlu0 %v1321, 126
        %v1324 = vpop.permute.xlu0 %1323
        %v1326 = vadd.f32 %v1318, %v1324
        %s1327 = sld [smem:[#allocation4 + $0xa6]]
        %v1328 = vstv %s1327
        %v1329 = vmul.f32 %v1328, %v893
        %1331 = vrot.lane.b32.xlu0 %v1329, 126
        %v1332 = vpop.permute.xlu0 %1331
        %v1334 = vadd.f32 %v1326, %v1332
        %s1335 = sld [smem:[#allocation4 + $0xa7]]
        %v1336 = vstv %s1335
        %v1337 = vmul.f32 %v1336, %v894
        %1339 = vrot.lane.b32.xlu0 %v1337, 126
        %v1340 = vpop.permute.xlu0 %1339
        %v1342 = vadd.f32 %v1334, %v1340
        %s1343 = sld [smem:[#allocation4 + $0xa8]]
        %v1344 = vstv %s1343
        %v1345 = vmul.f32 %v1344, %v887
        %1347 = vrot.lane.b32.xlu0 %v1345, 126
        %v1348 = vpop.permute.xlu0 %1347
        %v1350 = vadd.f32 %v1150, %v1348
        %s1351 = sld [smem:[#allocation4 + $0xa9]]
        %v1352 = vstv %s1351
        %v1353 = vmul.f32 %v1352, %v888
        %1355 = vrot.lane.b32.xlu0 %v1353, 126
        %v1356 = vpop.permute.xlu0 %1355
        %v1358 = vadd.f32 %v1350, %v1356
        %s1359 = sld [smem:[#allocation4 + $0xaa]]
        %v1360 = vstv %s1359
        %v1361 = vmul.f32 %v1360, %v889
        %1363 = vrot.lane.b32.xlu0 %v1361, 126
        %v1364 = vpop.permute.xlu0 %1363
        %v1366 = vadd.f32 %v1358, %v1364
        %s1367 = sld [smem:[#allocation4 + $0xab]]
        %v1368 = vstv %s1367
        %v1369 = vmul.f32 %v1368, %v890
        %1371 = vrot.lane.b32.xlu0 %v1369, 126
        %v1372 = vpop.permute.xlu0 %1371
        %v1374 = vadd.f32 %v1366, %v1372
        %s1375 = sld [smem:[#allocation4 + $0xac]]
        %v1376 = vstv %s1375
        %v1377 = vmul.f32 %v1376, %v891
        %1379 = vrot.lane.b32.xlu0 %v1377, 126
        %v1380 = vpop.permute.xlu0 %1379
        %v1382 = vadd.f32 %v1374, %v1380
        %s1383 = sld [smem:[#allocation4 + $0xad]]
        %v1384 = vstv %s1383
        %v1385 = vmul.f32 %v1384, %v892
        %1387 = vrot.lane.b32.xlu0 %v1385, 126
        %v1388 = vpop.permute.xlu0 %1387
        %v1390 = vadd.f32 %v1382, %v1388
        %s1391 = sld [smem:[#allocation4 + $0xae]]
        %v1392 = vstv %s1391
        %v1393 = vmul.f32 %v1392, %v893
        %1395 = vrot.lane.b32.xlu0 %v1393, 126
        %v1396 = vpop.permute.xlu0 %1395
        %v1398 = vadd.f32 %v1390, %v1396
        %s1399 = sld [smem:[#allocation4 + $0xaf]]
        %v1400 = vstv %s1399
        %v1401 = vmul.f32 %v1400, %v894
        %1403 = vrot.lane.b32.xlu0 %v1401, 126
        %v1404 = vpop.permute.xlu0 %1403
        %v1406 = vadd.f32 %v1398, %v1404
        %s1407 = sld [smem:[#allocation4 + $0xb0]]
        %v1408 = vstv %s1407
        %v1409 = vmul.f32 %v1408, %v887
        %1411 = vrot.lane.b32.xlu0 %v1409, 126
        %v1412 = vpop.permute.xlu0 %1411
        %v1414 = vadd.f32 %v1214, %v1412
        %s1415 = sld [smem:[#allocation4 + $0xb1]]
        %v1416 = vstv %s1415
        %v1417 = vmul.f32 %v1416, %v888
        %1419 = vrot.lane.b32.xlu0 %v1417, 126
        %v1420 = vpop.permute.xlu0 %1419
        %v1422 = vadd.f32 %v1414, %v1420
        %s1423 = sld [smem:[#allocation4 + $0xb2]]
        %v1424 = vstv %s1423
        %v1425 = vmul.f32 %v1424, %v889
        %1427 = vrot.lane.b32.xlu0 %v1425, 126
        %v1428 = vpop.permute.xlu0 %1427
        %v1430 = vadd.f32 %v1422, %v1428
        %s1431 = sld [smem:[#allocation4 + $0xb3]]
        %v1432 = vstv %s1431
        %v1433 = vmul.f32 %v1432, %v890
        %1435 = vrot.lane.b32.xlu0 %v1433, 126
        %v1436 = vpop.permute.xlu0 %1435
        %v1438 = vadd.f32 %v1430, %v1436
        %s1439 = sld [smem:[#allocation4 + $0xb4]]
        %v1440 = vstv %s1439
        %v1441 = vmul.f32 %v1440, %v891
        %1443 = vrot.lane.b32.xlu0 %v1441, 126
        %v1444 = vpop.permute.xlu0 %1443
        %v1446 = vadd.f32 %v1438, %v1444
        %s1447 = sld [smem:[#allocation4 + $0xb5]]
        %v1448 = vstv %s1447
        %v1449 = vmul.f32 %v1448, %v892
        %1451 = vrot.lane.b32.xlu0 %v1449, 126
        %v1452 = vpop.permute.xlu0 %1451
        %v1454 = vadd.f32 %v1446, %v1452
        %s1455 = sld [smem:[#allocation4 + $0xb6]]
        %v1456 = vstv %s1455
        %v1457 = vmul.f32 %v1456, %v893
        %1459 = vrot.lane.b32.xlu0 %v1457, 126
        %v1460 = vpop.permute.xlu0 %1459
        %v1462 = vadd.f32 %v1454, %v1460
        %s1463 = sld [smem:[#allocation4 + $0xb7]]
        %v1464 = vstv %s1463
        %v1465 = vmul.f32 %v1464, %v894
        %1467 = vrot.lane.b32.xlu0 %v1465, 126
        %v1468 = vpop.permute.xlu0 %1467
        %v1470 = vadd.f32 %v1462, %v1468
        %s1471 = sld [smem:[#allocation4 + $0xb8]]
        %v1472 = vstv %s1471
        %v1473 = vmul.f32 %v1472, %v887
        %1475 = vrot.lane.b32.xlu0 %v1473, 126
        %v1476 = vpop.permute.xlu0 %1475
        %v1478 = vadd.f32 %v1278, %v1476
        %s1479 = sld [smem:[#allocation4 + $0xb9]]
        %v1480 = vstv %s1479
        %v1481 = vmul.f32 %v1480, %v888
        %1483 = vrot.lane.b32.xlu0 %v1481, 126
        %v1484 = vpop.permute.xlu0 %1483
        %v1486 = vadd.f32 %v1478, %v1484
        %s1487 = sld [smem:[#allocation4 + $0xba]]
        %v1488 = vstv %s1487
        %v1489 = vmul.f32 %v1488, %v889
        %1491 = vrot.lane.b32.xlu0 %v1489, 126
        %v1492 = vpop.permute.xlu0 %1491
        %v1494 = vadd.f32 %v1486, %v1492
        %s1495 = sld [smem:[#allocation4 + $0xbb]]
        %v1496 = vstv %s1495
        %v1497 = vmul.f32 %v1496, %v890
        %1499 = vrot.lane.b32.xlu0 %v1497, 126
        %v1500 = vpop.permute.xlu0 %1499
        %v1502 = vadd.f32 %v1494, %v1500
        %s1503 = sld [smem:[#allocation4 + $0xbc]]
        %v1504 = vstv %s1503
        %v1505 = vmul.f32 %v1504, %v891
        %1507 = vrot.lane.b32.xlu0 %v1505, 126
        %v1508 = vpop.permute.xlu0 %1507
        %v1510 = vadd.f32 %v1502, %v1508
        %s1511 = sld [smem:[#allocation4 + $0xbd]]
        %v1512 = vstv %s1511
        %v1513 = vmul.f32 %v1512, %v892
        %1515 = vrot.lane.b32.xlu0 %v1513, 126
        %v1516 = vpop.permute.xlu0 %1515
        %v1518 = vadd.f32 %v1510, %v1516
        %s1519 = sld [smem:[#allocation4 + $0xbe]]
        %v1520 = vstv %s1519
        %v1521 = vmul.f32 %v1520, %v893
        %1523 = vrot.lane.b32.xlu0 %v1521, 126
        %v1524 = vpop.permute.xlu0 %1523
        %v1526 = vadd.f32 %v1518, %v1524
        %s1527 = sld [smem:[#allocation4 + $0xbf]]
        %v1528 = vstv %s1527
        %v1529 = vmul.f32 %v1528, %v894
        %1531 = vrot.lane.b32.xlu0 %v1529, 126
        %v1532 = vpop.permute.xlu0 %1531
        %v1534 = vadd.f32 %v1526, %v1532
        %vm1535 = vcmask 269312
        %v1536 = vsel %vm1535, %v1342, 0.0
        %1537 = vadd.xlane.f32.xlu0 %v1536
        %v1538 = vpop.xlane.xlu0 %1537
        %v1539 = vadd.f32 %v1538, 0.0
        %v1540 = vmul.f32 %v1342, %v1342
        %v1541 = vsel %vm1535, %v1540, 0.0
        %1542 = vadd.xlane.f32.xlu0 %v1541
        %v1543 = vpop.xlane.xlu0 %1542
        %v1544 = vadd.f32 %v1543, 0.0
        %v1545 = vsel %vm1535, %v1406, 0.0
        %1546 = vadd.xlane.f32.xlu0 %v1545
        %v1547 = vpop.xlane.xlu0 %1546
        %v1548 = vadd.f32 %v1539, %v1547
        %v1549 = vmul.f32 %v1406, %v1406
        %v1550 = vsel %vm1535, %v1549, 0.0
        %1551 = vadd.xlane.f32.xlu0 %v1550
        %v1552 = vpop.xlane.xlu0 %1551
        %v1553 = vadd.f32 %v1544, %v1552
        %v1554 = vsel %vm1535, %v1470, 0.0
        %1555 = vadd.xlane.f32.xlu0 %v1554
        %v1556 = vpop.xlane.xlu0 %1555
        %v1557 = vadd.f32 %v1548, %v1556
        %v1558 = vmul.f32 %v1470, %v1470
        %v1559 = vsel %vm1535, %v1558, 0.0
        %1560 = vadd.xlane.f32.xlu0 %v1559
        %v1561 = vpop.xlane.xlu0 %1560
        %v1562 = vadd.f32 %v1553, %v1561
        %v1563 = vsel %vm1535, %v1534, 0.0
        %1564 = vadd.xlane.f32.xlu0 %v1563
        %v1565 = vpop.xlane.xlu0 %1564
        %v1566 = vadd.f32 %v1557, %v1565
        %v1567 = vmul.f32 %v1534, %v1534
        %v1568 = vsel %vm1535, %v1567, 0.0
        %1569 = vadd.xlane.f32.xlu0 %v1568
        %v1570 = vpop.xlane.xlu0 %1569
        %v1571 = vadd.f32 %v1562, %v1570
        %v1572 = vlaneseq
        %v1573 = vshrl.u32 %v1572, 7
        %v1574 = vlaneseq
        %v1575 = vand.u32 %v1574, 127
        %vm1576 = vcmp.le.s32.totalorder %v1575, %v1573
        %v1577 = vsel %vm1576, 1, 0
        %v1578 = vcvt.s32.f32 %v1577
        %v1579 = vld [vmem:[#allocation2] sm:$0x1]
        %v1581 = vperm.slane %v1579, 0
        %vm1583 = vcmask 64512
        %v1585 = vsel %vm1583, %v1578, 0
        %1587 = vmatpush.msra.mxu0 0.0
        %1588 = vmatpush.msra.mxu0 0.0
        %1589 = vmatpush.msra.mxu0 0.0
        %1590 = vmatpush.msra.mxu0 0.0
        %1591 = vmatpush.msra.mxu0 0.0
        %1592 = vmatpush.msra.mxu0 0.0
        %1593 = vmatpush.msra.mxu0 0.0
        %1594 = vmatpush.msra.mxu0 0.0
        %1595 = vmatpush.msra.mxu0 0.0
        %1596 = vmatpush.msra.mxu0 0.0
        %1597 = vmatpush.msra.mxu0 0.0
        %1598 = vmatpush.msra.mxu0 0.0
        %1599 = vmatpush.msra.mxu0 0.0
        %1600 = vmatpush.msra.mxu0 0.0
        %1601 = vmatpush.msra.mxu0 0.0
        %1602 = vmatpush.msra.mxu0 %v1566
        %1603 = vmatmul.f32.gmra.mxu0 %v1585
        %v1604 = vpop.f32.mrf.mxu0
        %v1605 = vadd.f32 %v1581, %v1604
        %1606 = vdwg.mxu0
        %v1607 = vld [vmem:[#allocation3] sm:$0x1]
        %v1609 = vperm.slane %v1607, 0
        %1611 = vmatpush.msra.mxu0 0.0
        %1612 = vmatpush.msra.mxu0 0.0
        %1613 = vmatpush.msra.mxu0 0.0
        %1614 = vmatpush.msra.mxu0 0.0
        %1615 = vmatpush.msra.mxu0 0.0
        %1616 = vmatpush.msra.mxu0 0.0
        %1617 = vmatpush.msra.mxu0 0.0
        %1618 = vmatpush.msra.mxu0 0.0
        %1619 = vmatpush.msra.mxu0 0.0
        %1620 = vmatpush.msra.mxu0 0.0
        %1621 = vmatpush.msra.mxu0 0.0
        %1622 = vmatpush.msra.mxu0 0.0
        %1623 = vmatpush.msra.mxu0 0.0
        %1624 = vmatpush.msra.mxu0 0.0
        %1625 = vmatpush.msra.mxu0 0.0
        %1626 = vmatpush.msra.mxu0 %v1571
        %1627 = vmatmul.f32.gmra.mxu0 %v1585
        %v1628 = vpop.f32.mrf.mxu0
        %v1629 = vadd.f32 %v1609, %v1628
        %1630 = vdwg.mxu0
        %vm1631 = vcmask 7175
        %1632 = vst.msk [vmem:[#allocation2 - $0x7] sm:$0x80] %vm1631, %v1605
        %1633 = vst.msk [vmem:[#allocation3 - $0x7] sm:$0x80] %vm1631, %v1629
        %s1634 = smul.u32 %s24, 8
        %v1635 = vstv %s1634
        %v1636 = vadd.s32 %v1573, %v1635
        %v1637 = vcvt.s32.f32 %v1636
        %v1638 = vadd.f32 %v1637, 1.0
        %v1639 = vmul.f32 %v1638, 132.0
        %v1640 = vrcp.pop %v1639
        %v1641 = vmul.f32 %v1639, %v1640
        %v1642 = vsub.f32 1.0, %v1641
        %v1643 = vmul.f32 %v1640, %v1642
        %v1644 = vadd.f32 %v1640, %v1643
        %vm1645 = vweird.f32 %v1639
        %vm1646 = vweird.f32 %v1640
        %vm1647 = vmor %vm1645, %vm1646
        %v1648 = vsel %vm1647, %v1640, %v1644
        %v1649 = vand.u32 2147483647, %v1639
        %vm1650 = vcmp.eq.f32.partialorder %v1649, 8.507059e+37
        %v1651 = vand.u32 %v1639, 2147483648
        %v1652 = vor.u32 1.1754944e-38, %v1651
        %v1653 = vsel %vm1650, %v1652, %v1648
        %v1654 = vmul.f32 %v1605, %v1653
        %v1655 = vmul.f32 %v1654, 2.0
        %v1656 = vmul.f32 %v1655, %v1605
        %v1657 = vsub.f32 %v1629, %v1656
        %v1658 = vmul.f32 %v1657, %v1653
        %v1659 = vmul.f32 %v1654, %v1654
        %v1660 = vadd.f32 %v1658, %v1659
        %v1661 = vmax.f32 %v1660, 0.0
        %v1662 = vadd.f32 %v1661, 1e-05
        %v1663 = vrsqrt.pop %v1662
        %v1664 = vmul.f32 %v1663, %v1662
        %v1665 = vmul.f32 %v1664, %v1663
        %v1666 = vmul.f32 0.5, %v1665
        %v1667 = vsub.f32 1.5, %v1666
        %v1668 = vmul.f32 %v1663, %v1667
        %vm1669 = vweird.f32 %v1662
        %vm1670 = vweird.f32 %v1663
        %vm1671 = vmor %vm1669, %vm1670
        %v1672 = vsel %vm1671, %v1663, %v1668
        %1674 = vset.pattern.permute.xlu0 0
        %1675 = vperm.xlu0 %1674, %v1654
        %v1676 = vpop.permute.xlu0 %1675
        %v1678 = vsub.f32 %v1342, %v1676
        %1680 = vset.pattern.permute.xlu0 0
        %1681 = vperm.xlu0 %1680, %v1672
        %v1682 = vpop.permute.xlu0 %1681
        %v1684 = vmul.f32 %v1678, %v1682
        %s1685 = sld [smem:[#allocation7 + $0x4]]
        %v1686 = vstv %s1685
        %v1687 = vmul.f32 %v1684, %v1686
        %s1688 = sld [smem:[#allocation7 + $0x8]]
        %v1689 = vstv %s1688
        %v1690 = vadd.f32 %v1687, %v1689
        %vm1691 = vcmp.ge.f32.partialorder %v1690, 0.0
        %s1692 = sld [smem:[#allocation7 + $0xc]]
        %v1693 = vstv %s1692
        %v1694 = vmul.f32 %v1693, %v1690
        %v1695 = vsel %vm1691, %v1690, %v1694
        %1696 = vst.msk [vmem:[%s214] sm:$0xff] %vm1535, %v1695
        %v1697 = vsub.f32 %v1406, %v1676
        %v1698 = vmul.f32 %v1697, %v1682
        %s1699 = sld [smem:[#allocation7 + $0x5]]
        %v1700 = vstv %s1699
        %v1701 = vmul.f32 %v1698, %v1700
        %s1702 = sld [smem:[#allocation7 + $0x9]]
        %v1703 = vstv %s1702
        %v1704 = vadd.f32 %v1701, %v1703
        %vm1705 = vcmp.ge.f32.partialorder %v1704, 0.0
        %s1706 = sld [smem:[#allocation7 + $0xd]]
        %v1707 = vstv %s1706
        %v1708 = vmul.f32 %v1707, %v1704
        %v1709 = vsel %vm1705, %v1704, %v1708
        %s1710 = scalar_lea.vmem %s214, 8 [#allocation9]
        %1711 = vst.msk [vmem:[%s1710] sm:$0xff] %vm1535, %v1709
        %v1712 = vsub.f32 %v1470, %v1676
        %v1713 = vmul.f32 %v1712, %v1682
        %s1714 = sld [smem:[#allocation7 + $0x6]]
        %v1715 = vstv %s1714
        %v1716 = vmul.f32 %v1713, %v1715
        %s1717 = sld [smem:[#allocation7 + $0xa]]
        %v1718 = vstv %s1717
        %v1719 = vadd.f32 %v1716, %v1718
        %vm1720 = vcmp.ge.f32.partialorder %v1719, 0.0
        %s1721 = sld [smem:[#allocation7 + $0xe]]
        %v1722 = vstv %s1721
        %v1723 = vmul.f32 %v1722, %v1719
        %v1724 = vsel %vm1720, %v1719, %v1723
        %s1725 = scalar_lea.vmem %s214, 16 [#allocation9]
        %1726 = vst.msk [vmem:[%s1725] sm:$0xff] %vm1535, %v1724
        %v1727 = vsub.f32 %v1534, %v1676
        %v1728 = vmul.f32 %v1727, %v1682
        %s1729 = sld [smem:[#allocation7 + $0x7]]
        %v1730 = vstv %s1729
        %v1731 = vmul.f32 %v1728, %v1730
        %s1732 = sld [smem:[#allocation7 + $0xb]]
        %v1733 = vstv %s1732
        %v1734 = vadd.f32 %v1731, %v1733
        %vm1735 = vcmp.ge.f32.partialorder %v1734, 0.0
        %s1736 = sld [smem:[#allocation7 + $0xf]]
        %v1737 = vstv %s1736
        %v1738 = vmul.f32 %v1737, %v1734
        %v1739 = vsel %vm1735, %v1734, %v1738
        %s1740 = scalar_lea.vmem %s214, 24 [#allocation9]
        %1741 = vst.msk [vmem:[%s1740] sm:$0xff] %vm1535, %v1739
        %s1742 = sand.u32 %s111, 1
        %s1743 = scalar_lea.sflag [#allocation5], %s1742
        %s1744 = sand.u32 %s111, 1
        %s1745 = smul.addr %s1744, 32
        %s1746 = scalar_lea.vmem [#allocation9], %s1745
        // Predicated region
        $region45: #{tpu_custom_call.1} parent=31 // pred_check
          %p1747 = pneg %p121
        $region46: #{tpu_custom_call.1} parent=31 // pred_check_branch
          %1749 = sbr.rel (%p1747) target = $region48
        $region47: #{tpu_custom_call.1} parent=31 // pred_region
          %1751 = vsyncadd %s1743, 0
          %s1752 = smul.addr %s23, 12
          %s1753 = sadd.s32 %s24, %s1752
          %s1754 = smul.addr %s1753, 8
          %s1755 = scalar_lea.hbm %s3, %s1754
          %s1756 = sshll.u32 %s1746, 4
          %s1757 = int_to_ptr.vmem [resolvable:$true] %s1756
          %s1758 = sshll.u32 %s1755, 4
          %s1759 = int_to_ptr.hbm [resolvable:$true] %s1758
          %1764 = dma.vmem_to_hbm [thread:$0]  %s1757, 512, %s1759, %s1743, 128, 384, 8
        $region48: #{tpu_custom_call.1} parent=31 // pred_fallthru
          _
      $region32: #{tpu_custom_call.1} parent=5 // pred_fallthru
        _
      %p1765 = scmp.le.s32.totalorder 2, %s14
      // Predicated region
      $region49: #{tpu_custom_call.1} parent=5 // pred_check
        %p1766 = pneg %p1765
      $region50: #{tpu_custom_call.1} parent=5 // pred_check_branch
        %1768 = sbr.rel (%p1766) target = $region52
      $region51: #{tpu_custom_call.1} parent=5 // pred_region
        %s1769 = ssub.s32 %s14, 2
        // Predicated region
        $region53: #{tpu_custom_call.1} parent=51 // pred_check
          %p1770 = pneg %p127
        $region54: #{tpu_custom_call.1} parent=51 // pred_check_branch
          %1772 = sbr.rel (%p1770) target = $region56
        $region55: #{tpu_custom_call.1} parent=51 // pred_region
          %s1773 = sand.u32 %s112, 1
          %s1774 = scalar_lea.sflag [#allocation5], %s1773
          %s1775 = sand.u32 %s112, 1
          %s1776 = smul.addr %s1775, 32
          %s1777 = scalar_lea.vmem [#allocation9], %s1776
          %1779 = dma.done %s1774, 512
        $region56: #{tpu_custom_call.1} parent=51 // pred_fallthru
          _
      $region52: #{tpu_custom_call.1} parent=5 // pred_fallthru
        _
    $region6: #{tpu_custom_call.1} parent=1 // loop_footer
      %s18 = sadd.s32 1, %s14
    $region7: #{tpu_custom_call.1} parent=1 // loop_footer_branch
      %13 = sbr.rel target = $region3
    $region8: #{tpu_custom_call.1} parent=1 // loop_exit
      _
    %1780 = vsyncpa [#allocation5], 1
    %s1781 = scalar_lea.sflag [#allocation5], 1
    %1782 = vsyncpa %s1781, 1
    %1783 = vsyncpa [#allocation6], 1
    %s1784 = scalar_lea.sflag [#allocation6], 1
    %1785 = vsyncpa %s1784, 1
    %1786 = vsyncpa [#allocation8], 1

</llo_original>
